<compile_context>
chip_gen: v6e
topology: v6e:2x2x1
jax: 0.10.0
libtpu: 0.0.40
codegen_flags: <defaults>
</compile_context>

<pallas_src>
import functools

import numpy as np
import jax
import jax.numpy as jnp
from jax.experimental import pallas as pl
from jax.experimental.pallas import tpu as pltpu  # noqa: F401  (TPU backend assumed)


# ----------------------------------------------------------------------------
# The fused kernel: conv1 -> conv2 -> flatten -> fc1 -> fc2 -> [policy|value].
# Every input is a full-array VMEM block (no grid); everything is matmuls.
# ----------------------------------------------------------------------------
def _fused_forward_kernel(cols1_ref, w1_ref, b1_ref,
                          s2_ref, w2_ref, b2_ref,
                          s3_ref, wfc1_ref, bfc1_ref,
                          wfc2_ref, bfc2_ref,
                          whead_ref, bhead_ref,
                          out_ref):
    f32 = jnp.float32

    # conv1 (im2col'd in the wrapper): rows = (b, ho1, wo1), cols = conv1 channels.
    h1 = jnp.maximum(
        jnp.dot(cols1_ref[...], w1_ref[...], preferred_element_type=f32) + b1_ref[...],
        0.0)

    # conv2: for each of the k2*k2 kernel offsets, a 0/1 selection matrix picks the
    # needed conv1-output rows, then multiplies by that offset's (F1, F2) weight
    # slice.  Pure MXU work; padding rows of h1 are never selected.
    acc = None
    for k in range(s2_ref.shape[0]):
        rows = jnp.dot(s2_ref[k], h1, preferred_element_type=f32)
        term = jnp.dot(rows, w2_ref[k], preferred_element_type=f32)
        acc = term if acc is None else acc + term
    y2 = jnp.maximum(acc + b2_ref[...], 0.0)   # rows = (b, ho2, wo2), cols = conv2 ch.

    # NCHW flatten (x.view(B, -1)) + fc1, folded: per spatial position s, select the
    # B rows (b*S + s) of y2 and multiply by the matching (F2, hidden) block of the
    # (permuted) fc1 weight.  No physical reorder of y2 is ever materialized.
    acc = None
    for s in range(s3_ref.shape[0]):
        rows = jnp.dot(s3_ref[s], y2, preferred_element_type=f32)
        term = jnp.dot(rows, wfc1_ref[s], preferred_element_type=f32)
        acc = term if acc is None else acc + term
    h3 = jnp.maximum(acc + bfc1_ref[...], 0.0)

    # fc2
    h4 = jnp.maximum(
        jnp.dot(h3, wfc2_ref[...], preferred_element_type=f32) + bfc2_ref[...], 0.0)

    # merged policy+value head; N zero-padded to 128 -> one lane-dense (8,128) store.
    out_ref[...] = (jnp.dot(h4, whead_ref[...], preferred_element_type=f32)
                    + bhead_ref[...]).astype(out_ref.dtype)


# ----------------------------------------------------------------------------
# One-time parameter preparation (all layout work hoisted out of the hot path).
# ----------------------------------------------------------------------------
def _round_up(n, m):
    return ((n + m - 1) // m) * m


def prepare_fused_params(params, resolution, batch):
    """Builds matmul-layout weights, padded heads and the constant selection
    matrices for a fixed (batch, resolution)."""
    F1, C, k1, _ = params["conv1_w"].shape      # conv1: kernel 6, stride 3
    F2, _, k2, _ = params["conv2_w"].shape      # conv2: kernel 3, stride 2
    s1, s2 = 3, 2
    H, W = resolution
    Ho1, Wo1 = (H - k1) // s1 + 1, (W - k1) // s1 + 1
    Ho2, Wo2 = (Ho1 - k2) // s2 + 1, (Wo1 - k2) // s2 + 1
    S = Ho2 * Wo2
    hidden = params["fc1_w"].shape[1]
    h2 = params["fc2_w"].shape[1]
    A = params["pol_w"].shape[1]

    # The module's dim0/dim1 formula (which uses kernel 3 for dim1 even though
    # conv1 is 6x6) must match the true conv output for the chosen resolution.
    assert params["fc1_w"].shape[0] == F2 * S, (
        "fc1 in_features (module dim0/dim1 formula) does not match the true "
        "conv2 output size for this resolution")

    B = batch
    M1, M2 = B * Ho1 * Wo1, B * Ho2 * Wo2
    M1p, M2p, Bp = _round_up(M1, 8), _round_up(M2, 8), _round_up(B, 8)
    OUTp = _round_up(A + 1, 128)                # merged policy+value head, lane-dense

    f = {}
    # conv1 as matmul: (C*k1*k1, F1); row order (c, kh, kw) = torch reshape order.
    f["w1"] = params["conv1_w"].reshape(F1, C * k1 * k1).T.astype(jnp.float32)
    f["b1"] = params["conv1_b"].reshape(1, F1).astype(jnp.float32)

    # conv2 weight, one (F1, F2) block per kernel offset k = kh*k2 + kw.
    f["w2"] = (jnp.transpose(params["conv2_w"], (2, 3, 1, 0))
               .reshape(k2 * k2, F1, F2).astype(jnp.float32))
    f["b2"] = params["conv2_b"].reshape(1, F2).astype(jnp.float32)

    # Selection matrices gathering conv2 patch rows out of conv1-output rows.
    s2m = np.zeros((k2 * k2, M2p, M1p), np.float32)
    for b in range(B):
        for ho in range(Ho2):
            for wo in range(Wo2):
                m2 = b * S + ho * Wo2 + wo
                for kh in range(k2):
                    for kw in range(k2):
                        m1 = b * Ho1 * Wo1 + (s2 * ho + kh) * Wo1 + (s2 * wo + kw)
                        s2m[kh * k2 + kw, m2, m1] = 1.0
    f["s2"] = jnp.asarray(s2m)

    # Selection matrices implementing the NCHW flatten: row b of block s picks
    # y2 row (b*S + s).
    s3m = np.zeros((S, Bp, M2p), np.float32)
    for b in range(B):
        for s in range(S):
            s3m[s, b, b * S + s] = 1.0
    f["s3"] = jnp.asarray(s3m)

    # fc1 weight permuted to per-spatial-position (F2, hidden) blocks:
    # wfc1[s][c, j] = fc1_w[c*S + s, j]   (fc1_w stored (in, out)).
    f["wfc1"] = (jnp.transpose(params["fc1_w"].reshape(F2, S, hidden), (1, 0, 2))
                 .astype(jnp.float32))
    f["bfc1"] = params["fc1_b"].reshape(1, hidden).astype(jnp.float32)

    f["wfc2"] = params["fc2_w"].astype(jnp.float32)            # (hidden, hidden//2)
    f["bfc2"] = params["fc2_b"].reshape(1, h2).astype(jnp.float32)

    # Merged policy+value head, zero-padded to 128 output lanes.
    whead = jnp.zeros((h2, OUTp), jnp.float32)
    whead = whead.at[:, :A].set(params["pol_w"].astype(jnp.float32))
    whead = whead.at[:, A].set(params["val_w"][:, 0].astype(jnp.float32))
    f["whead"] = whead
    bhead = jnp.zeros((1, OUTp), jnp.float32)
    bhead = bhead.at[0, :A].set(params["pol_b"].astype(jnp.float32))
    bhead = bhead.at[0, A].set(params["val_b"][0].astype(jnp.float32))
    f["bhead"] = bhead
    return f


# ----------------------------------------------------------------------------
# Forward pass (jit with output_len static).
# ----------------------------------------------------------------------------
def actor_critic_forward(fused, x, output_len):
    x = x.astype(jnp.float32)
    B, C, H, W = x.shape
    k1, s1 = 6, 3
    Ho1, Wo1 = (H - k1) // s1 + 1, (W - k1) // s1 + 1

    # im2col for conv1 (single patches op; feature order (c, kh, kw)).
    patches = jax.lax.conv_general_dilated_patches(
        x, filter_shape=(k1, k1), window_strides=(s1, s1), padding="VALID",
        precision=jax.lax.Precision.HIGHEST)          # identity kernel, keep exact
    cols1 = jnp.transpose(patches, (0, 2, 3, 1)).reshape(B * Ho1 * Wo1, C * k1 * k1)
    M1p = fused["s2"].shape[2]                          # sublane-aligned row count
    cols1 = jnp.pad(cols1, ((0, M1p - cols1.shape[0]), (0, 0)))

    Bp = fused["s3"].shape[1]
    OUTp = fused["whead"].shape[1]
    out = pl.pallas_call(
        _fused_forward_kernel,
        out_shape=jax.ShapeDtypeStruct((Bp, OUTp), jnp.float32),
    )(cols1, fused["w1"], fused["b1"],
      fused["s2"], fused["w2"], fused["b2"],
      fused["s3"], fused["wfc1"], fused["bfc1"],
      fused["wfc2"], fused["bfc2"],
      fused["whead"], fused["bhead"])

    logits = out[:B, :output_len]                 # Categorical(logits=...) as logits
    value = out[:B, output_len:output_len + 1]    # (B, 1)
    return logits, value


# ----------------------------------------------------------------------------
# Raw (PyTorch-layout) parameter init.
# Linear weights are stored as (in, out) (== torch weight.T) so forward is x @ W.
# ----------------------------------------------------------------------------
def init_params(key, output_len, hidden_units, filter_count, resolution, n_channels):
    dim0 = ((resolution[0] - 6) // 3 + 1 - 3) // 2 + 1
    dim1 = ((resolution[1] - 3) // 3 + 1 - 3) // 2 + 1
    fc1_in = dim1 * dim0 * 2 * filter_count

    def uniform(k, shape, fan_in):
        bound = 1.0 / jnp.sqrt(float(fan_in))
        return jax.random.uniform(k, shape, jnp.float32, -bound, bound)

    ks = jax.random.split(key, 12)
    p = {}
    p["conv1_w"] = uniform(ks[0], (filter_count, n_channels, 6, 6), n_channels * 36)
    p["conv1_b"] = uniform(ks[1], (filter_count,), n_channels * 36)
    p["conv2_w"] = uniform(ks[2], (2 * filter_count, filter_count, 3, 3), filter_count * 9)
    p["conv2_b"] = uniform(ks[3], (2 * filter_count,), filter_count * 9)
    p["fc1_w"] = uniform(ks[4], (fc1_in, hidden_units), fc1_in)
    p["fc1_b"] = uniform(ks[5], (hidden_units,), fc1_in)
    p["fc2_w"] = uniform(ks[6], (hidden_units, hidden_units // 2), hidden_units)
    p["fc2_b"] = uniform(ks[7], (hidden_units // 2,), hidden_units)
    p["pol_w"] = uniform(ks[8], (hidden_units // 2, output_len), hidden_units // 2)
    p["pol_b"] = uniform(ks[9], (output_len,), hidden_units // 2)
    p["val_w"] = uniform(ks[10], (hidden_units // 2, 1), hidden_units // 2)
    p["val_b"] = uniform(ks[11], (1,), hidden_units // 2)
    return p


# ----------------------------------------------------------------------------
# Plain-JAX reference of the PyTorch forward (for numerical validation).
# ----------------------------------------------------------------------------
def reference_forward(params, x):
    hi = jax.lax.Precision.HIGHEST
    x = x.astype(jnp.float32)
    B = x.shape[0]
    y = jax.lax.conv(x, params["conv1_w"], (3, 3), "VALID", precision=hi)
    y = jax.nn.relu(y + params["conv1_b"][None, :, None, None])
    y = jax.lax.conv(y, params["conv2_w"], (2, 2), "VALID", precision=hi)
    y = jax.nn.relu(y + params["conv2_b"][None, :, None, None])
    h = y.reshape(B, -1)
    h = jax.nn.relu(jnp.dot(h, params["fc1_w"], precision=hi) + params["fc1_b"])
    h = jax.nn.relu(jnp.dot(h, params["fc2_w"], precision=hi) + params["fc2_b"])
    logits = jnp.dot(h, params["pol_w"], precision=hi) + params["pol_b"]
    value = jnp.dot(h, params["val_w"], precision=hi) + params["val_b"]
    return logits, value


if __name__ == "__main__":
    batch = 2
    n_channels = 4
    resolution = (24, 24)     # -> conv1: 7x7, conv2: 3x3 (matches module's dim formulas)
    filter_count = 8
    hidden_units = 32
    output_len = 6

    key = jax.random.PRNGKey(0)
    k_params, k_x = jax.random.split(key)
    params = init_params(k_params, output_len, hidden_units, filter_count,
                         resolution, n_channels)
    x = jax.random.normal(k_x, (batch, n_channels, resolution[0], resolution[1]),
                          dtype=jnp.float32)

    fused = prepare_fused_params(params, resolution, batch)

    fwd = jax.jit(actor_critic_forward, static_argnums=(2,))
    logits, value = fwd(fused, x, output_len)
    jax.block_until_ready((logits, value))

    assert logits.shape == (batch, output_len)
    assert value.shape == (batch, 1)

    # Correctness check against the plain-JAX reference of the PyTorch module.
    ref_logits, ref_value = jax.jit(reference_forward)(params, x)
    jax.block_until_ready((ref_logits, ref_value))
    assert jnp.allclose(logits, ref_logits, atol=2e-3, rtol=2e-3)
    assert jnp.allclose(value, ref_value, atol=2e-3, rtol=2e-3)

    print("KERNEL_OK")
</pallas_src>

<mosaic_0001>
module attributes {stable_mosaic.version = 11 : i64} {
  func.func @_fused_forward_kernel(%arg0: memref<104x144xf32, #tpu.memory_space<vmem>>, %arg1: memref<144x8xf32, #tpu.memory_space<vmem>>, %arg2: memref<1x8xf32, #tpu.memory_space<vmem>>, %arg3: memref<9x24x104xf32, #tpu.memory_space<vmem>>, %arg4: memref<9x8x16xf32, #tpu.memory_space<vmem>>, %arg5: memref<1x16xf32, #tpu.memory_space<vmem>>, %arg6: memref<9x8x24xf32, #tpu.memory_space<vmem>>, %arg7: memref<9x16x32xf32, #tpu.memory_space<vmem>>, %arg8: memref<1x32xf32, #tpu.memory_space<vmem>>, %arg9: memref<32x16xf32, #tpu.memory_space<vmem>>, %arg10: memref<1x16xf32, #tpu.memory_space<vmem>>, %arg11: memref<16x128xf32, #tpu.memory_space<vmem>>, %arg12: memref<1x128xf32, #tpu.memory_space<vmem>>, %arg13: memref<8x128xf32, #tpu.memory_space<vmem>>) attributes {dimension_semantics = [], scalar_prefetch = 0 : i64, scratch_operands = 0 : i64, tpu.core_type = #tpu.core_type<tc>} {
    %c0 = arith.constant 0 : index
    %c0_0 = arith.constant 0 : index
    %0 = vector.load %arg0[%c0, %c0_0] : memref<104x144xf32, #tpu.memory_space<vmem>>, vector<104x144xf32>
    %c0_1 = arith.constant 0 : index
    %c0_2 = arith.constant 0 : index
    %1 = vector.load %arg1[%c0_1, %c0_2] : memref<144x8xf32, #tpu.memory_space<vmem>>, vector<144x8xf32>
    %cst = arith.constant dense<0.000000e+00> : vector<104x8xf32>
    %2 = tpu.matmul %0, %1, %cst {dimension_numbers = #tpu.dot_dimension_numbers<[1], [0], [0], [1], [0, 0, 1, 1], [], []>} : vector<104x144xf32>, vector<144x8xf32>, vector<104x8xf32> -> vector<104x8xf32>
    %c0_3 = arith.constant 0 : index
    %c0_4 = arith.constant 0 : index
    %3 = vector.load %arg2[%c0_3, %c0_4] : memref<1x8xf32, #tpu.memory_space<vmem>>, vector<1x8xf32>
    %4 = vector.broadcast %3 : vector<1x8xf32> to vector<104x8xf32>
    %5 = arith.addf %2, %4 : vector<104x8xf32>
    %cst_5 = arith.constant 0.000000e+00 : f32
    %6 = vector.broadcast %cst_5 : f32 to vector<104x8xf32>
    %7 = arith.maximumf %5, %6 : vector<104x8xf32>
    %c0_6 = arith.constant 0 : index
    %c0_7 = arith.constant 0 : index
    %c0_8 = arith.constant 0 : index
    %8 = vector.load %arg3[%c0_6, %c0_7, %c0_8] : memref<9x24x104xf32, #tpu.memory_space<vmem>>, vector<1x24x104xf32>
    %9 = vector.shape_cast %8 : vector<1x24x104xf32> to vector<24x104xf32>
    %cst_9 = arith.constant dense<0.000000e+00> : vector<24x8xf32>
    %10 = tpu.matmul %9, %7, %cst_9 {dimension_numbers = #tpu.dot_dimension_numbers<[1], [0], [0], [1], [0, 0, 1, 1], [], []>} : vector<24x104xf32>, vector<104x8xf32>, vector<24x8xf32> -> vector<24x8xf32>
    %c0_10 = arith.constant 0 : index
    %c0_11 = arith.constant 0 : index
    %c0_12 = arith.constant 0 : index
    %11 = vector.load %arg4[%c0_10, %c0_11, %c0_12] : memref<9x8x16xf32, #tpu.memory_space<vmem>>, vector<1x8x16xf32>
    %12 = vector.shape_cast %11 : vector<1x8x16xf32> to vector<8x16xf32>
    %cst_13 = arith.constant dense<0.000000e+00> : vector<24x16xf32>
    %13 = tpu.matmul %10, %12, %cst_13 {dimension_numbers = #tpu.dot_dimension_numbers<[1], [0], [0], [1], [0, 0, 1, 1], [], []>} : vector<24x8xf32>, vector<8x16xf32>, vector<24x16xf32> -> vector<24x16xf32>
    %c1 = arith.constant 1 : index
    %c0_14 = arith.constant 0 : index
    %c0_15 = arith.constant 0 : index
    %14 = vector.load %arg3[%c1, %c0_14, %c0_15] : memref<9x24x104xf32, #tpu.memory_space<vmem>>, vector<1x24x104xf32>
    %15 = vector.shape_cast %14 : vector<1x24x104xf32> to vector<24x104xf32>
    %cst_16 = arith.constant dense<0.000000e+00> : vector<24x8xf32>
    %16 = tpu.matmul %15, %7, %cst_16 {dimension_numbers = #tpu.dot_dimension_numbers<[1], [0], [0], [1], [0, 0, 1, 1], [], []>} : vector<24x104xf32>, vector<104x8xf32>, vector<24x8xf32> -> vector<24x8xf32>
    %c1_17 = arith.constant 1 : index
    %c0_18 = arith.constant 0 : index
    %c0_19 = arith.constant 0 : index
    %17 = vector.load %arg4[%c1_17, %c0_18, %c0_19] : memref<9x8x16xf32, #tpu.memory_space<vmem>>, vector<1x8x16xf32>
    %18 = vector.shape_cast %17 : vector<1x8x16xf32> to vector<8x16xf32>
    %cst_20 = arith.constant dense<0.000000e+00> : vector<24x16xf32>
    %19 = tpu.matmul %16, %18, %cst_20 {dimension_numbers = #tpu.dot_dimension_numbers<[1], [0], [0], [1], [0, 0, 1, 1], [], []>} : vector<24x8xf32>, vector<8x16xf32>, vector<24x16xf32> -> vector<24x16xf32>
    %20 = arith.addf %13, %19 : vector<24x16xf32>
    %c2 = arith.constant 2 : index
    %c0_21 = arith.constant 0 : index
    %c0_22 = arith.constant 0 : index
    %21 = vector.load %arg3[%c2, %c0_21, %c0_22] : memref<9x24x104xf32, #tpu.memory_space<vmem>>, vector<1x24x104xf32>
    %22 = vector.shape_cast %21 : vector<1x24x104xf32> to vector<24x104xf32>
    %cst_23 = arith.constant dense<0.000000e+00> : vector<24x8xf32>
    %23 = tpu.matmul %22, %7, %cst_23 {dimension_numbers = #tpu.dot_dimension_numbers<[1], [0], [0], [1], [0, 0, 1, 1], [], []>} : vector<24x104xf32>, vector<104x8xf32>, vector<24x8xf32> -> vector<24x8xf32>
    %c2_24 = arith.constant 2 : index
    %c0_25 = arith.constant 0 : index
    %c0_26 = arith.constant 0 : index
    %24 = vector.load %arg4[%c2_24, %c0_25, %c0_26] : memref<9x8x16xf32, #tpu.memory_space<vmem>>, vector<1x8x16xf32>
    %25 = vector.shape_cast %24 : vector<1x8x16xf32> to vector<8x16xf32>
    %cst_27 = arith.constant dense<0.000000e+00> : vector<24x16xf32>
    %26 = tpu.matmul %23, %25, %cst_27 {dimension_numbers = #tpu.dot_dimension_numbers<[1], [0], [0], [1], [0, 0, 1, 1], [], []>} : vector<24x8xf32>, vector<8x16xf32>, vector<24x16xf32> -> vector<24x16xf32>
    %27 = arith.addf %20, %26 : vector<24x16xf32>
    %c3 = arith.constant 3 : index
    %c0_28 = arith.constant 0 : index
    %c0_29 = arith.constant 0 : index
    %28 = vector.load %arg3[%c3, %c0_28, %c0_29] : memref<9x24x104xf32, #tpu.memory_space<vmem>>, vector<1x24x104xf32>
    %29 = vector.shape_cast %28 : vector<1x24x104xf32> to vector<24x104xf32>
    %cst_30 = arith.constant dense<0.000000e+00> : vector<24x8xf32>
    %30 = tpu.matmul %29, %7, %cst_30 {dimension_numbers = #tpu.dot_dimension_numbers<[1], [0], [0], [1], [0, 0, 1, 1], [], []>} : vector<24x104xf32>, vector<104x8xf32>, vector<24x8xf32> -> vector<24x8xf32>
    %c3_31 = arith.constant 3 : index
    %c0_32 = arith.constant 0 : index
    %c0_33 = arith.constant 0 : index
    %31 = vector.load %arg4[%c3_31, %c0_32, %c0_33] : memref<9x8x16xf32, #tpu.memory_space<vmem>>, vector<1x8x16xf32>
    %32 = vector.shape_cast %31 : vector<1x8x16xf32> to vector<8x16xf32>
    %cst_34 = arith.constant dense<0.000000e+00> : vector<24x16xf32>
    %33 = tpu.matmul %30, %32, %cst_34 {dimension_numbers = #tpu.dot_dimension_numbers<[1], [0], [0], [1], [0, 0, 1, 1], [], []>} : vector<24x8xf32>, vector<8x16xf32>, vector<24x16xf32> -> vector<24x16xf32>
    %34 = arith.addf %27, %33 : vector<24x16xf32>
    %c4 = arith.constant 4 : index
    %c0_35 = arith.constant 0 : index
    %c0_36 = arith.constant 0 : index
    %35 = vector.load %arg3[%c4, %c0_35, %c0_36] : memref<9x24x104xf32, #tpu.memory_space<vmem>>, vector<1x24x104xf32>
    %36 = vector.shape_cast %35 : vector<1x24x104xf32> to vector<24x104xf32>
    %cst_37 = arith.constant dense<0.000000e+00> : vector<24x8xf32>
    %37 = tpu.matmul %36, %7, %cst_37 {dimension_numbers = #tpu.dot_dimension_numbers<[1], [0], [0], [1], [0, 0, 1, 1], [], []>} : vector<24x104xf32>, vector<104x8xf32>, vector<24x8xf32> -> vector<24x8xf32>
    %c4_38 = arith.constant 4 : index
    %c0_39 = arith.constant 0 : index
    %c0_40 = arith.constant 0 : index
    %38 = vector.load %arg4[%c4_38, %c0_39, %c0_40] : memref<9x8x16xf32, #tpu.memory_space<vmem>>, vector<1x8x16xf32>
    %39 = vector.shape_cast %38 : vector<1x8x16xf32> to vector<8x16xf32>
    %cst_41 = arith.constant dense<0.000000e+00> : vector<24x16xf32>
    %40 = tpu.matmul %37, %39, %cst_41 {dimension_numbers = #tpu.dot_dimension_numbers<[1], [0], [0], [1], [0, 0, 1, 1], [], []>} : vector<24x8xf32>, vector<8x16xf32>, vector<24x16xf32> -> vector<24x16xf32>
    %41 = arith.addf %34, %40 : vector<24x16xf32>
    %c5 = arith.constant 5 : index
    %c0_42 = arith.constant 0 : index
    %c0_43 = arith.constant 0 : index
    %42 = vector.load %arg3[%c5, %c0_42, %c0_43] : memref<9x24x104xf32, #tpu.memory_space<vmem>>, vector<1x24x104xf32>
    %43 = vector.shape_cast %42 : vector<1x24x104xf32> to vector<24x104xf32>
    %cst_44 = arith.constant dense<0.000000e+00> : vector<24x8xf32>
    %44 = tpu.matmul %43, %7, %cst_44 {dimension_numbers = #tpu.dot_dimension_numbers<[1], [0], [0], [1], [0, 0, 1, 1], [], []>} : vector<24x104xf32>, vector<104x8xf32>, vector<24x8xf32> -> vector<24x8xf32>
    %c5_45 = arith.constant 5 : index
    %c0_46 = arith.constant 0 : index
    %c0_47 = arith.constant 0 : index
    %45 = vector.load %arg4[%c5_45, %c0_46, %c0_47] : memref<9x8x16xf32, #tpu.memory_space<vmem>>, vector<1x8x16xf32>
    %46 = vector.shape_cast %45 : vector<1x8x16xf32> to vector<8x16xf32>
    %cst_48 = arith.constant dense<0.000000e+00> : vector<24x16xf32>
    %47 = tpu.matmul %44, %46, %cst_48 {dimension_numbers = #tpu.dot_dimension_numbers<[1], [0], [0], [1], [0, 0, 1, 1], [], []>} : vector<24x8xf32>, vector<8x16xf32>, vector<24x16xf32> -> vector<24x16xf32>
    %48 = arith.addf %41, %47 : vector<24x16xf32>
    %c6 = arith.constant 6 : index
    %c0_49 = arith.constant 0 : index
    %c0_50 = arith.constant 0 : index
    %49 = vector.load %arg3[%c6, %c0_49, %c0_50] : memref<9x24x104xf32, #tpu.memory_space<vmem>>, vector<1x24x104xf32>
    %50 = vector.shape_cast %49 : vector<1x24x104xf32> to vector<24x104xf32>
    %cst_51 = arith.constant dense<0.000000e+00> : vector<24x8xf32>
    %51 = tpu.matmul %50, %7, %cst_51 {dimension_numbers = #tpu.dot_dimension_numbers<[1], [0], [0], [1], [0, 0, 1, 1], [], []>} : vector<24x104xf32>, vector<104x8xf32>, vector<24x8xf32> -> vector<24x8xf32>
    %c6_52 = arith.constant 6 : index
    %c0_53 = arith.constant 0 : index
    %c0_54 = arith.constant 0 : index
    %52 = vector.load %arg4[%c6_52, %c0_53, %c0_54] : memref<9x8x16xf32, #tpu.memory_space<vmem>>, vector<1x8x16xf32>
    %53 = vector.shape_cast %52 : vector<1x8x16xf32> to vector<8x16xf32>
    %cst_55 = arith.constant dense<0.000000e+00> : vector<24x16xf32>
    %54 = tpu.matmul %51, %53, %cst_55 {dimension_numbers = #tpu.dot_dimension_numbers<[1], [0], [0], [1], [0, 0, 1, 1], [], []>} : vector<24x8xf32>, vector<8x16xf32>, vector<24x16xf32> -> vector<24x16xf32>
    %55 = arith.addf %48, %54 : vector<24x16xf32>
    %c7 = arith.constant 7 : index
    %c0_56 = arith.constant 0 : index
    %c0_57 = arith.constant 0 : index
    %56 = vector.load %arg3[%c7, %c0_56, %c0_57] : memref<9x24x104xf32, #tpu.memory_space<vmem>>, vector<1x24x104xf32>
    %57 = vector.shape_cast %56 : vector<1x24x104xf32> to vector<24x104xf32>
    %cst_58 = arith.constant dense<0.000000e+00> : vector<24x8xf32>
    %58 = tpu.matmul %57, %7, %cst_58 {dimension_numbers = #tpu.dot_dimension_numbers<[1], [0], [0], [1], [0, 0, 1, 1], [], []>} : vector<24x104xf32>, vector<104x8xf32>, vector<24x8xf32> -> vector<24x8xf32>
    %c7_59 = arith.constant 7 : index
    %c0_60 = arith.constant 0 : index
    %c0_61 = arith.constant 0 : index
    %59 = vector.load %arg4[%c7_59, %c0_60, %c0_61] : memref<9x8x16xf32, #tpu.memory_space<vmem>>, vector<1x8x16xf32>
    %60 = vector.shape_cast %59 : vector<1x8x16xf32> to vector<8x16xf32>
    %cst_62 = arith.constant dense<0.000000e+00> : vector<24x16xf32>
    %61 = tpu.matmul %58, %60, %cst_62 {dimension_numbers = #tpu.dot_dimension_numbers<[1], [0], [0], [1], [0, 0, 1, 1], [], []>} : vector<24x8xf32>, vector<8x16xf32>, vector<24x16xf32> -> vector<24x16xf32>
    %62 = arith.addf %55, %61 : vector<24x16xf32>
    %c8 = arith.constant 8 : index
    %c0_63 = arith.constant 0 : index
    %c0_64 = arith.constant 0 : index
    %63 = vector.load %arg3[%c8, %c0_63, %c0_64] : memref<9x24x104xf32, #tpu.memory_space<vmem>>, vector<1x24x104xf32>
    %64 = vector.shape_cast %63 : vector<1x24x104xf32> to vector<24x104xf32>
    %cst_65 = arith.constant dense<0.000000e+00> : vector<24x8xf32>
    %65 = tpu.matmul %64, %7, %cst_65 {dimension_numbers = #tpu.dot_dimension_numbers<[1], [0], [0], [1], [0, 0, 1, 1], [], []>} : vector<24x104xf32>, vector<104x8xf32>, vector<24x8xf32> -> vector<24x8xf32>
    %c8_66 = arith.constant 8 : index
    %c0_67 = arith.constant 0 : index
    %c0_68 = arith.constant 0 : index
    %66 = vector.load %arg4[%c8_66, %c0_67, %c0_68] : memref<9x8x16xf32, #tpu.memory_space<vmem>>, vector<1x8x16xf32>
    %67 = vector.shape_cast %66 : vector<1x8x16xf32> to vector<8x16xf32>
    %cst_69 = arith.constant dense<0.000000e+00> : vector<24x16xf32>
    %68 = tpu.matmul %65, %67, %cst_69 {dimension_numbers = #tpu.dot_dimension_numbers<[1], [0], [0], [1], [0, 0, 1, 1], [], []>} : vector<24x8xf32>, vector<8x16xf32>, vector<24x16xf32> -> vector<24x16xf32>
    %69 = arith.addf %62, %68 : vector<24x16xf32>
    %c0_70 = arith.constant 0 : index
    %c0_71 = arith.constant 0 : index
    %70 = vector.load %arg5[%c0_70, %c0_71] : memref<1x16xf32, #tpu.memory_space<vmem>>, vector<1x16xf32>
    %71 = vector.broadcast %70 : vector<1x16xf32> to vector<24x16xf32>
    %72 = arith.addf %69, %71 : vector<24x16xf32>
    %cst_72 = arith.constant 0.000000e+00 : f32
    %73 = vector.broadcast %cst_72 : f32 to vector<24x16xf32>
    %74 = arith.maximumf %72, %73 : vector<24x16xf32>
    %c0_73 = arith.constant 0 : index
    %c0_74 = arith.constant 0 : index
    %c0_75 = arith.constant 0 : index
    %75 = vector.load %arg6[%c0_73, %c0_74, %c0_75] : memref<9x8x24xf32, #tpu.memory_space<vmem>>, vector<1x8x24xf32>
    %76 = vector.shape_cast %75 : vector<1x8x24xf32> to vector<8x24xf32>
    %cst_76 = arith.constant dense<0.000000e+00> : vector<8x16xf32>
    %77 = tpu.matmul %76, %74, %cst_76 {dimension_numbers = #tpu.dot_dimension_numbers<[1], [0], [0], [1], [0, 0, 1, 1], [], []>} : vector<8x24xf32>, vector<24x16xf32>, vector<8x16xf32> -> vector<8x16xf32>
    %c0_77 = arith.constant 0 : index
    %c0_78 = arith.constant 0 : index
    %c0_79 = arith.constant 0 : index
    %78 = vector.load %arg7[%c0_77, %c0_78, %c0_79] : memref<9x16x32xf32, #tpu.memory_space<vmem>>, vector<1x16x32xf32>
    %79 = vector.shape_cast %78 : vector<1x16x32xf32> to vector<16x32xf32>
    %cst_80 = arith.constant dense<0.000000e+00> : vector<8x32xf32>
    %80 = tpu.matmul %77, %79, %cst_80 {dimension_numbers = #tpu.dot_dimension_numbers<[1], [0], [0], [1], [0, 0, 1, 1], [], []>} : vector<8x16xf32>, vector<16x32xf32>, vector<8x32xf32> -> vector<8x32xf32>
    %c1_81 = arith.constant 1 : index
    %c0_82 = arith.constant 0 : index
    %c0_83 = arith.constant 0 : index
    %81 = vector.load %arg6[%c1_81, %c0_82, %c0_83] : memref<9x8x24xf32, #tpu.memory_space<vmem>>, vector<1x8x24xf32>
    %82 = vector.shape_cast %81 : vector<1x8x24xf32> to vector<8x24xf32>
    %cst_84 = arith.constant dense<0.000000e+00> : vector<8x16xf32>
    %83 = tpu.matmul %82, %74, %cst_84 {dimension_numbers = #tpu.dot_dimension_numbers<[1], [0], [0], [1], [0, 0, 1, 1], [], []>} : vector<8x24xf32>, vector<24x16xf32>, vector<8x16xf32> -> vector<8x16xf32>
    %c1_85 = arith.constant 1 : index
    %c0_86 = arith.constant 0 : index
    %c0_87 = arith.constant 0 : index
    %84 = vector.load %arg7[%c1_85, %c0_86, %c0_87] : memref<9x16x32xf32, #tpu.memory_space<vmem>>, vector<1x16x32xf32>
    %85 = vector.shape_cast %84 : vector<1x16x32xf32> to vector<16x32xf32>
    %cst_88 = arith.constant dense<0.000000e+00> : vector<8x32xf32>
    %86 = tpu.matmul %83, %85, %cst_88 {dimension_numbers = #tpu.dot_dimension_numbers<[1], [0], [0], [1], [0, 0, 1, 1], [], []>} : vector<8x16xf32>, vector<16x32xf32>, vector<8x32xf32> -> vector<8x32xf32>
    %87 = arith.addf %80, %86 : vector<8x32xf32>
    %c2_89 = arith.constant 2 : index
    %c0_90 = arith.constant 0 : index
    %c0_91 = arith.constant 0 : index
    %88 = vector.load %arg6[%c2_89, %c0_90, %c0_91] : memref<9x8x24xf32, #tpu.memory_space<vmem>>, vector<1x8x24xf32>
    %89 = vector.shape_cast %88 : vector<1x8x24xf32> to vector<8x24xf32>
    %cst_92 = arith.constant dense<0.000000e+00> : vector<8x16xf32>
    %90 = tpu.matmul %89, %74, %cst_92 {dimension_numbers = #tpu.dot_dimension_numbers<[1], [0], [0], [1], [0, 0, 1, 1], [], []>} : vector<8x24xf32>, vector<24x16xf32>, vector<8x16xf32> -> vector<8x16xf32>
    %c2_93 = arith.constant 2 : index
    %c0_94 = arith.constant 0 : index
    %c0_95 = arith.constant 0 : index
    %91 = vector.load %arg7[%c2_93, %c0_94, %c0_95] : memref<9x16x32xf32, #tpu.memory_space<vmem>>, vector<1x16x32xf32>
    %92 = vector.shape_cast %91 : vector<1x16x32xf32> to vector<16x32xf32>
    %cst_96 = arith.constant dense<0.000000e+00> : vector<8x32xf32>
    %93 = tpu.matmul %90, %92, %cst_96 {dimension_numbers = #tpu.dot_dimension_numbers<[1], [0], [0], [1], [0, 0, 1, 1], [], []>} : vector<8x16xf32>, vector<16x32xf32>, vector<8x32xf32> -> vector<8x32xf32>
    %94 = arith.addf %87, %93 : vector<8x32xf32>
    %c3_97 = arith.constant 3 : index
    %c0_98 = arith.constant 0 : index
    %c0_99 = arith.constant 0 : index
    %95 = vector.load %arg6[%c3_97, %c0_98, %c0_99] : memref<9x8x24xf32, #tpu.memory_space<vmem>>, vector<1x8x24xf32>
    %96 = vector.shape_cast %95 : vector<1x8x24xf32> to vector<8x24xf32>
    %cst_100 = arith.constant dense<0.000000e+00> : vector<8x16xf32>
    %97 = tpu.matmul %96, %74, %cst_100 {dimension_numbers = #tpu.dot_dimension_numbers<[1], [0], [0], [1], [0, 0, 1, 1], [], []>} : vector<8x24xf32>, vector<24x16xf32>, vector<8x16xf32> -> vector<8x16xf32>
    %c3_101 = arith.constant 3 : index
    %c0_102 = arith.constant 0 : index
    %c0_103 = arith.constant 0 : index
    %98 = vector.load %arg7[%c3_101, %c0_102, %c0_103] : memref<9x16x32xf32, #tpu.memory_space<vmem>>, vector<1x16x32xf32>
    %99 = vector.shape_cast %98 : vector<1x16x32xf32> to vector<16x32xf32>
    %cst_104 = arith.constant dense<0.000000e+00> : vector<8x32xf32>
    %100 = tpu.matmul %97, %99, %cst_104 {dimension_numbers = #tpu.dot_dimension_numbers<[1], [0], [0], [1], [0, 0, 1, 1], [], []>} : vector<8x16xf32>, vector<16x32xf32>, vector<8x32xf32> -> vector<8x32xf32>
    %101 = arith.addf %94, %100 : vector<8x32xf32>
    %c4_105 = arith.constant 4 : index
    %c0_106 = arith.constant 0 : index
    %c0_107 = arith.constant 0 : index
    %102 = vector.load %arg6[%c4_105, %c0_106, %c0_107] : memref<9x8x24xf32, #tpu.memory_space<vmem>>, vector<1x8x24xf32>
    %103 = vector.shape_cast %102 : vector<1x8x24xf32> to vector<8x24xf32>
    %cst_108 = arith.constant dense<0.000000e+00> : vector<8x16xf32>
    %104 = tpu.matmul %103, %74, %cst_108 {dimension_numbers = #tpu.dot_dimension_numbers<[1], [0], [0], [1], [0, 0, 1, 1], [], []>} : vector<8x24xf32>, vector<24x16xf32>, vector<8x16xf32> -> vector<8x16xf32>
    %c4_109 = arith.constant 4 : index
    %c0_110 = arith.constant 0 : index
    %c0_111 = arith.constant 0 : index
    %105 = vector.load %arg7[%c4_109, %c0_110, %c0_111] : memref<9x16x32xf32, #tpu.memory_space<vmem>>, vector<1x16x32xf32>
    %106 = vector.shape_cast %105 : vector<1x16x32xf32> to vector<16x32xf32>
    %cst_112 = arith.constant dense<0.000000e+00> : vector<8x32xf32>
    %107 = tpu.matmul %104, %106, %cst_112 {dimension_numbers = #tpu.dot_dimension_numbers<[1], [0], [0], [1], [0, 0, 1, 1], [], []>} : vector<8x16xf32>, vector<16x32xf32>, vector<8x32xf32> -> vector<8x32xf32>
    %108 = arith.addf %101, %107 : vector<8x32xf32>
    %c5_113 = arith.constant 5 : index
    %c0_114 = arith.constant 0 : index
    %c0_115 = arith.constant 0 : index
    %109 = vector.load %arg6[%c5_113, %c0_114, %c0_115] : memref<9x8x24xf32, #tpu.memory_space<vmem>>, vector<1x8x24xf32>
    %110 = vector.shape_cast %109 : vector<1x8x24xf32> to vector<8x24xf32>
    %cst_116 = arith.constant dense<0.000000e+00> : vector<8x16xf32>
    %111 = tpu.matmul %110, %74, %cst_116 {dimension_numbers = #tpu.dot_dimension_numbers<[1], [0], [0], [1], [0, 0, 1, 1], [], []>} : vector<8x24xf32>, vector<24x16xf32>, vector<8x16xf32> -> vector<8x16xf32>
    %c5_117 = arith.constant 5 : index
    %c0_118 = arith.constant 0 : index
    %c0_119 = arith.constant 0 : index
    %112 = vector.load %arg7[%c5_117, %c0_118, %c0_119] : memref<9x16x32xf32, #tpu.memory_space<vmem>>, vector<1x16x32xf32>
    %113 = vector.shape_cast %112 : vector<1x16x32xf32> to vector<16x32xf32>
    %cst_120 = arith.constant dense<0.000000e+00> : vector<8x32xf32>
    %114 = tpu.matmul %111, %113, %cst_120 {dimension_numbers = #tpu.dot_dimension_numbers<[1], [0], [0], [1], [0, 0, 1, 1], [], []>} : vector<8x16xf32>, vector<16x32xf32>, vector<8x32xf32> -> vector<8x32xf32>
    %115 = arith.addf %108, %114 : vector<8x32xf32>
    %c6_121 = arith.constant 6 : index
    %c0_122 = arith.constant 0 : index
    %c0_123 = arith.constant 0 : index
    %116 = vector.load %arg6[%c6_121, %c0_122, %c0_123] : memref<9x8x24xf32, #tpu.memory_space<vmem>>, vector<1x8x24xf32>
    %117 = vector.shape_cast %116 : vector<1x8x24xf32> to vector<8x24xf32>
    %cst_124 = arith.constant dense<0.000000e+00> : vector<8x16xf32>
    %118 = tpu.matmul %117, %74, %cst_124 {dimension_numbers = #tpu.dot_dimension_numbers<[1], [0], [0], [1], [0, 0, 1, 1], [], []>} : vector<8x24xf32>, vector<24x16xf32>, vector<8x16xf32> -> vector<8x16xf32>
    %c6_125 = arith.constant 6 : index
    %c0_126 = arith.constant 0 : index
    %c0_127 = arith.constant 0 : index
    %119 = vector.load %arg7[%c6_125, %c0_126, %c0_127] : memref<9x16x32xf32, #tpu.memory_space<vmem>>, vector<1x16x32xf32>
    %120 = vector.shape_cast %119 : vector<1x16x32xf32> to vector<16x32xf32>
    %cst_128 = arith.constant dense<0.000000e+00> : vector<8x32xf32>
    %121 = tpu.matmul %118, %120, %cst_128 {dimension_numbers = #tpu.dot_dimension_numbers<[1], [0], [0], [1], [0, 0, 1, 1], [], []>} : vector<8x16xf32>, vector<16x32xf32>, vector<8x32xf32> -> vector<8x32xf32>
    %122 = arith.addf %115, %121 : vector<8x32xf32>
    %c7_129 = arith.constant 7 : index
    %c0_130 = arith.constant 0 : index
    %c0_131 = arith.constant 0 : index
    %123 = vector.load %arg6[%c7_129, %c0_130, %c0_131] : memref<9x8x24xf32, #tpu.memory_space<vmem>>, vector<1x8x24xf32>
    %124 = vector.shape_cast %123 : vector<1x8x24xf32> to vector<8x24xf32>
    %cst_132 = arith.constant dense<0.000000e+00> : vector<8x16xf32>
    %125 = tpu.matmul %124, %74, %cst_132 {dimension_numbers = #tpu.dot_dimension_numbers<[1], [0], [0], [1], [0, 0, 1, 1], [], []>} : vector<8x24xf32>, vector<24x16xf32>, vector<8x16xf32> -> vector<8x16xf32>
    %c7_133 = arith.constant 7 : index
    %c0_134 = arith.constant 0 : index
    %c0_135 = arith.constant 0 : index
    %126 = vector.load %arg7[%c7_133, %c0_134, %c0_135] : memref<9x16x32xf32, #tpu.memory_space<vmem>>, vector<1x16x32xf32>
    %127 = vector.shape_cast %126 : vector<1x16x32xf32> to vector<16x32xf32>
    %cst_136 = arith.constant dense<0.000000e+00> : vector<8x32xf32>
    %128 = tpu.matmul %125, %127, %cst_136 {dimension_numbers = #tpu.dot_dimension_numbers<[1], [0], [0], [1], [0, 0, 1, 1], [], []>} : vector<8x16xf32>, vector<16x32xf32>, vector<8x32xf32> -> vector<8x32xf32>
    %129 = arith.addf %122, %128 : vector<8x32xf32>
    %c8_137 = arith.constant 8 : index
    %c0_138 = arith.constant 0 : index
    %c0_139 = arith.constant 0 : index
    %130 = vector.load %arg6[%c8_137, %c0_138, %c0_139] : memref<9x8x24xf32, #tpu.memory_space<vmem>>, vector<1x8x24xf32>
    %131 = vector.shape_cast %130 : vector<1x8x24xf32> to vector<8x24xf32>
    %cst_140 = arith.constant dense<0.000000e+00> : vector<8x16xf32>
    %132 = tpu.matmul %131, %74, %cst_140 {dimension_numbers = #tpu.dot_dimension_numbers<[1], [0], [0], [1], [0, 0, 1, 1], [], []>} : vector<8x24xf32>, vector<24x16xf32>, vector<8x16xf32> -> vector<8x16xf32>
    %c8_141 = arith.constant 8 : index
    %c0_142 = arith.constant 0 : index
    %c0_143 = arith.constant 0 : index
    %133 = vector.load %arg7[%c8_141, %c0_142, %c0_143] : memref<9x16x32xf32, #tpu.memory_space<vmem>>, vector<1x16x32xf32>
    %134 = vector.shape_cast %133 : vector<1x16x32xf32> to vector<16x32xf32>
    %cst_144 = arith.constant dense<0.000000e+00> : vector<8x32xf32>
    %135 = tpu.matmul %132, %134, %cst_144 {dimension_numbers = #tpu.dot_dimension_numbers<[1], [0], [0], [1], [0, 0, 1, 1], [], []>} : vector<8x16xf32>, vector<16x32xf32>, vector<8x32xf32> -> vector<8x32xf32>
    %136 = arith.addf %129, %135 : vector<8x32xf32>
    %c0_145 = arith.constant 0 : index
    %c0_146 = arith.constant 0 : index
    %137 = vector.load %arg8[%c0_145, %c0_146] : memref<1x32xf32, #tpu.memory_space<vmem>>, vector<1x32xf32>
    %138 = vector.broadcast %137 : vector<1x32xf32> to vector<8x32xf32>
    %139 = arith.addf %136, %138 : vector<8x32xf32>
    %cst_147 = arith.constant 0.000000e+00 : f32
    %140 = vector.broadcast %cst_147 : f32 to vector<8x32xf32>
    %141 = arith.maximumf %139, %140 : vector<8x32xf32>
    %c0_148 = arith.constant 0 : index
    %c0_149 = arith.constant 0 : index
    %142 = vector.load %arg9[%c0_148, %c0_149] : memref<32x16xf32, #tpu.memory_space<vmem>>, vector<32x16xf32>
    %cst_150 = arith.constant dense<0.000000e+00> : vector<8x16xf32>
    %143 = tpu.matmul %141, %142, %cst_150 {dimension_numbers = #tpu.dot_dimension_numbers<[1], [0], [0], [1], [0, 0, 1, 1], [], []>} : vector<8x32xf32>, vector<32x16xf32>, vector<8x16xf32> -> vector<8x16xf32>
    %c0_151 = arith.constant 0 : index
    %c0_152 = arith.constant 0 : index
    %144 = vector.load %arg10[%c0_151, %c0_152] : memref<1x16xf32, #tpu.memory_space<vmem>>, vector<1x16xf32>
    %145 = vector.broadcast %144 : vector<1x16xf32> to vector<8x16xf32>
    %146 = arith.addf %143, %145 : vector<8x16xf32>
    %cst_153 = arith.constant 0.000000e+00 : f32
    %147 = vector.broadcast %cst_153 : f32 to vector<8x16xf32>
    %148 = arith.maximumf %146, %147 : vector<8x16xf32>
    %c0_154 = arith.constant 0 : index
    %c0_155 = arith.constant 0 : index
    %149 = vector.load %arg11[%c0_154, %c0_155] : memref<16x128xf32, #tpu.memory_space<vmem>>, vector<16x128xf32>
    %cst_156 = arith.constant dense<0.000000e+00> : vector<8x128xf32>
    %150 = tpu.matmul %148, %149, %cst_156 {dimension_numbers = #tpu.dot_dimension_numbers<[1], [0], [0], [1], [0, 0, 1, 1], [], []>} : vector<8x16xf32>, vector<16x128xf32>, vector<8x128xf32> -> vector<8x128xf32>
    %c0_157 = arith.constant 0 : index
    %c0_158 = arith.constant 0 : index
    %151 = vector.load %arg12[%c0_157, %c0_158] : memref<1x128xf32, #tpu.memory_space<vmem>>, vector<1x128xf32>
    %152 = vector.broadcast %151 : vector<1x128xf32> to vector<8x128xf32>
    %153 = arith.addf %150, %152 : vector<8x128xf32>
    %c0_159 = arith.constant 0 : index
    %c0_160 = arith.constant 0 : index
    %154 = vector.load %arg13[%c0_159, %c0_160] : memref<8x128xf32, #tpu.memory_space<vmem>>, vector<8x128xf32>
    tpu.vector_store %arg13[%c0_159, %c0_160], %153 {strides = array<i32>} : memref<8x128xf32, #tpu.memory_space<vmem>>, vector<8x128xf32>,
    return
  }
}

</mosaic_0001>

<llo_original>
// kernel: actor_critic_forward.1
$region0: #{actor_critic_forward.1}
  #allocation0 [shape = 'u32[]', space=smem, size = 0x4, offset = 0x4, fixed_abs, tag = 'smem constant byte address 0x4 - core index']
  #allocation1 [shape = 'u32[144,128]{1,0:T(1,128)}', space=vmem, size = 0x12000, scoped, tag = 'internal scratch']
  %s0 = inlined_call_operand.vmem [shape: f32[104,144], index: 0, kind: input, shape index: {}]
  %s1 = inlined_call_operand.vmem [shape: f32[144,8], index: 1, kind: input, shape index: {}]
  %s2 = inlined_call_operand.vmem [shape: f32[1,8], index: 2, kind: input, shape index: {}]
  %s3 = inlined_call_operand.vmem [shape: f32[9,24,104], index: 3, kind: input, shape index: {}]
  %s4 = inlined_call_operand.vmem [shape: f32[9,8,16], index: 4, kind: input, shape index: {}]
  %s5 = inlined_call_operand.vmem [shape: f32[1,16], index: 5, kind: input, shape index: {}]
  %s6 = inlined_call_operand.vmem [shape: f32[9,8,24], index: 6, kind: input, shape index: {}]
  %s7 = inlined_call_operand.vmem [shape: f32[9,16,32], index: 7, kind: input, shape index: {}]
  %s8 = inlined_call_operand.vmem [shape: f32[1,32], index: 8, kind: input, shape index: {}]
  %s9 = inlined_call_operand.vmem [shape: f32[32,16], index: 9, kind: input, shape index: {}]
  %s10 = inlined_call_operand.vmem [shape: f32[1,16], index: 10, kind: input, shape index: {}]
  %s11 = inlined_call_operand.vmem [shape: f32[16,128], index: 11, kind: input, shape index: {}]
  %s12 = inlined_call_operand.vmem [shape: f32[1,128], index: 12, kind: input, shape index: {}]
  %s13 = inlined_call_operand.vmem [shape: f32[8,128], index: 13, kind: output, shape index: {}]
  %s14 = sld [smem:[#allocation0]]
  $region62: #{actor_critic_forward.1} parent=0
    _
  %s16 = ssub.s32 1, %s14
  %s17 = scalar_select 0, %s16, %s14
  // Predicated region
  $region2: #{actor_critic_forward.1} parent=0 // pred_check
    _
  $region3: #{actor_critic_forward.1} parent=0 // pred_check_branch
    %19 = sbr.rel (0) target = $region5
  $region4: #{actor_critic_forward.1} parent=0 // pred_region
    _
  $region5: #{actor_critic_forward.1} parent=0 // pred_fallthru
    _
  // Predicated region
  $region6: #{actor_critic_forward.1} parent=0 // pred_check
    _
  $region7: #{actor_critic_forward.1} parent=0 // pred_check_branch
    %21 = sbr.rel (0) target = $region9
  $region8: #{actor_critic_forward.1} parent=0 // pred_region
    _
  $region9: #{actor_critic_forward.1} parent=0 // pred_fallthru
    _
  // Predicated region
  $region10: #{actor_critic_forward.1} parent=0 // pred_check
    _
  $region11: #{actor_critic_forward.1} parent=0 // pred_check_branch
    %23 = sbr.rel (0) target = $region13
  $region12: #{actor_critic_forward.1} parent=0 // pred_region
    _
  $region13: #{actor_critic_forward.1} parent=0 // pred_fallthru
    _
  // Predicated region
  $region14: #{actor_critic_forward.1} parent=0 // pred_check
    _
  $region15: #{actor_critic_forward.1} parent=0 // pred_check_branch
    %25 = sbr.rel (0) target = $region17
  $region16: #{actor_critic_forward.1} parent=0 // pred_region
    _
  $region17: #{actor_critic_forward.1} parent=0 // pred_fallthru
    _
  // Predicated region
  $region18: #{actor_critic_forward.1} parent=0 // pred_check
    _
  $region19: #{actor_critic_forward.1} parent=0 // pred_check_branch
    %27 = sbr.rel (0) target = $region21
  $region20: #{actor_critic_forward.1} parent=0 // pred_region
    _
  $region21: #{actor_critic_forward.1} parent=0 // pred_fallthru
    _
  // Predicated region
  $region22: #{actor_critic_forward.1} parent=0 // pred_check
    _
  $region23: #{actor_critic_forward.1} parent=0 // pred_check_branch
    %29 = sbr.rel (0) target = $region25
  $region24: #{actor_critic_forward.1} parent=0 // pred_region
    _
  $region25: #{actor_critic_forward.1} parent=0 // pred_fallthru
    _
  // Predicated region
  $region26: #{actor_critic_forward.1} parent=0 // pred_check
    _
  $region27: #{actor_critic_forward.1} parent=0 // pred_check_branch
    %31 = sbr.rel (0) target = $region29
  $region28: #{actor_critic_forward.1} parent=0 // pred_region
    _
  $region29: #{actor_critic_forward.1} parent=0 // pred_fallthru
    _
  // Predicated region
  $region30: #{actor_critic_forward.1} parent=0 // pred_check
    _
  $region31: #{actor_critic_forward.1} parent=0 // pred_check_branch
    %33 = sbr.rel (0) target = $region33
  $region32: #{actor_critic_forward.1} parent=0 // pred_region
    _
  $region33: #{actor_critic_forward.1} parent=0 // pred_fallthru
    _
  // Predicated region
  $region34: #{actor_critic_forward.1} parent=0 // pred_check
    _
  $region35: #{actor_critic_forward.1} parent=0 // pred_check_branch
    %35 = sbr.rel (0) target = $region37
  $region36: #{actor_critic_forward.1} parent=0 // pred_region
    _
  $region37: #{actor_critic_forward.1} parent=0 // pred_fallthru
    _
  // Predicated region
  $region38: #{actor_critic_forward.1} parent=0 // pred_check
    _
  $region39: #{actor_critic_forward.1} parent=0 // pred_check_branch
    %37 = sbr.rel (0) target = $region41
  $region40: #{actor_critic_forward.1} parent=0 // pred_region
    _
  $region41: #{actor_critic_forward.1} parent=0 // pred_fallthru
    _
  // Predicated region
  $region42: #{actor_critic_forward.1} parent=0 // pred_check
    _
  $region43: #{actor_critic_forward.1} parent=0 // pred_check_branch
    %39 = sbr.rel (0) target = $region45
  $region44: #{actor_critic_forward.1} parent=0 // pred_region
    _
  $region45: #{actor_critic_forward.1} parent=0 // pred_fallthru
    _
  // Predicated region
  $region46: #{actor_critic_forward.1} parent=0 // pred_check
    _
  $region47: #{actor_critic_forward.1} parent=0 // pred_check_branch
    %41 = sbr.rel (0) target = $region49
  $region48: #{actor_critic_forward.1} parent=0 // pred_region
    _
  $region49: #{actor_critic_forward.1} parent=0 // pred_fallthru
    _
  // Predicated region
  $region50: #{actor_critic_forward.1} parent=0 // pred_check
    _
  $region51: #{actor_critic_forward.1} parent=0 // pred_check_branch
    %43 = sbr.rel (0) target = $region53
  $region52: #{actor_critic_forward.1} parent=0 // pred_region
    _
  $region53: #{actor_critic_forward.1} parent=0 // pred_fallthru
    _
  %v44 = vld [vmem:[%s0] sm:$0xff]
  %v45 = vld [vmem:[%s0 + $0x8] sm:$0xff]
  %v46 = vld [vmem:[%s0 + $0x10] sm:$0xff]
  %v47 = vld [vmem:[%s0 + $0x18] sm:$0xff]
  %v48 = vld [vmem:[%s0 + $0x20] sm:$0xff]
  %v49 = vld [vmem:[%s0 + $0x28] sm:$0xff]
  %v50 = vld [vmem:[%s0 + $0x30] sm:$0xff]
  %v51 = vld [vmem:[%s0 + $0x38] sm:$0xff]
  %v52 = vld [vmem:[%s0 + $0x40] sm:$0xff]
  %v53 = vld [vmem:[%s0 + $0x48] sm:$0xff]
  %v54 = vld [vmem:[%s0 + $0x50] sm:$0xff]
  %v55 = vld [vmem:[%s0 + $0x58] sm:$0xff]
  %v56 = vld [vmem:[%s0 + $0x60] sm:$0xff]
  %v57 = vld [vmem:[%s0 + $0x68] sm:$0xff]
  %v58 = vld [vmem:[%s0 + $0x70] sm:$0xff]
  %v59 = vld [vmem:[%s0 + $0x78] sm:$0xff]
  %v60 = vld [vmem:[%s0 + $0x80] sm:$0xff]
  %v61 = vld [vmem:[%s0 + $0x88] sm:$0xff]
  %v62 = vld [vmem:[%s0 + $0x90] sm:$0xff]
  %v63 = vld [vmem:[%s0 + $0x98] sm:$0xff]
  %v64 = vld [vmem:[%s0 + $0xa0] sm:$0xff]
  %v65 = vld [vmem:[%s0 + $0xa8] sm:$0xff]
  %v66 = vld [vmem:[%s0 + $0xb0] sm:$0xff]
  %v67 = vld [vmem:[%s0 + $0xb8] sm:$0xff]
  %v68 = vld [vmem:[%s0 + $0xc0] sm:$0xff]
  %v69 = vld [vmem:[%s0 + $0xc8] sm:$0xff]
  %v70 = vld [vmem:[%s1] sm:$0xff]
  %v71 = vld [vmem:[%s1 + $0x8] sm:$0xff]
  %v72 = vld [vmem:[%s1 + $0x10] sm:$0xff]
  %v73 = vld [vmem:[%s1 + $0x18] sm:$0xff]
  %v74 = vld [vmem:[%s1 + $0x20] sm:$0xff]
  %v75 = vld [vmem:[%s1 + $0x28] sm:$0xff]
  %v76 = vld [vmem:[%s1 + $0x30] sm:$0xff]
  %v77 = vld [vmem:[%s1 + $0x38] sm:$0xff]
  %v78 = vld [vmem:[%s1 + $0x40] sm:$0xff]
  %v79 = vld [vmem:[%s1 + $0x48] sm:$0xff]
  %v80 = vld [vmem:[%s1 + $0x50] sm:$0xff]
  %v81 = vld [vmem:[%s1 + $0x58] sm:$0xff]
  %v82 = vld [vmem:[%s1 + $0x60] sm:$0xff]
  %v83 = vld [vmem:[%s1 + $0x68] sm:$0xff]
  %v84 = vld [vmem:[%s1 + $0x70] sm:$0xff]
  %v85 = vld [vmem:[%s1 + $0x78] sm:$0xff]
  %v86 = vld [vmem:[%s1 + $0x80] sm:$0xff]
  %v87 = vld [vmem:[%s1 + $0x88] sm:$0xff]
  %v88 = vld [vmem:[%s2] sm:$0x1]
  %v90 = vlaneseq
  %v91 = vshrl.u32 %v90, 7
  %v92 = vsub.s32 0, %v91
  %v93 = vrot.slane %v88, %v92
  %vm95 = vcmask 130048
  %v97 = vsel %vm95, %v45, 0
  %v100 = vsel %vm95, %v47, 0
  %v103 = vsel %vm95, %v49, 0
  %v106 = vsel %vm95, %v51, 0
  %v109 = vsel %vm95, %v53, 0
  %v112 = vsel %vm95, %v55, 0
  %v115 = vsel %vm95, %v57, 0
  %v118 = vsel %vm95, %v59, 0
  %v121 = vsel %vm95, %v61, 0
  %v124 = vsel %vm95, %v63, 0
  %v127 = vsel %vm95, %v65, 0
  %v130 = vsel %vm95, %v67, 0
  %v133 = vsel %vm95, %v69, 0
  %135 = vmatprep.subr.mxu0 0.0
  %136 = vmatpush1.msra.mxu0 %v85
  %137 = vmatprep.subr.mxu0 0.0
  %138 = vmatpush1.msra.mxu0 %v84
  %139 = vmatprep.subr.mxu0 0.0
  %140 = vmatpush1.msra.mxu0 %v83
  %141 = vmatprep.subr.mxu0 0.0
  %142 = vmatpush1.msra.mxu0 %v82
  %143 = vmatprep.subr.mxu0 0.0
  %144 = vmatpush1.msra.mxu0 %v81
  %145 = vmatprep.subr.mxu0 0.0
  %146 = vmatpush1.msra.mxu0 %v80
  %147 = vmatprep.subr.mxu0 0.0
  %148 = vmatpush1.msra.mxu0 %v79
  %149 = vmatprep.subr.mxu0 0.0
  %150 = vmatpush1.msra.mxu0 %v78
  %151 = vmatprep.subr.mxu0 0.0
  %152 = vmatpush1.msra.mxu0 %v77
  %153 = vmatprep.subr.mxu0 0.0
  %154 = vmatpush1.msra.mxu0 %v76
  %155 = vmatprep.subr.mxu0 0.0
  %156 = vmatpush1.msra.mxu0 %v75
  %157 = vmatprep.subr.mxu0 0.0
  %158 = vmatpush1.msra.mxu0 %v74
  %159 = vmatprep.subr.mxu0 0.0
  %160 = vmatpush1.msra.mxu0 %v73
  %161 = vmatprep.subr.mxu0 0.0
  %162 = vmatpush1.msra.mxu0 %v72
  %163 = vmatprep.subr.mxu0 0.0
  %164 = vmatpush1.msra.mxu0 %v71
  %165 = vmatprep.subr.mxu0 0.0
  %166 = vmatpush1.msra.mxu0 %v70
  %167 = vmatprep.subr.mxu0 0.0
  %168 = vmatpush2.msra.mxu0 0.0
  %169 = vmatprep.subr.mxu0 0.0
  %170 = vmatpush2.msra.mxu0 0.0
  %171 = vmatprep.subr.mxu0 0.0
  %172 = vmatpush2.msra.mxu0 0.0
  %173 = vmatprep.subr.mxu0 0.0
  %174 = vmatpush2.msra.mxu0 0.0
  %175 = vmatprep.subr.mxu0 0.0
  %176 = vmatpush2.msra.mxu0 0.0
  %177 = vmatprep.subr.mxu0 0.0
  %178 = vmatpush2.msra.mxu0 0.0
  %179 = vmatprep.subr.mxu0 0.0
  %180 = vmatpush2.msra.mxu0 0.0
  %181 = vmatprep.subr.mxu0 0.0
  %182 = vmatpush2.msra.mxu0 0.0
  %183 = vmatprep.subr.mxu0 0.0
  %184 = vmatpush2.msra.mxu0 0.0
  %185 = vmatprep.subr.mxu0 0.0
  %186 = vmatpush2.msra.mxu0 0.0
  %187 = vmatprep.subr.mxu0 0.0
  %188 = vmatpush2.msra.mxu0 0.0
  %189 = vmatprep.subr.mxu0 0.0
  %190 = vmatpush2.msra.mxu0 0.0
  %191 = vmatprep.subr.mxu0 0.0
  %192 = vmatpush2.msra.mxu0 0.0
  %193 = vmatprep.subr.mxu0 0.0
  %194 = vmatpush2.msra.mxu0 0.0
  %195 = vmatprep.subr.mxu0 0.0
  %196 = vmatpush2.msra.mxu0 %v87
  %197 = vmatprep.subr.mxu0 0.0
  %198 = vmatpush2.msra.mxu0 %v86
  %199 = vmatprep.mubr.f32.mxu0 %v97
  %200 = vmatmul.mubr.f32.gmra.mxu0 %v44
  %v201 = vpop.f32.mrf.mxu0
  %v202 = vadd.f32 %v93, %v201
  %v203 = vpop.f32.mrf.mxu0
  %204 = vmatprep.mubr.f32.mxu0 %v100
  %205 = vmatmul.mubr.f32.gmra.mxu0 %v46
  %v206 = vpop.f32.mrf.mxu0
  %v207 = vadd.f32 %v93, %v206
  %v208 = vpop.f32.mrf.mxu0
  %209 = vmatprep.mubr.f32.mxu0 %v103
  %210 = vmatmul.mubr.f32.gmra.mxu0 %v48
  %v211 = vpop.f32.mrf.mxu0
  %v212 = vadd.f32 %v93, %v211
  %v213 = vpop.f32.mrf.mxu0
  %214 = vmatprep.mubr.f32.mxu0 %v106
  %215 = vmatmul.mubr.f32.gmra.mxu0 %v50
  %v216 = vpop.f32.mrf.mxu0
  %v217 = vadd.f32 %v93, %v216
  %v218 = vpop.f32.mrf.mxu0
  %219 = vmatprep.mubr.f32.mxu0 %v109
  %220 = vmatmul.mubr.f32.gmra.mxu0 %v52
  %v221 = vpop.f32.mrf.mxu0
  %v222 = vadd.f32 %v93, %v221
  %v223 = vpop.f32.mrf.mxu0
  %224 = vmatprep.mubr.f32.mxu0 %v112
  %225 = vmatmul.mubr.f32.gmra.mxu0 %v54
  %v226 = vpop.f32.mrf.mxu0
  %v227 = vadd.f32 %v93, %v226
  %v228 = vpop.f32.mrf.mxu0
  %229 = vmatprep.mubr.f32.mxu0 %v115
  %230 = vmatmul.mubr.f32.gmra.mxu0 %v56
  %v231 = vpop.f32.mrf.mxu0
  %v232 = vadd.f32 %v93, %v231
  %v233 = vpop.f32.mrf.mxu0
  %234 = vmatprep.mubr.f32.mxu0 %v118
  %235 = vmatmul.mubr.f32.gmra.mxu0 %v58
  %v236 = vpop.f32.mrf.mxu0
  %v237 = vadd.f32 %v93, %v236
  %v238 = vpop.f32.mrf.mxu0
  %239 = vmatprep.mubr.f32.mxu0 %v121
  %240 = vmatmul.mubr.f32.gmra.mxu0 %v60
  %v241 = vpop.f32.mrf.mxu0
  %v242 = vadd.f32 %v93, %v241
  %v243 = vpop.f32.mrf.mxu0
  %244 = vmatprep.mubr.f32.mxu0 %v124
  %245 = vmatmul.mubr.f32.gmra.mxu0 %v62
  %v246 = vpop.f32.mrf.mxu0
  %v247 = vadd.f32 %v93, %v246
  %v248 = vpop.f32.mrf.mxu0
  %249 = vmatprep.mubr.f32.mxu0 %v127
  %250 = vmatmul.mubr.f32.gmra.mxu0 %v64
  %v251 = vpop.f32.mrf.mxu0
  %v252 = vadd.f32 %v93, %v251
  %v253 = vpop.f32.mrf.mxu0
  %254 = vmatprep.mubr.f32.mxu0 %v130
  %255 = vmatmul.mubr.f32.gmra.mxu0 %v66
  %v256 = vpop.f32.mrf.mxu0
  %v257 = vadd.f32 %v93, %v256
  %v258 = vpop.f32.mrf.mxu0
  %259 = vmatprep.mubr.f32.mxu0 %v133
  %260 = vmatmul.mubr.f32.gmra.mxu0 %v68
  %v261 = vpop.f32.mrf.mxu0
  %v262 = vadd.f32 %v93, %v261
  %v263 = vpop.f32.mrf.mxu0
  %264 = vdwg.mxu0
  %v265 = vmax.f32 %v202, 0.0
  %v266 = vmax.f32 %v207, 0.0
  %v267 = vmax.f32 %v212, 0.0
  %v268 = vmax.f32 %v217, 0.0
  %v269 = vmax.f32 %v222, 0.0
  %v270 = vmax.f32 %v227, 0.0
  %v271 = vmax.f32 %v232, 0.0
  %v272 = vmax.f32 %v237, 0.0
  %v273 = vmax.f32 %v242, 0.0
  %v274 = vmax.f32 %v247, 0.0
  %v275 = vmax.f32 %v252, 0.0
  %v276 = vmax.f32 %v257, 0.0
  %v277 = vmax.f32 %v262, 0.0
  %v278 = vld [vmem:[%s3] sm:$0xff]
  %v279 = vld [vmem:[%s3 + $0x8] sm:$0xff]
  %v280 = vld [vmem:[%s3 + $0x10] sm:$0xff]
  %vm281 = vcmask 850944
  %v283 = vsel %vm281, %v278, 0
  %v286 = vsel %vm281, %v279, 0
  %v289 = vsel %vm281, %v280, 0
  %291 = vmatprep.subr.mxu0 0.0
  %292 = vmatpush1.msra.mxu0 0.0
  %293 = vmatprep.subr.mxu0 0.0
  %294 = vmatpush1.msra.mxu0 0.0
  %295 = vmatprep.subr.mxu0 0.0
  %296 = vmatpush1.msra.mxu0 0.0
  %297 = vmatprep.subr.mxu0 0.0
  %298 = vmatpush1.msra.mxu0 %v277
  %299 = vmatprep.subr.mxu0 0.0
  %300 = vmatpush1.msra.mxu0 %v276
  %301 = vmatprep.subr.mxu0 0.0
  %302 = vmatpush1.msra.mxu0 %v275
  %303 = vmatprep.subr.mxu0 0.0
  %304 = vmatpush1.msra.mxu0 %v274
  %305 = vmatprep.subr.mxu0 0.0
  %306 = vmatpush1.msra.mxu0 %v273
  %307 = vmatprep.subr.mxu0 0.0
  %308 = vmatpush1.msra.mxu0 %v272
  %309 = vmatprep.subr.mxu0 0.0
  %310 = vmatpush1.msra.mxu0 %v271
  %311 = vmatprep.subr.mxu0 0.0
  %312 = vmatpush1.msra.mxu0 %v270
  %313 = vmatprep.subr.mxu0 0.0
  %314 = vmatpush1.msra.mxu0 %v269
  %315 = vmatprep.subr.mxu0 0.0
  %316 = vmatpush1.msra.mxu0 %v268
  %317 = vmatprep.subr.mxu0 0.0
  %318 = vmatpush1.msra.mxu0 %v267
  %319 = vmatprep.subr.mxu0 0.0
  %320 = vmatpush1.msra.mxu0 %v266
  %321 = vmatprep.subr.mxu0 0.0
  %322 = vmatpush1.msra.mxu0 %v265
  %323 = vmatprep.subr.mxu0 0.0
  %324 = vmatpush2.msra.mxu0 0.0
  %325 = vmatprep.subr.mxu0 0.0
  %326 = vmatpush2.msra.mxu0 0.0
  %327 = vmatprep.subr.mxu0 0.0
  %328 = vmatpush2.msra.mxu0 0.0
  %329 = vmatprep.subr.mxu0 0.0
  %330 = vmatpush2.msra.mxu0 0.0
  %331 = vmatprep.subr.mxu0 0.0
  %332 = vmatpush2.msra.mxu0 0.0
  %333 = vmatprep.subr.mxu0 0.0
  %334 = vmatpush2.msra.mxu0 0.0
  %335 = vmatprep.subr.mxu0 0.0
  %336 = vmatpush2.msra.mxu0 0.0
  %337 = vmatprep.subr.mxu0 0.0
  %338 = vmatpush2.msra.mxu0 0.0
  %339 = vmatprep.subr.mxu0 0.0
  %340 = vmatpush2.msra.mxu0 0.0
  %341 = vmatprep.subr.mxu0 0.0
  %342 = vmatpush2.msra.mxu0 0.0
  %343 = vmatprep.subr.mxu0 0.0
  %344 = vmatpush2.msra.mxu0 0.0
  %345 = vmatprep.subr.mxu0 0.0
  %346 = vmatpush2.msra.mxu0 0.0
  %347 = vmatprep.subr.mxu0 0.0
  %348 = vmatpush2.msra.mxu0 0.0
  %349 = vmatprep.subr.mxu0 0.0
  %350 = vmatpush2.msra.mxu0 0.0
  %351 = vmatprep.subr.mxu0 0.0
  %352 = vmatpush2.msra.mxu0 0.0
  %353 = vmatprep.subr.mxu0 0.0
  %354 = vmatpush2.msra.mxu0 0.0
  %355 = vmatprep.mubr.f32.mxu0 0.0
  %356 = vmatmul.mubr.f32.gmra.mxu0 %v283
  %v357 = vpop.f32.mrf.mxu0
  %v358 = vadd.f32 0.0, %v357
  %v359 = vpop.f32.mrf.mxu0
  %360 = vmatprep.mubr.f32.mxu0 0.0
  %361 = vmatmul.mubr.f32.gmra.mxu0 %v286
  %v362 = vpop.f32.mrf.mxu0
  %v363 = vadd.f32 0.0, %v362
  %v364 = vpop.f32.mrf.mxu0
  %365 = vmatprep.mubr.f32.mxu0 0.0
  %366 = vmatmul.mubr.f32.gmra.mxu0 %v289
  %v367 = vpop.f32.mrf.mxu0
  %v368 = vadd.f32 0.0, %v367
  %v369 = vpop.f32.mrf.mxu0
  %370 = vdwg.mxu0
  %v371 = vld [vmem:[%s4] sm:$0xff]
  %s372 = scalar_lea.vmem %s3, 24
  %v373 = vld [vmem:[%s372] sm:$0xff]
  %v374 = vld [vmem:[%s372 + $0x8] sm:$0xff]
  %v375 = vld [vmem:[%s372 + $0x10] sm:$0xff]
  %v377 = vsel %vm281, %v373, 0
  %v380 = vsel %vm281, %v374, 0
  %v383 = vsel %vm281, %v375, 0
  %385 = vmatprep.subr.mxu0 0.0
  %386 = vmatpush1.msra.mxu0 0.0
  %387 = vmatprep.subr.mxu0 0.0
  %388 = vmatpush1.msra.mxu0 0.0
  %389 = vmatprep.subr.mxu0 0.0
  %390 = vmatpush1.msra.mxu0 0.0
  %391 = vmatprep.subr.mxu0 0.0
  %392 = vmatpush1.msra.mxu0 %v277
  %393 = vmatprep.subr.mxu0 0.0
  %394 = vmatpush1.msra.mxu0 %v276
  %395 = vmatprep.subr.mxu0 0.0
  %396 = vmatpush1.msra.mxu0 %v275
  %397 = vmatprep.subr.mxu0 0.0
  %398 = vmatpush1.msra.mxu0 %v274
  %399 = vmatprep.subr.mxu0 0.0
  %400 = vmatpush1.msra.mxu0 %v273
  %401 = vmatprep.subr.mxu0 0.0
  %402 = vmatpush1.msra.mxu0 %v272
  %403 = vmatprep.subr.mxu0 0.0
  %404 = vmatpush1.msra.mxu0 %v271
  %405 = vmatprep.subr.mxu0 0.0
  %406 = vmatpush1.msra.mxu0 %v270
  %407 = vmatprep.subr.mxu0 0.0
  %408 = vmatpush1.msra.mxu0 %v269
  %409 = vmatprep.subr.mxu0 0.0
  %410 = vmatpush1.msra.mxu0 %v268
  %411 = vmatprep.subr.mxu0 0.0
  %412 = vmatpush1.msra.mxu0 %v267
  %413 = vmatprep.subr.mxu0 0.0
  %414 = vmatpush1.msra.mxu0 %v266
  %415 = vmatprep.subr.mxu0 0.0
  %416 = vmatpush1.msra.mxu0 %v265
  %417 = vmatprep.subr.mxu0 0.0
  %418 = vmatpush2.msra.mxu0 0.0
  %419 = vmatprep.subr.mxu0 0.0
  %420 = vmatpush2.msra.mxu0 0.0
  %421 = vmatprep.subr.mxu0 0.0
  %422 = vmatpush2.msra.mxu0 0.0
  %423 = vmatprep.subr.mxu0 0.0
  %424 = vmatpush2.msra.mxu0 0.0
  %425 = vmatprep.subr.mxu0 0.0
  %426 = vmatpush2.msra.mxu0 0.0
  %427 = vmatprep.subr.mxu0 0.0
  %428 = vmatpush2.msra.mxu0 0.0
  %429 = vmatprep.subr.mxu0 0.0
  %430 = vmatpush2.msra.mxu0 0.0
  %431 = vmatprep.subr.mxu0 0.0
  %432 = vmatpush2.msra.mxu0 0.0
  %433 = vmatprep.subr.mxu0 0.0
  %434 = vmatpush2.msra.mxu0 0.0
  %435 = vmatprep.subr.mxu0 0.0
  %436 = vmatpush2.msra.mxu0 0.0
  %437 = vmatprep.subr.mxu0 0.0
  %438 = vmatpush2.msra.mxu0 0.0
  %439 = vmatprep.subr.mxu0 0.0
  %440 = vmatpush2.msra.mxu0 0.0
  %441 = vmatprep.subr.mxu0 0.0
  %442 = vmatpush2.msra.mxu0 0.0
  %443 = vmatprep.subr.mxu0 0.0
  %444 = vmatpush2.msra.mxu0 0.0
  %445 = vmatprep.subr.mxu0 0.0
  %446 = vmatpush2.msra.mxu0 0.0
  %447 = vmatprep.subr.mxu0 0.0
  %448 = vmatpush2.msra.mxu0 0.0
  %449 = vmatprep.mubr.f32.mxu0 0.0
  %450 = vmatmul.mubr.f32.gmra.mxu0 %v377
  %v451 = vpop.f32.mrf.mxu0
  %v452 = vadd.f32 0.0, %v451
  %v453 = vpop.f32.mrf.mxu0
  %454 = vmatprep.mubr.f32.mxu0 0.0
  %455 = vmatmul.mubr.f32.gmra.mxu0 %v380
  %v456 = vpop.f32.mrf.mxu0
  %v457 = vadd.f32 0.0, %v456
  %v458 = vpop.f32.mrf.mxu0
  %459 = vmatprep.mubr.f32.mxu0 0.0
  %460 = vmatmul.mubr.f32.gmra.mxu0 %v383
  %v461 = vpop.f32.mrf.mxu0
  %v462 = vadd.f32 0.0, %v461
  %v463 = vpop.f32.mrf.mxu0
  %464 = vdwg.mxu0
  %s465 = scalar_lea.vmem %s4, 8
  %v466 = vld [vmem:[%s465] sm:$0xff]
  %vm467 = vcmask 64512
  %v469 = vsel %vm467, %v452, 0
  %v472 = vsel %vm467, %v457, 0
  %v475 = vsel %vm467, %v462, 0
  %477 = vmatprep.subr.mxu0 0.0
  %478 = vmatpush1.msra.mxu0 0.0
  %479 = vmatprep.subr.mxu0 0.0
  %480 = vmatpush1.msra.mxu0 0.0
  %481 = vmatprep.subr.mxu0 0.0
  %482 = vmatpush1.msra.mxu0 0.0
  %483 = vmatprep.subr.mxu0 0.0
  %484 = vmatpush1.msra.mxu0 0.0
  %485 = vmatprep.subr.mxu0 0.0
  %486 = vmatpush1.msra.mxu0 0.0
  %487 = vmatprep.subr.mxu0 0.0
  %488 = vmatpush1.msra.mxu0 0.0
  %489 = vmatprep.subr.mxu0 0.0
  %490 = vmatpush1.msra.mxu0 0.0
  %491 = vmatprep.subr.mxu0 0.0
  %492 = vmatpush1.msra.mxu0 0.0
  %493 = vmatprep.subr.mxu0 0.0
  %494 = vmatpush1.msra.mxu0 0.0
  %495 = vmatprep.subr.mxu0 0.0
  %496 = vmatpush1.msra.mxu0 0.0
  %497 = vmatprep.subr.mxu0 0.0
  %498 = vmatpush1.msra.mxu0 0.0
  %499 = vmatprep.subr.mxu0 0.0
  %500 = vmatpush1.msra.mxu0 0.0
  %501 = vmatprep.subr.mxu0 0.0
  %502 = vmatpush1.msra.mxu0 0.0
  %503 = vmatprep.subr.mxu0 0.0
  %504 = vmatpush1.msra.mxu0 0.0
  %505 = vmatprep.subr.mxu0 0.0
  %506 = vmatpush1.msra.mxu0 0.0
  %507 = vmatprep.subr.mxu0 0.0
  %508 = vmatpush1.msra.mxu0 %v466
  %509 = vmatprep.subr.mxu0 0.0
  %510 = vmatpush2.msra.mxu0 0.0
  %511 = vmatprep.subr.mxu0 0.0
  %512 = vmatpush2.msra.mxu0 0.0
  %513 = vmatprep.subr.mxu0 0.0
  %514 = vmatpush2.msra.mxu0 0.0
  %515 = vmatprep.subr.mxu0 0.0
  %516 = vmatpush2.msra.mxu0 0.0
  %517 = vmatprep.subr.mxu0 0.0
  %518 = vmatpush2.msra.mxu0 0.0
  %519 = vmatprep.subr.mxu0 0.0
  %520 = vmatpush2.msra.mxu0 0.0
  %521 = vmatprep.subr.mxu0 0.0
  %522 = vmatpush2.msra.mxu0 0.0
  %523 = vmatprep.subr.mxu0 0.0
  %524 = vmatpush2.msra.mxu0 0.0
  %525 = vmatprep.subr.mxu0 0.0
  %526 = vmatpush2.msra.mxu0 0.0
  %527 = vmatprep.subr.mxu0 0.0
  %528 = vmatpush2.msra.mxu0 0.0
  %529 = vmatprep.subr.mxu0 0.0
  %530 = vmatpush2.msra.mxu0 0.0
  %531 = vmatprep.subr.mxu0 0.0
  %532 = vmatpush2.msra.mxu0 0.0
  %533 = vmatprep.subr.mxu0 0.0
  %534 = vmatpush2.msra.mxu0 0.0
  %535 = vmatprep.subr.mxu0 0.0
  %536 = vmatpush2.msra.mxu0 0.0
  %537 = vmatprep.subr.mxu0 0.0
  %538 = vmatpush2.msra.mxu0 0.0
  %539 = vmatprep.subr.mxu0 0.0
  %540 = vmatpush2.msra.mxu0 0.0
  %541 = vmatprep.mubr.f32.mxu0 0.0
  %542 = vmatmul.mubr.f32.gmra.mxu0 %v469
  %v543 = vpop.f32.mrf.mxu0
  %v544 = vadd.f32 0.0, %v543
  %v545 = vpop.f32.mrf.mxu0
  %546 = vmatprep.mubr.f32.mxu0 0.0
  %547 = vmatmul.mubr.f32.gmra.mxu0 %v472
  %v548 = vpop.f32.mrf.mxu0
  %v549 = vadd.f32 0.0, %v548
  %v550 = vpop.f32.mrf.mxu0
  %551 = vmatprep.mubr.f32.mxu0 0.0
  %552 = vmatmul.mubr.f32.gmra.mxu0 %v475
  %v553 = vpop.f32.mrf.mxu0
  %v554 = vadd.f32 0.0, %v553
  %v555 = vpop.f32.mrf.mxu0
  %556 = vdwg.mxu0
  %v558 = vsel %vm467, %v358, 0
  %v561 = vsel %vm467, %v363, 0
  %v564 = vsel %vm467, %v368, 0
  %566 = vmatprep.subr.mxu0 0.0
  %567 = vmatpush1.msra.mxu0 0.0
  %568 = vmatprep.subr.mxu0 0.0
  %569 = vmatpush1.msra.mxu0 0.0
  %570 = vmatprep.subr.mxu0 0.0
  %571 = vmatpush1.msra.mxu0 0.0
  %572 = vmatprep.subr.mxu0 0.0
  %573 = vmatpush1.msra.mxu0 0.0
  %574 = vmatprep.subr.mxu0 0.0
  %575 = vmatpush1.msra.mxu0 0.0
  %576 = vmatprep.subr.mxu0 0.0
  %577 = vmatpush1.msra.mxu0 0.0
  %578 = vmatprep.subr.mxu0 0.0
  %579 = vmatpush1.msra.mxu0 0.0
  %580 = vmatprep.subr.mxu0 0.0
  %581 = vmatpush1.msra.mxu0 0.0
  %582 = vmatprep.subr.mxu0 0.0
  %583 = vmatpush1.msra.mxu0 0.0
  %584 = vmatprep.subr.mxu0 0.0
  %585 = vmatpush1.msra.mxu0 0.0
  %586 = vmatprep.subr.mxu0 0.0
  %587 = vmatpush1.msra.mxu0 0.0
  %588 = vmatprep.subr.mxu0 0.0
  %589 = vmatpush1.msra.mxu0 0.0
  %590 = vmatprep.subr.mxu0 0.0
  %591 = vmatpush1.msra.mxu0 0.0
  %592 = vmatprep.subr.mxu0 0.0
  %593 = vmatpush1.msra.mxu0 0.0
  %594 = vmatprep.subr.mxu0 0.0
  %595 = vmatpush1.msra.mxu0 0.0
  %596 = vmatprep.subr.mxu0 0.0
  %597 = vmatpush1.msra.mxu0 %v371
  %598 = vmatprep.subr.mxu0 0.0
  %599 = vmatpush2.msra.mxu0 0.0
  %600 = vmatprep.subr.mxu0 0.0
  %601 = vmatpush2.msra.mxu0 0.0
  %602 = vmatprep.subr.mxu0 0.0
  %603 = vmatpush2.msra.mxu0 0.0
  %604 = vmatprep.subr.mxu0 0.0
  %605 = vmatpush2.msra.mxu0 0.0
  %606 = vmatprep.subr.mxu0 0.0
  %607 = vmatpush2.msra.mxu0 0.0
  %608 = vmatprep.subr.mxu0 0.0
  %609 = vmatpush2.msra.mxu0 0.0
  %610 = vmatprep.subr.mxu0 0.0
  %611 = vmatpush2.msra.mxu0 0.0
  %612 = vmatprep.subr.mxu0 0.0
  %613 = vmatpush2.msra.mxu0 0.0
  %614 = vmatprep.subr.mxu0 0.0
  %615 = vmatpush2.msra.mxu0 0.0
  %616 = vmatprep.subr.mxu0 0.0
  %617 = vmatpush2.msra.mxu0 0.0
  %618 = vmatprep.subr.mxu0 0.0
  %619 = vmatpush2.msra.mxu0 0.0
  %620 = vmatprep.subr.mxu0 0.0
  %621 = vmatpush2.msra.mxu0 0.0
  %622 = vmatprep.subr.mxu0 0.0
  %623 = vmatpush2.msra.mxu0 0.0
  %624 = vmatprep.subr.mxu0 0.0
  %625 = vmatpush2.msra.mxu0 0.0
  %626 = vmatprep.subr.mxu0 0.0
  %627 = vmatpush2.msra.mxu0 0.0
  %628 = vmatprep.subr.mxu0 0.0
  %629 = vmatpush2.msra.mxu0 0.0
  %630 = vmatprep.mubr.f32.mxu0 0.0
  %631 = vmatmul.mubr.f32.gmra.mxu0 %v558
  %v632 = vpop.f32.mrf.mxu0
  %v633 = vadd.f32 %v544, %v632
  %v634 = vpop.f32.mrf.mxu0
  %635 = vmatprep.mubr.f32.mxu0 0.0
  %636 = vmatmul.mubr.f32.gmra.mxu0 %v561
  %v637 = vpop.f32.mrf.mxu0
  %v638 = vadd.f32 %v549, %v637
  %v639 = vpop.f32.mrf.mxu0
  %640 = vmatprep.mubr.f32.mxu0 0.0
  %641 = vmatmul.mubr.f32.gmra.mxu0 %v564
  %v642 = vpop.f32.mrf.mxu0
  %v643 = vadd.f32 %v554, %v642
  %v644 = vpop.f32.mrf.mxu0
  %645 = vdwg.mxu0
  %s646 = scalar_lea.vmem %s3, 48
  %v647 = vld [vmem:[%s646] sm:$0xff]
  %v648 = vld [vmem:[%s646 + $0x8] sm:$0xff]
  %v649 = vld [vmem:[%s646 + $0x10] sm:$0xff]
  %v651 = vsel %vm281, %v647, 0
  %v654 = vsel %vm281, %v648, 0
  %v657 = vsel %vm281, %v649, 0
  %659 = vmatprep.subr.mxu0 0.0
  %660 = vmatpush1.msra.mxu0 0.0
  %661 = vmatprep.subr.mxu0 0.0
  %662 = vmatpush1.msra.mxu0 0.0
  %663 = vmatprep.subr.mxu0 0.0
  %664 = vmatpush1.msra.mxu0 0.0
  %665 = vmatprep.subr.mxu0 0.0
  %666 = vmatpush1.msra.mxu0 %v277
  %667 = vmatprep.subr.mxu0 0.0
  %668 = vmatpush1.msra.mxu0 %v276
  %669 = vmatprep.subr.mxu0 0.0
  %670 = vmatpush1.msra.mxu0 %v275
  %671 = vmatprep.subr.mxu0 0.0
  %672 = vmatpush1.msra.mxu0 %v274
  %673 = vmatprep.subr.mxu0 0.0
  %674 = vmatpush1.msra.mxu0 %v273
  %675 = vmatprep.subr.mxu0 0.0
  %676 = vmatpush1.msra.mxu0 %v272
  %677 = vmatprep.subr.mxu0 0.0
  %678 = vmatpush1.msra.mxu0 %v271
  %679 = vmatprep.subr.mxu0 0.0
  %680 = vmatpush1.msra.mxu0 %v270
  %681 = vmatprep.subr.mxu0 0.0
  %682 = vmatpush1.msra.mxu0 %v269
  %683 = vmatprep.subr.mxu0 0.0
  %684 = vmatpush1.msra.mxu0 %v268
  %685 = vmatprep.subr.mxu0 0.0
  %686 = vmatpush1.msra.mxu0 %v267
  %687 = vmatprep.subr.mxu0 0.0
  %688 = vmatpush1.msra.mxu0 %v266
  %689 = vmatprep.subr.mxu0 0.0
  %690 = vmatpush1.msra.mxu0 %v265
  %691 = vmatprep.subr.mxu0 0.0
  %692 = vmatpush2.msra.mxu0 0.0
  %693 = vmatprep.subr.mxu0 0.0
  %694 = vmatpush2.msra.mxu0 0.0
  %695 = vmatprep.subr.mxu0 0.0
  %696 = vmatpush2.msra.mxu0 0.0
  %697 = vmatprep.subr.mxu0 0.0
  %698 = vmatpush2.msra.mxu0 0.0
  %699 = vmatprep.subr.mxu0 0.0
  %700 = vmatpush2.msra.mxu0 0.0
  %701 = vmatprep.subr.mxu0 0.0
  %702 = vmatpush2.msra.mxu0 0.0
  %703 = vmatprep.subr.mxu0 0.0
  %704 = vmatpush2.msra.mxu0 0.0
  %705 = vmatprep.subr.mxu0 0.0
  %706 = vmatpush2.msra.mxu0 0.0
  %707 = vmatprep.subr.mxu0 0.0
  %708 = vmatpush2.msra.mxu0 0.0
  %709 = vmatprep.subr.mxu0 0.0
  %710 = vmatpush2.msra.mxu0 0.0
  %711 = vmatprep.subr.mxu0 0.0
  %712 = vmatpush2.msra.mxu0 0.0
  %713 = vmatprep.subr.mxu0 0.0
  %714 = vmatpush2.msra.mxu0 0.0
  %715 = vmatprep.subr.mxu0 0.0
  %716 = vmatpush2.msra.mxu0 0.0
  %717 = vmatprep.subr.mxu0 0.0
  %718 = vmatpush2.msra.mxu0 0.0
  %719 = vmatprep.subr.mxu0 0.0
  %720 = vmatpush2.msra.mxu0 0.0
  %721 = vmatprep.subr.mxu0 0.0
  %722 = vmatpush2.msra.mxu0 0.0
  %723 = vmatprep.mubr.f32.mxu0 0.0
  %724 = vmatmul.mubr.f32.gmra.mxu0 %v651
  %v725 = vpop.f32.mrf.mxu0
  %v726 = vadd.f32 0.0, %v725
  %v727 = vpop.f32.mrf.mxu0
  %728 = vmatprep.mubr.f32.mxu0 0.0
  %729 = vmatmul.mubr.f32.gmra.mxu0 %v654
  %v730 = vpop.f32.mrf.mxu0
  %v731 = vadd.f32 0.0, %v730
  %v732 = vpop.f32.mrf.mxu0
  %733 = vmatprep.mubr.f32.mxu0 0.0
  %734 = vmatmul.mubr.f32.gmra.mxu0 %v657
  %v735 = vpop.f32.mrf.mxu0
  %v736 = vadd.f32 0.0, %v735
  %v737 = vpop.f32.mrf.mxu0
  %738 = vdwg.mxu0
  %s739 = scalar_lea.vmem %s4, 16
  %v740 = vld [vmem:[%s739] sm:$0xff]
  %v742 = vsel %vm467, %v726, 0
  %v745 = vsel %vm467, %v731, 0
  %v748 = vsel %vm467, %v736, 0
  %750 = vmatprep.subr.mxu0 0.0
  %751 = vmatpush1.msra.mxu0 0.0
  %752 = vmatprep.subr.mxu0 0.0
  %753 = vmatpush1.msra.mxu0 0.0
  %754 = vmatprep.subr.mxu0 0.0
  %755 = vmatpush1.msra.mxu0 0.0
  %756 = vmatprep.subr.mxu0 0.0
  %757 = vmatpush1.msra.mxu0 0.0
  %758 = vmatprep.subr.mxu0 0.0
  %759 = vmatpush1.msra.mxu0 0.0
  %760 = vmatprep.subr.mxu0 0.0
  %761 = vmatpush1.msra.mxu0 0.0
  %762 = vmatprep.subr.mxu0 0.0
  %763 = vmatpush1.msra.mxu0 0.0
  %764 = vmatprep.subr.mxu0 0.0
  %765 = vmatpush1.msra.mxu0 0.0
  %766 = vmatprep.subr.mxu0 0.0
  %767 = vmatpush1.msra.mxu0 0.0
  %768 = vmatprep.subr.mxu0 0.0
  %769 = vmatpush1.msra.mxu0 0.0
  %770 = vmatprep.subr.mxu0 0.0
  %771 = vmatpush1.msra.mxu0 0.0
  %772 = vmatprep.subr.mxu0 0.0
  %773 = vmatpush1.msra.mxu0 0.0
  %774 = vmatprep.subr.mxu0 0.0
  %775 = vmatpush1.msra.mxu0 0.0
  %776 = vmatprep.subr.mxu0 0.0
  %777 = vmatpush1.msra.mxu0 0.0
  %778 = vmatprep.subr.mxu0 0.0
  %779 = vmatpush1.msra.mxu0 0.0
  %780 = vmatprep.subr.mxu0 0.0
  %781 = vmatpush1.msra.mxu0 %v740
  %782 = vmatprep.subr.mxu0 0.0
  %783 = vmatpush2.msra.mxu0 0.0
  %784 = vmatprep.subr.mxu0 0.0
  %785 = vmatpush2.msra.mxu0 0.0
  %786 = vmatprep.subr.mxu0 0.0
  %787 = vmatpush2.msra.mxu0 0.0
  %788 = vmatprep.subr.mxu0 0.0
  %789 = vmatpush2.msra.mxu0 0.0
  %790 = vmatprep.subr.mxu0 0.0
  %791 = vmatpush2.msra.mxu0 0.0
  %792 = vmatprep.subr.mxu0 0.0
  %793 = vmatpush2.msra.mxu0 0.0
  %794 = vmatprep.subr.mxu0 0.0
  %795 = vmatpush2.msra.mxu0 0.0
  %796 = vmatprep.subr.mxu0 0.0
  %797 = vmatpush2.msra.mxu0 0.0
  %798 = vmatprep.subr.mxu0 0.0
  %799 = vmatpush2.msra.mxu0 0.0
  %800 = vmatprep.subr.mxu0 0.0
  %801 = vmatpush2.msra.mxu0 0.0
  %802 = vmatprep.subr.mxu0 0.0
  %803 = vmatpush2.msra.mxu0 0.0
  %804 = vmatprep.subr.mxu0 0.0
  %805 = vmatpush2.msra.mxu0 0.0
  %806 = vmatprep.subr.mxu0 0.0
  %807 = vmatpush2.msra.mxu0 0.0
  %808 = vmatprep.subr.mxu0 0.0
  %809 = vmatpush2.msra.mxu0 0.0
  %810 = vmatprep.subr.mxu0 0.0
  %811 = vmatpush2.msra.mxu0 0.0
  %812 = vmatprep.subr.mxu0 0.0
  %813 = vmatpush2.msra.mxu0 0.0
  %814 = vmatprep.mubr.f32.mxu0 0.0
  %815 = vmatmul.mubr.f32.gmra.mxu0 %v742
  %v816 = vpop.f32.mrf.mxu0
  %v817 = vadd.f32 0.0, %v816
  %v818 = vpop.f32.mrf.mxu0
  %819 = vmatprep.mubr.f32.mxu0 0.0
  %820 = vmatmul.mubr.f32.gmra.mxu0 %v745
  %v821 = vpop.f32.mrf.mxu0
  %v822 = vadd.f32 0.0, %v821
  %v823 = vpop.f32.mrf.mxu0
  %824 = vmatprep.mubr.f32.mxu0 0.0
  %825 = vmatmul.mubr.f32.gmra.mxu0 %v748
  %v826 = vpop.f32.mrf.mxu0
  %v827 = vadd.f32 0.0, %v826
  %v828 = vpop.f32.mrf.mxu0
  %829 = vdwg.mxu0
  %v830 = vadd.f32 %v633, %v817
  %v831 = vadd.f32 %v638, %v822
  %v832 = vadd.f32 %v643, %v827
  %s833 = scalar_lea.vmem %s3, 72
  %v834 = vld [vmem:[%s833] sm:$0xff]
  %v835 = vld [vmem:[%s833 + $0x8] sm:$0xff]
  %v836 = vld [vmem:[%s833 + $0x10] sm:$0xff]
  %v838 = vsel %vm281, %v834, 0
  %v841 = vsel %vm281, %v835, 0
  %v844 = vsel %vm281, %v836, 0
  %846 = vmatprep.subr.mxu0 0.0
  %847 = vmatpush1.msra.mxu0 0.0
  %848 = vmatprep.subr.mxu0 0.0
  %849 = vmatpush1.msra.mxu0 0.0
  %850 = vmatprep.subr.mxu0 0.0
  %851 = vmatpush1.msra.mxu0 0.0
  %852 = vmatprep.subr.mxu0 0.0
  %853 = vmatpush1.msra.mxu0 %v277
  %854 = vmatprep.subr.mxu0 0.0
  %855 = vmatpush1.msra.mxu0 %v276
  %856 = vmatprep.subr.mxu0 0.0
  %857 = vmatpush1.msra.mxu0 %v275
  %858 = vmatprep.subr.mxu0 0.0
  %859 = vmatpush1.msra.mxu0 %v274
  %860 = vmatprep.subr.mxu0 0.0
  %861 = vmatpush1.msra.mxu0 %v273
  %862 = vmatprep.subr.mxu0 0.0
  %863 = vmatpush1.msra.mxu0 %v272
  %864 = vmatprep.subr.mxu0 0.0
  %865 = vmatpush1.msra.mxu0 %v271
  %866 = vmatprep.subr.mxu0 0.0
  %867 = vmatpush1.msra.mxu0 %v270
  %868 = vmatprep.subr.mxu0 0.0
  %869 = vmatpush1.msra.mxu0 %v269
  %870 = vmatprep.subr.mxu0 0.0
  %871 = vmatpush1.msra.mxu0 %v268
  %872 = vmatprep.subr.mxu0 0.0
  %873 = vmatpush1.msra.mxu0 %v267
  %874 = vmatprep.subr.mxu0 0.0
  %875 = vmatpush1.msra.mxu0 %v266
  %876 = vmatprep.subr.mxu0 0.0
  %877 = vmatpush1.msra.mxu0 %v265
  %878 = vmatprep.subr.mxu0 0.0
  %879 = vmatpush2.msra.mxu0 0.0
  %880 = vmatprep.subr.mxu0 0.0
  %881 = vmatpush2.msra.mxu0 0.0
  %882 = vmatprep.subr.mxu0 0.0
  %883 = vmatpush2.msra.mxu0 0.0
  %884 = vmatprep.subr.mxu0 0.0
  %885 = vmatpush2.msra.mxu0 0.0
  %886 = vmatprep.subr.mxu0 0.0
  %887 = vmatpush2.msra.mxu0 0.0
  %888 = vmatprep.subr.mxu0 0.0
  %889 = vmatpush2.msra.mxu0 0.0
  %890 = vmatprep.subr.mxu0 0.0
  %891 = vmatpush2.msra.mxu0 0.0
  %892 = vmatprep.subr.mxu0 0.0
  %893 = vmatpush2.msra.mxu0 0.0
  %894 = vmatprep.subr.mxu0 0.0
  %895 = vmatpush2.msra.mxu0 0.0
  %896 = vmatprep.subr.mxu0 0.0
  %897 = vmatpush2.msra.mxu0 0.0
  %898 = vmatprep.subr.mxu0 0.0
  %899 = vmatpush2.msra.mxu0 0.0
  %900 = vmatprep.subr.mxu0 0.0
  %901 = vmatpush2.msra.mxu0 0.0
  %902 = vmatprep.subr.mxu0 0.0
  %903 = vmatpush2.msra.mxu0 0.0
  %904 = vmatprep.subr.mxu0 0.0
  %905 = vmatpush2.msra.mxu0 0.0
  %906 = vmatprep.subr.mxu0 0.0
  %907 = vmatpush2.msra.mxu0 0.0
  %908 = vmatprep.subr.mxu0 0.0
  %909 = vmatpush2.msra.mxu0 0.0
  %910 = vmatprep.mubr.f32.mxu0 0.0
  %911 = vmatmul.mubr.f32.gmra.mxu0 %v838
  %v912 = vpop.f32.mrf.mxu0
  %v913 = vadd.f32 0.0, %v912
  %v914 = vpop.f32.mrf.mxu0
  %915 = vmatprep.mubr.f32.mxu0 0.0
  %916 = vmatmul.mubr.f32.gmra.mxu0 %v841
  %v917 = vpop.f32.mrf.mxu0
  %v918 = vadd.f32 0.0, %v917
  %v919 = vpop.f32.mrf.mxu0
  %920 = vmatprep.mubr.f32.mxu0 0.0
  %921 = vmatmul.mubr.f32.gmra.mxu0 %v844
  %v922 = vpop.f32.mrf.mxu0
  %v923 = vadd.f32 0.0, %v922
  %v924 = vpop.f32.mrf.mxu0
  %925 = vdwg.mxu0
  %s926 = scalar_lea.vmem %s4, 24
  %v927 = vld [vmem:[%s926] sm:$0xff]
  %v929 = vsel %vm467, %v913, 0
  %v932 = vsel %vm467, %v918, 0
  %v935 = vsel %vm467, %v923, 0
  %937 = vmatprep.subr.mxu0 0.0
  %938 = vmatpush1.msra.mxu0 0.0
  %939 = vmatprep.subr.mxu0 0.0
  %940 = vmatpush1.msra.mxu0 0.0
  %941 = vmatprep.subr.mxu0 0.0
  %942 = vmatpush1.msra.mxu0 0.0
  %943 = vmatprep.subr.mxu0 0.0
  %944 = vmatpush1.msra.mxu0 0.0
  %945 = vmatprep.subr.mxu0 0.0
  %946 = vmatpush1.msra.mxu0 0.0
  %947 = vmatprep.subr.mxu0 0.0
  %948 = vmatpush1.msra.mxu0 0.0
  %949 = vmatprep.subr.mxu0 0.0
  %950 = vmatpush1.msra.mxu0 0.0
  %951 = vmatprep.subr.mxu0 0.0
  %952 = vmatpush1.msra.mxu0 0.0
  %953 = vmatprep.subr.mxu0 0.0
  %954 = vmatpush1.msra.mxu0 0.0
  %955 = vmatprep.subr.mxu0 0.0
  %956 = vmatpush1.msra.mxu0 0.0
  %957 = vmatprep.subr.mxu0 0.0
  %958 = vmatpush1.msra.mxu0 0.0
  %959 = vmatprep.subr.mxu0 0.0
  %960 = vmatpush1.msra.mxu0 0.0
  %961 = vmatprep.subr.mxu0 0.0
  %962 = vmatpush1.msra.mxu0 0.0
  %963 = vmatprep.subr.mxu0 0.0
  %964 = vmatpush1.msra.mxu0 0.0
  %965 = vmatprep.subr.mxu0 0.0
  %966 = vmatpush1.msra.mxu0 0.0
  %967 = vmatprep.subr.mxu0 0.0
  %968 = vmatpush1.msra.mxu0 %v927
  %969 = vmatprep.subr.mxu0 0.0
  %970 = vmatpush2.msra.mxu0 0.0
  %971 = vmatprep.subr.mxu0 0.0
  %972 = vmatpush2.msra.mxu0 0.0
  %973 = vmatprep.subr.mxu0 0.0
  %974 = vmatpush2.msra.mxu0 0.0
  %975 = vmatprep.subr.mxu0 0.0
  %976 = vmatpush2.msra.mxu0 0.0
  %977 = vmatprep.subr.mxu0 0.0
  %978 = vmatpush2.msra.mxu0 0.0
  %979 = vmatprep.subr.mxu0 0.0
  %980 = vmatpush2.msra.mxu0 0.0
  %981 = vmatprep.subr.mxu0 0.0
  %982 = vmatpush2.msra.mxu0 0.0
  %983 = vmatprep.subr.mxu0 0.0
  %984 = vmatpush2.msra.mxu0 0.0
  %985 = vmatprep.subr.mxu0 0.0
  %986 = vmatpush2.msra.mxu0 0.0
  %987 = vmatprep.subr.mxu0 0.0
  %988 = vmatpush2.msra.mxu0 0.0
  %989 = vmatprep.subr.mxu0 0.0
  %990 = vmatpush2.msra.mxu0 0.0
  %991 = vmatprep.subr.mxu0 0.0
  %992 = vmatpush2.msra.mxu0 0.0
  %993 = vmatprep.subr.mxu0 0.0
  %994 = vmatpush2.msra.mxu0 0.0
  %995 = vmatprep.subr.mxu0 0.0
  %996 = vmatpush2.msra.mxu0 0.0
  %997 = vmatprep.subr.mxu0 0.0
  %998 = vmatpush2.msra.mxu0 0.0
  %999 = vmatprep.subr.mxu0 0.0
  %1000 = vmatpush2.msra.mxu0 0.0
  %1001 = vmatprep.mubr.f32.mxu0 0.0
  %1002 = vmatmul.mubr.f32.gmra.mxu0 %v929
  %v1003 = vpop.f32.mrf.mxu0
  %v1004 = vadd.f32 0.0, %v1003
  %v1005 = vpop.f32.mrf.mxu0
  %1006 = vmatprep.mubr.f32.mxu0 0.0
  %1007 = vmatmul.mubr.f32.gmra.mxu0 %v932
  %v1008 = vpop.f32.mrf.mxu0
  %v1009 = vadd.f32 0.0, %v1008
  %v1010 = vpop.f32.mrf.mxu0
  %1011 = vmatprep.mubr.f32.mxu0 0.0
  %1012 = vmatmul.mubr.f32.gmra.mxu0 %v935
  %v1013 = vpop.f32.mrf.mxu0
  %v1014 = vadd.f32 0.0, %v1013
  %v1015 = vpop.f32.mrf.mxu0
  %1016 = vdwg.mxu0
  %v1017 = vadd.f32 %v830, %v1004
  %v1018 = vadd.f32 %v831, %v1009
  %v1019 = vadd.f32 %v832, %v1014
  %s1020 = scalar_lea.vmem %s3, 96
  %v1021 = vld [vmem:[%s1020] sm:$0xff]
  %v1022 = vld [vmem:[%s1020 + $0x8] sm:$0xff]
  %v1023 = vld [vmem:[%s1020 + $0x10] sm:$0xff]
  %v1025 = vsel %vm281, %v1021, 0
  %v1028 = vsel %vm281, %v1022, 0
  %v1031 = vsel %vm281, %v1023, 0
  %1033 = vmatprep.subr.mxu0 0.0
  %1034 = vmatpush1.msra.mxu0 0.0
  %1035 = vmatprep.subr.mxu0 0.0
  %1036 = vmatpush1.msra.mxu0 0.0
  %1037 = vmatprep.subr.mxu0 0.0
  %1038 = vmatpush1.msra.mxu0 0.0
  %1039 = vmatprep.subr.mxu0 0.0
  %1040 = vmatpush1.msra.mxu0 %v277
  %1041 = vmatprep.subr.mxu0 0.0
  %1042 = vmatpush1.msra.mxu0 %v276
  %1043 = vmatprep.subr.mxu0 0.0
  %1044 = vmatpush1.msra.mxu0 %v275
  %1045 = vmatprep.subr.mxu0 0.0
  %1046 = vmatpush1.msra.mxu0 %v274
  %1047 = vmatprep.subr.mxu0 0.0
  %1048 = vmatpush1.msra.mxu0 %v273
  %1049 = vmatprep.subr.mxu0 0.0
  %1050 = vmatpush1.msra.mxu0 %v272
  %1051 = vmatprep.subr.mxu0 0.0
  %1052 = vmatpush1.msra.mxu0 %v271
  %1053 = vmatprep.subr.mxu0 0.0
  %1054 = vmatpush1.msra.mxu0 %v270
  %1055 = vmatprep.subr.mxu0 0.0
  %1056 = vmatpush1.msra.mxu0 %v269
  %1057 = vmatprep.subr.mxu0 0.0
  %1058 = vmatpush1.msra.mxu0 %v268
  %1059 = vmatprep.subr.mxu0 0.0
  %1060 = vmatpush1.msra.mxu0 %v267
  %1061 = vmatprep.subr.mxu0 0.0
  %1062 = vmatpush1.msra.mxu0 %v266
  %1063 = vmatprep.subr.mxu0 0.0
  %1064 = vmatpush1.msra.mxu0 %v265
  %1065 = vmatprep.subr.mxu0 0.0
  %1066 = vmatpush2.msra.mxu0 0.0
  %1067 = vmatprep.subr.mxu0 0.0
  %1068 = vmatpush2.msra.mxu0 0.0
  %1069 = vmatprep.subr.mxu0 0.0
  %1070 = vmatpush2.msra.mxu0 0.0
  %1071 = vmatprep.subr.mxu0 0.0
  %1072 = vmatpush2.msra.mxu0 0.0
  %1073 = vmatprep.subr.mxu0 0.0
  %1074 = vmatpush2.msra.mxu0 0.0
  %1075 = vmatprep.subr.mxu0 0.0
  %1076 = vmatpush2.msra.mxu0 0.0
  %1077 = vmatprep.subr.mxu0 0.0
  %1078 = vmatpush2.msra.mxu0 0.0
  %1079 = vmatprep.subr.mxu0 0.0
  %1080 = vmatpush2.msra.mxu0 0.0
  %1081 = vmatprep.subr.mxu0 0.0
  %1082 = vmatpush2.msra.mxu0 0.0
  %1083 = vmatprep.subr.mxu0 0.0
  %1084 = vmatpush2.msra.mxu0 0.0
  %1085 = vmatprep.subr.mxu0 0.0
  %1086 = vmatpush2.msra.mxu0 0.0
  %1087 = vmatprep.subr.mxu0 0.0
  %1088 = vmatpush2.msra.mxu0 0.0
  %1089 = vmatprep.subr.mxu0 0.0
  %1090 = vmatpush2.msra.mxu0 0.0
  %1091 = vmatprep.subr.mxu0 0.0
  %1092 = vmatpush2.msra.mxu0 0.0
  %1093 = vmatprep.subr.mxu0 0.0
  %1094 = vmatpush2.msra.mxu0 0.0
  %1095 = vmatprep.subr.mxu0 0.0
  %1096 = vmatpush2.msra.mxu0 0.0
  %1097 = vmatprep.mubr.f32.mxu0 0.0
  %1098 = vmatmul.mubr.f32.gmra.mxu0 %v1025
  %v1099 = vpop.f32.mrf.mxu0
  %v1100 = vadd.f32 0.0, %v1099
  %v1101 = vpop.f32.mrf.mxu0
  %1102 = vmatprep.mubr.f32.mxu0 0.0
  %1103 = vmatmul.mubr.f32.gmra.mxu0 %v1028
  %v1104 = vpop.f32.mrf.mxu0
  %v1105 = vadd.f32 0.0, %v1104
  %v1106 = vpop.f32.mrf.mxu0
  %1107 = vmatprep.mubr.f32.mxu0 0.0
  %1108 = vmatmul.mubr.f32.gmra.mxu0 %v1031
  %v1109 = vpop.f32.mrf.mxu0
  %v1110 = vadd.f32 0.0, %v1109
  %v1111 = vpop.f32.mrf.mxu0
  %1112 = vdwg.mxu0
  %s1113 = scalar_lea.vmem %s4, 32
  %v1114 = vld [vmem:[%s1113] sm:$0xff]
  %v1116 = vsel %vm467, %v1100, 0
  %v1119 = vsel %vm467, %v1105, 0
  %v1122 = vsel %vm467, %v1110, 0
  %1124 = vmatprep.subr.mxu0 0.0
  %1125 = vmatpush1.msra.mxu0 0.0
  %1126 = vmatprep.subr.mxu0 0.0
  %1127 = vmatpush1.msra.mxu0 0.0
  %1128 = vmatprep.subr.mxu0 0.0
  %1129 = vmatpush1.msra.mxu0 0.0
  %1130 = vmatprep.subr.mxu0 0.0
  %1131 = vmatpush1.msra.mxu0 0.0
  %1132 = vmatprep.subr.mxu0 0.0
  %1133 = vmatpush1.msra.mxu0 0.0
  %1134 = vmatprep.subr.mxu0 0.0
  %1135 = vmatpush1.msra.mxu0 0.0
  %1136 = vmatprep.subr.mxu0 0.0
  %1137 = vmatpush1.msra.mxu0 0.0
  %1138 = vmatprep.subr.mxu0 0.0
  %1139 = vmatpush1.msra.mxu0 0.0
  %1140 = vmatprep.subr.mxu0 0.0
  %1141 = vmatpush1.msra.mxu0 0.0
  %1142 = vmatprep.subr.mxu0 0.0
  %1143 = vmatpush1.msra.mxu0 0.0
  %1144 = vmatprep.subr.mxu0 0.0
  %1145 = vmatpush1.msra.mxu0 0.0
  %1146 = vmatprep.subr.mxu0 0.0
  %1147 = vmatpush1.msra.mxu0 0.0
  %1148 = vmatprep.subr.mxu0 0.0
  %1149 = vmatpush1.msra.mxu0 0.0
  %1150 = vmatprep.subr.mxu0 0.0
  %1151 = vmatpush1.msra.mxu0 0.0
  %1152 = vmatprep.subr.mxu0 0.0
  %1153 = vmatpush1.msra.mxu0 0.0
  %1154 = vmatprep.subr.mxu0 0.0
  %1155 = vmatpush1.msra.mxu0 %v1114
  %1156 = vmatprep.subr.mxu0 0.0
  %1157 = vmatpush2.msra.mxu0 0.0
  %1158 = vmatprep.subr.mxu0 0.0
  %1159 = vmatpush2.msra.mxu0 0.0
  %1160 = vmatprep.subr.mxu0 0.0
  %1161 = vmatpush2.msra.mxu0 0.0
  %1162 = vmatprep.subr.mxu0 0.0
  %1163 = vmatpush2.msra.mxu0 0.0
  %1164 = vmatprep.subr.mxu0 0.0
  %1165 = vmatpush2.msra.mxu0 0.0
  %1166 = vmatprep.subr.mxu0 0.0
  %1167 = vmatpush2.msra.mxu0 0.0
  %1168 = vmatprep.subr.mxu0 0.0
  %1169 = vmatpush2.msra.mxu0 0.0
  %1170 = vmatprep.subr.mxu0 0.0
  %1171 = vmatpush2.msra.mxu0 0.0
  %1172 = vmatprep.subr.mxu0 0.0
  %1173 = vmatpush2.msra.mxu0 0.0
  %1174 = vmatprep.subr.mxu0 0.0
  %1175 = vmatpush2.msra.mxu0 0.0
  %1176 = vmatprep.subr.mxu0 0.0
  %1177 = vmatpush2.msra.mxu0 0.0
  %1178 = vmatprep.subr.mxu0 0.0
  %1179 = vmatpush2.msra.mxu0 0.0
  %1180 = vmatprep.subr.mxu0 0.0
  %1181 = vmatpush2.msra.mxu0 0.0
  %1182 = vmatprep.subr.mxu0 0.0
  %1183 = vmatpush2.msra.mxu0 0.0
  %1184 = vmatprep.subr.mxu0 0.0
  %1185 = vmatpush2.msra.mxu0 0.0
  %1186 = vmatprep.subr.mxu0 0.0
  %1187 = vmatpush2.msra.mxu0 0.0
  %1188 = vmatprep.mubr.f32.mxu0 0.0
  %1189 = vmatmul.mubr.f32.gmra.mxu0 %v1116
  %v1190 = vpop.f32.mrf.mxu0
  %v1191 = vadd.f32 0.0, %v1190
  %v1192 = vpop.f32.mrf.mxu0
  %1193 = vmatprep.mubr.f32.mxu0 0.0
  %1194 = vmatmul.mubr.f32.gmra.mxu0 %v1119
  %v1195 = vpop.f32.mrf.mxu0
  %v1196 = vadd.f32 0.0, %v1195
  %v1197 = vpop.f32.mrf.mxu0
  %1198 = vmatprep.mubr.f32.mxu0 0.0
  %1199 = vmatmul.mubr.f32.gmra.mxu0 %v1122
  %v1200 = vpop.f32.mrf.mxu0
  %v1201 = vadd.f32 0.0, %v1200
  %v1202 = vpop.f32.mrf.mxu0
  %1203 = vdwg.mxu0
  %v1204 = vadd.f32 %v1017, %v1191
  %v1205 = vadd.f32 %v1018, %v1196
  %v1206 = vadd.f32 %v1019, %v1201
  %s1207 = scalar_lea.vmem %s3, 120
  %v1208 = vld [vmem:[%s1207] sm:$0xff]
  %v1209 = vld [vmem:[%s1207 + $0x8] sm:$0xff]
  %v1210 = vld [vmem:[%s1207 + $0x10] sm:$0xff]
  %v1212 = vsel %vm281, %v1208, 0
  %v1215 = vsel %vm281, %v1209, 0
  %v1218 = vsel %vm281, %v1210, 0
  %1220 = vmatprep.subr.mxu0 0.0
  %1221 = vmatpush1.msra.mxu0 0.0
  %1222 = vmatprep.subr.mxu0 0.0
  %1223 = vmatpush1.msra.mxu0 0.0
  %1224 = vmatprep.subr.mxu0 0.0
  %1225 = vmatpush1.msra.mxu0 0.0
  %1226 = vmatprep.subr.mxu0 0.0
  %1227 = vmatpush1.msra.mxu0 %v277
  %1228 = vmatprep.subr.mxu0 0.0
  %1229 = vmatpush1.msra.mxu0 %v276
  %1230 = vmatprep.subr.mxu0 0.0
  %1231 = vmatpush1.msra.mxu0 %v275
  %1232 = vmatprep.subr.mxu0 0.0
  %1233 = vmatpush1.msra.mxu0 %v274
  %1234 = vmatprep.subr.mxu0 0.0
  %1235 = vmatpush1.msra.mxu0 %v273
  %1236 = vmatprep.subr.mxu0 0.0
  %1237 = vmatpush1.msra.mxu0 %v272
  %1238 = vmatprep.subr.mxu0 0.0
  %1239 = vmatpush1.msra.mxu0 %v271
  %1240 = vmatprep.subr.mxu0 0.0
  %1241 = vmatpush1.msra.mxu0 %v270
  %1242 = vmatprep.subr.mxu0 0.0
  %1243 = vmatpush1.msra.mxu0 %v269
  %1244 = vmatprep.subr.mxu0 0.0
  %1245 = vmatpush1.msra.mxu0 %v268
  %1246 = vmatprep.subr.mxu0 0.0
  %1247 = vmatpush1.msra.mxu0 %v267
  %1248 = vmatprep.subr.mxu0 0.0
  %1249 = vmatpush1.msra.mxu0 %v266
  %1250 = vmatprep.subr.mxu0 0.0
  %1251 = vmatpush1.msra.mxu0 %v265
  %1252 = vmatprep.subr.mxu0 0.0
  %1253 = vmatpush2.msra.mxu0 0.0
  %1254 = vmatprep.subr.mxu0 0.0
  %1255 = vmatpush2.msra.mxu0 0.0
  %1256 = vmatprep.subr.mxu0 0.0
  %1257 = vmatpush2.msra.mxu0 0.0
  %1258 = vmatprep.subr.mxu0 0.0
  %1259 = vmatpush2.msra.mxu0 0.0
  %1260 = vmatprep.subr.mxu0 0.0
  %1261 = vmatpush2.msra.mxu0 0.0
  %1262 = vmatprep.subr.mxu0 0.0
  %1263 = vmatpush2.msra.mxu0 0.0
  %1264 = vmatprep.subr.mxu0 0.0
  %1265 = vmatpush2.msra.mxu0 0.0
  %1266 = vmatprep.subr.mxu0 0.0
  %1267 = vmatpush2.msra.mxu0 0.0
  %1268 = vmatprep.subr.mxu0 0.0
  %1269 = vmatpush2.msra.mxu0 0.0
  %1270 = vmatprep.subr.mxu0 0.0
  %1271 = vmatpush2.msra.mxu0 0.0
  %1272 = vmatprep.subr.mxu0 0.0
  %1273 = vmatpush2.msra.mxu0 0.0
  %1274 = vmatprep.subr.mxu0 0.0
  %1275 = vmatpush2.msra.mxu0 0.0
  %1276 = vmatprep.subr.mxu0 0.0
  %1277 = vmatpush2.msra.mxu0 0.0
  %1278 = vmatprep.subr.mxu0 0.0
  %1279 = vmatpush2.msra.mxu0 0.0
  %1280 = vmatprep.subr.mxu0 0.0
  %1281 = vmatpush2.msra.mxu0 0.0
  %1282 = vmatprep.subr.mxu0 0.0
  %1283 = vmatpush2.msra.mxu0 0.0
  %1284 = vmatprep.mubr.f32.mxu0 0.0
  %1285 = vmatmul.mubr.f32.gmra.mxu0 %v1212
  %v1286 = vpop.f32.mrf.mxu0
  %v1287 = vadd.f32 0.0, %v1286
  %v1288 = vpop.f32.mrf.mxu0
  %1289 = vmatprep.mubr.f32.mxu0 0.0
  %1290 = vmatmul.mubr.f32.gmra.mxu0 %v1215
  %v1291 = vpop.f32.mrf.mxu0
  %v1292 = vadd.f32 0.0, %v1291
  %v1293 = vpop.f32.mrf.mxu0
  %1294 = vmatprep.mubr.f32.mxu0 0.0
  %1295 = vmatmul.mubr.f32.gmra.mxu0 %v1218
  %v1296 = vpop.f32.mrf.mxu0
  %v1297 = vadd.f32 0.0, %v1296
  %v1298 = vpop.f32.mrf.mxu0
  %1299 = vdwg.mxu0
  %s1300 = scalar_lea.vmem %s4, 40
  %v1301 = vld [vmem:[%s1300] sm:$0xff]
  %v1303 = vsel %vm467, %v1287, 0
  %v1306 = vsel %vm467, %v1292, 0
  %v1309 = vsel %vm467, %v1297, 0
  %1311 = vmatprep.subr.mxu0 0.0
  %1312 = vmatpush1.msra.mxu0 0.0
  %1313 = vmatprep.subr.mxu0 0.0
  %1314 = vmatpush1.msra.mxu0 0.0
  %1315 = vmatprep.subr.mxu0 0.0
  %1316 = vmatpush1.msra.mxu0 0.0
  %1317 = vmatprep.subr.mxu0 0.0
  %1318 = vmatpush1.msra.mxu0 0.0
  %1319 = vmatprep.subr.mxu0 0.0
  %1320 = vmatpush1.msra.mxu0 0.0
  %1321 = vmatprep.subr.mxu0 0.0
  %1322 = vmatpush1.msra.mxu0 0.0
  %1323 = vmatprep.subr.mxu0 0.0
  %1324 = vmatpush1.msra.mxu0 0.0
  %1325 = vmatprep.subr.mxu0 0.0
  %1326 = vmatpush1.msra.mxu0 0.0
  %1327 = vmatprep.subr.mxu0 0.0
  %1328 = vmatpush1.msra.mxu0 0.0
  %1329 = vmatprep.subr.mxu0 0.0
  %1330 = vmatpush1.msra.mxu0 0.0
  %1331 = vmatprep.subr.mxu0 0.0
  %1332 = vmatpush1.msra.mxu0 0.0
  %1333 = vmatprep.subr.mxu0 0.0
  %1334 = vmatpush1.msra.mxu0 0.0
  %1335 = vmatprep.subr.mxu0 0.0
  %1336 = vmatpush1.msra.mxu0 0.0
  %1337 = vmatprep.subr.mxu0 0.0
  %1338 = vmatpush1.msra.mxu0 0.0
  %1339 = vmatprep.subr.mxu0 0.0
  %1340 = vmatpush1.msra.mxu0 0.0
  %1341 = vmatprep.subr.mxu0 0.0
  %1342 = vmatpush1.msra.mxu0 %v1301
  %1343 = vmatprep.subr.mxu0 0.0
  %1344 = vmatpush2.msra.mxu0 0.0
  %1345 = vmatprep.subr.mxu0 0.0
  %1346 = vmatpush2.msra.mxu0 0.0
  %1347 = vmatprep.subr.mxu0 0.0
  %1348 = vmatpush2.msra.mxu0 0.0
  %1349 = vmatprep.subr.mxu0 0.0
  %1350 = vmatpush2.msra.mxu0 0.0
  %1351 = vmatprep.subr.mxu0 0.0
  %1352 = vmatpush2.msra.mxu0 0.0
  %1353 = vmatprep.subr.mxu0 0.0
  %1354 = vmatpush2.msra.mxu0 0.0
  %1355 = vmatprep.subr.mxu0 0.0
  %1356 = vmatpush2.msra.mxu0 0.0
  %1357 = vmatprep.subr.mxu0 0.0
  %1358 = vmatpush2.msra.mxu0 0.0
  %1359 = vmatprep.subr.mxu0 0.0
  %1360 = vmatpush2.msra.mxu0 0.0
  %1361 = vmatprep.subr.mxu0 0.0
  %1362 = vmatpush2.msra.mxu0 0.0
  %1363 = vmatprep.subr.mxu0 0.0
  %1364 = vmatpush2.msra.mxu0 0.0
  %1365 = vmatprep.subr.mxu0 0.0
  %1366 = vmatpush2.msra.mxu0 0.0
  %1367 = vmatprep.subr.mxu0 0.0
  %1368 = vmatpush2.msra.mxu0 0.0
  %1369 = vmatprep.subr.mxu0 0.0
  %1370 = vmatpush2.msra.mxu0 0.0
  %1371 = vmatprep.subr.mxu0 0.0
  %1372 = vmatpush2.msra.mxu0 0.0
  %1373 = vmatprep.subr.mxu0 0.0
  %1374 = vmatpush2.msra.mxu0 0.0
  %1375 = vmatprep.mubr.f32.mxu0 0.0
  %1376 = vmatmul.mubr.f32.gmra.mxu0 %v1303
  %v1377 = vpop.f32.mrf.mxu0
  %v1378 = vadd.f32 0.0, %v1377
  %v1379 = vpop.f32.mrf.mxu0
  %1380 = vmatprep.mubr.f32.mxu0 0.0
  %1381 = vmatmul.mubr.f32.gmra.mxu0 %v1306
  %v1382 = vpop.f32.mrf.mxu0
  %v1383 = vadd.f32 0.0, %v1382
  %v1384 = vpop.f32.mrf.mxu0
  %1385 = vmatprep.mubr.f32.mxu0 0.0
  %1386 = vmatmul.mubr.f32.gmra.mxu0 %v1309
  %v1387 = vpop.f32.mrf.mxu0
  %v1388 = vadd.f32 0.0, %v1387
  %v1389 = vpop.f32.mrf.mxu0
  %1390 = vdwg.mxu0
  %v1391 = vadd.f32 %v1204, %v1378
  %v1392 = vadd.f32 %v1205, %v1383
  %v1393 = vadd.f32 %v1206, %v1388
  %s1394 = scalar_lea.vmem %s3, 144
  %v1395 = vld [vmem:[%s1394] sm:$0xff]
  %v1396 = vld [vmem:[%s1394 + $0x8] sm:$0xff]
  %v1397 = vld [vmem:[%s1394 + $0x10] sm:$0xff]
  %v1399 = vsel %vm281, %v1395, 0
  %v1402 = vsel %vm281, %v1396, 0
  %v1405 = vsel %vm281, %v1397, 0
  %1407 = vmatprep.subr.mxu0 0.0
  %1408 = vmatpush1.msra.mxu0 0.0
  %1409 = vmatprep.subr.mxu0 0.0
  %1410 = vmatpush1.msra.mxu0 0.0
  %1411 = vmatprep.subr.mxu0 0.0
  %1412 = vmatpush1.msra.mxu0 0.0
  %1413 = vmatprep.subr.mxu0 0.0
  %1414 = vmatpush1.msra.mxu0 %v277
  %1415 = vmatprep.subr.mxu0 0.0
  %1416 = vmatpush1.msra.mxu0 %v276
  %1417 = vmatprep.subr.mxu0 0.0
  %1418 = vmatpush1.msra.mxu0 %v275
  %1419 = vmatprep.subr.mxu0 0.0
  %1420 = vmatpush1.msra.mxu0 %v274
  %1421 = vmatprep.subr.mxu0 0.0
  %1422 = vmatpush1.msra.mxu0 %v273
  %1423 = vmatprep.subr.mxu0 0.0
  %1424 = vmatpush1.msra.mxu0 %v272
  %1425 = vmatprep.subr.mxu0 0.0
  %1426 = vmatpush1.msra.mxu0 %v271
  %1427 = vmatprep.subr.mxu0 0.0
  %1428 = vmatpush1.msra.mxu0 %v270
  %1429 = vmatprep.subr.mxu0 0.0
  %1430 = vmatpush1.msra.mxu0 %v269
  %1431 = vmatprep.subr.mxu0 0.0
  %1432 = vmatpush1.msra.mxu0 %v268
  %1433 = vmatprep.subr.mxu0 0.0
  %1434 = vmatpush1.msra.mxu0 %v267
  %1435 = vmatprep.subr.mxu0 0.0
  %1436 = vmatpush1.msra.mxu0 %v266
  %1437 = vmatprep.subr.mxu0 0.0
  %1438 = vmatpush1.msra.mxu0 %v265
  %1439 = vmatprep.subr.mxu0 0.0
  %1440 = vmatpush2.msra.mxu0 0.0
  %1441 = vmatprep.subr.mxu0 0.0
  %1442 = vmatpush2.msra.mxu0 0.0
  %1443 = vmatprep.subr.mxu0 0.0
  %1444 = vmatpush2.msra.mxu0 0.0
  %1445 = vmatprep.subr.mxu0 0.0
  %1446 = vmatpush2.msra.mxu0 0.0
  %1447 = vmatprep.subr.mxu0 0.0
  %1448 = vmatpush2.msra.mxu0 0.0
  %1449 = vmatprep.subr.mxu0 0.0
  %1450 = vmatpush2.msra.mxu0 0.0
  %1451 = vmatprep.subr.mxu0 0.0
  %1452 = vmatpush2.msra.mxu0 0.0
  %1453 = vmatprep.subr.mxu0 0.0
  %1454 = vmatpush2.msra.mxu0 0.0
  %1455 = vmatprep.subr.mxu0 0.0
  %1456 = vmatpush2.msra.mxu0 0.0
  %1457 = vmatprep.subr.mxu0 0.0
  %1458 = vmatpush2.msra.mxu0 0.0
  %1459 = vmatprep.subr.mxu0 0.0
  %1460 = vmatpush2.msra.mxu0 0.0
  %1461 = vmatprep.subr.mxu0 0.0
  %1462 = vmatpush2.msra.mxu0 0.0
  %1463 = vmatprep.subr.mxu0 0.0
  %1464 = vmatpush2.msra.mxu0 0.0
  %1465 = vmatprep.subr.mxu0 0.0
  %1466 = vmatpush2.msra.mxu0 0.0
  %1467 = vmatprep.subr.mxu0 0.0
  %1468 = vmatpush2.msra.mxu0 0.0
  %1469 = vmatprep.subr.mxu0 0.0
  %1470 = vmatpush2.msra.mxu0 0.0
  %1471 = vmatprep.mubr.f32.mxu0 0.0
  %1472 = vmatmul.mubr.f32.gmra.mxu0 %v1399
  %v1473 = vpop.f32.mrf.mxu0
  %v1474 = vadd.f32 0.0, %v1473
  %v1475 = vpop.f32.mrf.mxu0
  %1476 = vmatprep.mubr.f32.mxu0 0.0
  %1477 = vmatmul.mubr.f32.gmra.mxu0 %v1402
  %v1478 = vpop.f32.mrf.mxu0
  %v1479 = vadd.f32 0.0, %v1478
  %v1480 = vpop.f32.mrf.mxu0
  %1481 = vmatprep.mubr.f32.mxu0 0.0
  %1482 = vmatmul.mubr.f32.gmra.mxu0 %v1405
  %v1483 = vpop.f32.mrf.mxu0
  %v1484 = vadd.f32 0.0, %v1483
  %v1485 = vpop.f32.mrf.mxu0
  %1486 = vdwg.mxu0
  %s1487 = scalar_lea.vmem %s4, 48
  %v1488 = vld [vmem:[%s1487] sm:$0xff]
  %v1490 = vsel %vm467, %v1474, 0
  %v1493 = vsel %vm467, %v1479, 0
  %v1496 = vsel %vm467, %v1484, 0
  %1498 = vmatprep.subr.mxu0 0.0
  %1499 = vmatpush1.msra.mxu0 0.0
  %1500 = vmatprep.subr.mxu0 0.0
  %1501 = vmatpush1.msra.mxu0 0.0
  %1502 = vmatprep.subr.mxu0 0.0
  %1503 = vmatpush1.msra.mxu0 0.0
  %1504 = vmatprep.subr.mxu0 0.0
  %1505 = vmatpush1.msra.mxu0 0.0
  %1506 = vmatprep.subr.mxu0 0.0
  %1507 = vmatpush1.msra.mxu0 0.0
  %1508 = vmatprep.subr.mxu0 0.0
  %1509 = vmatpush1.msra.mxu0 0.0
  %1510 = vmatprep.subr.mxu0 0.0
  %1511 = vmatpush1.msra.mxu0 0.0
  %1512 = vmatprep.subr.mxu0 0.0
  %1513 = vmatpush1.msra.mxu0 0.0
  %1514 = vmatprep.subr.mxu0 0.0
  %1515 = vmatpush1.msra.mxu0 0.0
  %1516 = vmatprep.subr.mxu0 0.0
  %1517 = vmatpush1.msra.mxu0 0.0
  %1518 = vmatprep.subr.mxu0 0.0
  %1519 = vmatpush1.msra.mxu0 0.0
  %1520 = vmatprep.subr.mxu0 0.0
  %1521 = vmatpush1.msra.mxu0 0.0
  %1522 = vmatprep.subr.mxu0 0.0
  %1523 = vmatpush1.msra.mxu0 0.0
  %1524 = vmatprep.subr.mxu0 0.0
  %1525 = vmatpush1.msra.mxu0 0.0
  %1526 = vmatprep.subr.mxu0 0.0
  %1527 = vmatpush1.msra.mxu0 0.0
  %1528 = vmatprep.subr.mxu0 0.0
  %1529 = vmatpush1.msra.mxu0 %v1488
  %1530 = vmatprep.subr.mxu0 0.0
  %1531 = vmatpush2.msra.mxu0 0.0
  %1532 = vmatprep.subr.mxu0 0.0
  %1533 = vmatpush2.msra.mxu0 0.0
  %1534 = vmatprep.subr.mxu0 0.0
  %1535 = vmatpush2.msra.mxu0 0.0
  %1536 = vmatprep.subr.mxu0 0.0
  %1537 = vmatpush2.msra.mxu0 0.0
  %1538 = vmatprep.subr.mxu0 0.0
  %1539 = vmatpush2.msra.mxu0 0.0
  %1540 = vmatprep.subr.mxu0 0.0
  %1541 = vmatpush2.msra.mxu0 0.0
  %1542 = vmatprep.subr.mxu0 0.0
  %1543 = vmatpush2.msra.mxu0 0.0
  %1544 = vmatprep.subr.mxu0 0.0
  %1545 = vmatpush2.msra.mxu0 0.0
  %1546 = vmatprep.subr.mxu0 0.0
  %1547 = vmatpush2.msra.mxu0 0.0
  %1548 = vmatprep.subr.mxu0 0.0
  %1549 = vmatpush2.msra.mxu0 0.0
  %1550 = vmatprep.subr.mxu0 0.0
  %1551 = vmatpush2.msra.mxu0 0.0
  %1552 = vmatprep.subr.mxu0 0.0
  %1553 = vmatpush2.msra.mxu0 0.0
  %1554 = vmatprep.subr.mxu0 0.0
  %1555 = vmatpush2.msra.mxu0 0.0
  %1556 = vmatprep.subr.mxu0 0.0
  %1557 = vmatpush2.msra.mxu0 0.0
  %1558 = vmatprep.subr.mxu0 0.0
  %1559 = vmatpush2.msra.mxu0 0.0
  %1560 = vmatprep.subr.mxu0 0.0
  %1561 = vmatpush2.msra.mxu0 0.0
  %1562 = vmatprep.mubr.f32.mxu0 0.0
  %1563 = vmatmul.mubr.f32.gmra.mxu0 %v1490
  %v1564 = vpop.f32.mrf.mxu0
  %v1565 = vadd.f32 0.0, %v1564
  %v1566 = vpop.f32.mrf.mxu0
  %1567 = vmatprep.mubr.f32.mxu0 0.0
  %1568 = vmatmul.mubr.f32.gmra.mxu0 %v1493
  %v1569 = vpop.f32.mrf.mxu0
  %v1570 = vadd.f32 0.0, %v1569
  %v1571 = vpop.f32.mrf.mxu0
  %1572 = vmatprep.mubr.f32.mxu0 0.0
  %1573 = vmatmul.mubr.f32.gmra.mxu0 %v1496
  %v1574 = vpop.f32.mrf.mxu0
  %v1575 = vadd.f32 0.0, %v1574
  %v1576 = vpop.f32.mrf.mxu0
  %1577 = vdwg.mxu0
  %v1578 = vadd.f32 %v1391, %v1565
  %v1579 = vadd.f32 %v1392, %v1570
  %v1580 = vadd.f32 %v1393, %v1575
  %s1581 = scalar_lea.vmem %s3, 168
  %v1582 = vld [vmem:[%s1581] sm:$0xff]
  %v1583 = vld [vmem:[%s1581 + $0x8] sm:$0xff]
  %v1584 = vld [vmem:[%s1581 + $0x10] sm:$0xff]
  %v1586 = vsel %vm281, %v1582, 0
  %v1589 = vsel %vm281, %v1583, 0
  %v1592 = vsel %vm281, %v1584, 0
  %1594 = vmatprep.subr.mxu0 0.0
  %1595 = vmatpush1.msra.mxu0 0.0
  %1596 = vmatprep.subr.mxu0 0.0
  %1597 = vmatpush1.msra.mxu0 0.0
  %1598 = vmatprep.subr.mxu0 0.0
  %1599 = vmatpush1.msra.mxu0 0.0
  %1600 = vmatprep.subr.mxu0 0.0
  %1601 = vmatpush1.msra.mxu0 %v277
  %1602 = vmatprep.subr.mxu0 0.0
  %1603 = vmatpush1.msra.mxu0 %v276
  %1604 = vmatprep.subr.mxu0 0.0
  %1605 = vmatpush1.msra.mxu0 %v275
  %1606 = vmatprep.subr.mxu0 0.0
  %1607 = vmatpush1.msra.mxu0 %v274
  %1608 = vmatprep.subr.mxu0 0.0
  %1609 = vmatpush1.msra.mxu0 %v273
  %1610 = vmatprep.subr.mxu0 0.0
  %1611 = vmatpush1.msra.mxu0 %v272
  %1612 = vmatprep.subr.mxu0 0.0
  %1613 = vmatpush1.msra.mxu0 %v271
  %1614 = vmatprep.subr.mxu0 0.0
  %1615 = vmatpush1.msra.mxu0 %v270
  %1616 = vmatprep.subr.mxu0 0.0
  %1617 = vmatpush1.msra.mxu0 %v269
  %1618 = vmatprep.subr.mxu0 0.0
  %1619 = vmatpush1.msra.mxu0 %v268
  %1620 = vmatprep.subr.mxu0 0.0
  %1621 = vmatpush1.msra.mxu0 %v267
  %1622 = vmatprep.subr.mxu0 0.0
  %1623 = vmatpush1.msra.mxu0 %v266
  %1624 = vmatprep.subr.mxu0 0.0
  %1625 = vmatpush1.msra.mxu0 %v265
  %1626 = vmatprep.subr.mxu0 0.0
  %1627 = vmatpush2.msra.mxu0 0.0
  %1628 = vmatprep.subr.mxu0 0.0
  %1629 = vmatpush2.msra.mxu0 0.0
  %1630 = vmatprep.subr.mxu0 0.0
  %1631 = vmatpush2.msra.mxu0 0.0
  %1632 = vmatprep.subr.mxu0 0.0
  %1633 = vmatpush2.msra.mxu0 0.0
  %1634 = vmatprep.subr.mxu0 0.0
  %1635 = vmatpush2.msra.mxu0 0.0
  %1636 = vmatprep.subr.mxu0 0.0
  %1637 = vmatpush2.msra.mxu0 0.0
  %1638 = vmatprep.subr.mxu0 0.0
  %1639 = vmatpush2.msra.mxu0 0.0
  %1640 = vmatprep.subr.mxu0 0.0
  %1641 = vmatpush2.msra.mxu0 0.0
  %1642 = vmatprep.subr.mxu0 0.0
  %1643 = vmatpush2.msra.mxu0 0.0
  %1644 = vmatprep.subr.mxu0 0.0
  %1645 = vmatpush2.msra.mxu0 0.0
  %1646 = vmatprep.subr.mxu0 0.0
  %1647 = vmatpush2.msra.mxu0 0.0
  %1648 = vmatprep.subr.mxu0 0.0
  %1649 = vmatpush2.msra.mxu0 0.0
  %1650 = vmatprep.subr.mxu0 0.0
  %1651 = vmatpush2.msra.mxu0 0.0
  %1652 = vmatprep.subr.mxu0 0.0
  %1653 = vmatpush2.msra.mxu0 0.0
  %1654 = vmatprep.subr.mxu0 0.0
  %1655 = vmatpush2.msra.mxu0 0.0
  %1656 = vmatprep.subr.mxu0 0.0
  %1657 = vmatpush2.msra.mxu0 0.0
  %1658 = vmatprep.mubr.f32.mxu0 0.0
  %1659 = vmatmul.mubr.f32.gmra.mxu0 %v1586
  %v1660 = vpop.f32.mrf.mxu0
  %v1661 = vadd.f32 0.0, %v1660
  %v1662 = vpop.f32.mrf.mxu0
  %1663 = vmatprep.mubr.f32.mxu0 0.0
  %1664 = vmatmul.mubr.f32.gmra.mxu0 %v1589
  %v1665 = vpop.f32.mrf.mxu0
  %v1666 = vadd.f32 0.0, %v1665
  %v1667 = vpop.f32.mrf.mxu0
  %1668 = vmatprep.mubr.f32.mxu0 0.0
  %1669 = vmatmul.mubr.f32.gmra.mxu0 %v1592
  %v1670 = vpop.f32.mrf.mxu0
  %v1671 = vadd.f32 0.0, %v1670
  %v1672 = vpop.f32.mrf.mxu0
  %1673 = vdwg.mxu0
  %s1674 = scalar_lea.vmem %s4, 56
  %v1675 = vld [vmem:[%s1674] sm:$0xff]
  %v1677 = vsel %vm467, %v1661, 0
  %v1680 = vsel %vm467, %v1666, 0
  %v1683 = vsel %vm467, %v1671, 0
  %1685 = vmatprep.subr.mxu0 0.0
  %1686 = vmatpush1.msra.mxu0 0.0
  %1687 = vmatprep.subr.mxu0 0.0
  %1688 = vmatpush1.msra.mxu0 0.0
  %1689 = vmatprep.subr.mxu0 0.0
  %1690 = vmatpush1.msra.mxu0 0.0
  %1691 = vmatprep.subr.mxu0 0.0
  %1692 = vmatpush1.msra.mxu0 0.0
  %1693 = vmatprep.subr.mxu0 0.0
  %1694 = vmatpush1.msra.mxu0 0.0
  %1695 = vmatprep.subr.mxu0 0.0
  %1696 = vmatpush1.msra.mxu0 0.0
  %1697 = vmatprep.subr.mxu0 0.0
  %1698 = vmatpush1.msra.mxu0 0.0
  %1699 = vmatprep.subr.mxu0 0.0
  %1700 = vmatpush1.msra.mxu0 0.0
  %1701 = vmatprep.subr.mxu0 0.0
  %1702 = vmatpush1.msra.mxu0 0.0
  %1703 = vmatprep.subr.mxu0 0.0
  %1704 = vmatpush1.msra.mxu0 0.0
  %1705 = vmatprep.subr.mxu0 0.0
  %1706 = vmatpush1.msra.mxu0 0.0
  %1707 = vmatprep.subr.mxu0 0.0
  %1708 = vmatpush1.msra.mxu0 0.0
  %1709 = vmatprep.subr.mxu0 0.0
  %1710 = vmatpush1.msra.mxu0 0.0
  %1711 = vmatprep.subr.mxu0 0.0
  %1712 = vmatpush1.msra.mxu0 0.0
  %1713 = vmatprep.subr.mxu0 0.0
  %1714 = vmatpush1.msra.mxu0 0.0
  %1715 = vmatprep.subr.mxu0 0.0
  %1716 = vmatpush1.msra.mxu0 %v1675
  %1717 = vmatprep.subr.mxu0 0.0
  %1718 = vmatpush2.msra.mxu0 0.0
  %1719 = vmatprep.subr.mxu0 0.0
  %1720 = vmatpush2.msra.mxu0 0.0
  %1721 = vmatprep.subr.mxu0 0.0
  %1722 = vmatpush2.msra.mxu0 0.0
  %1723 = vmatprep.subr.mxu0 0.0
  %1724 = vmatpush2.msra.mxu0 0.0
  %1725 = vmatprep.subr.mxu0 0.0
  %1726 = vmatpush2.msra.mxu0 0.0
  %1727 = vmatprep.subr.mxu0 0.0
  %1728 = vmatpush2.msra.mxu0 0.0
  %1729 = vmatprep.subr.mxu0 0.0
  %1730 = vmatpush2.msra.mxu0 0.0
  %1731 = vmatprep.subr.mxu0 0.0
  %1732 = vmatpush2.msra.mxu0 0.0
  %1733 = vmatprep.subr.mxu0 0.0
  %1734 = vmatpush2.msra.mxu0 0.0
  %1735 = vmatprep.subr.mxu0 0.0
  %1736 = vmatpush2.msra.mxu0 0.0
  %1737 = vmatprep.subr.mxu0 0.0
  %1738 = vmatpush2.msra.mxu0 0.0
  %1739 = vmatprep.subr.mxu0 0.0
  %1740 = vmatpush2.msra.mxu0 0.0
  %1741 = vmatprep.subr.mxu0 0.0
  %1742 = vmatpush2.msra.mxu0 0.0
  %1743 = vmatprep.subr.mxu0 0.0
  %1744 = vmatpush2.msra.mxu0 0.0
  %1745 = vmatprep.subr.mxu0 0.0
  %1746 = vmatpush2.msra.mxu0 0.0
  %1747 = vmatprep.subr.mxu0 0.0
  %1748 = vmatpush2.msra.mxu0 0.0
  %1749 = vmatprep.mubr.f32.mxu0 0.0
  %1750 = vmatmul.mubr.f32.gmra.mxu0 %v1677
  %v1751 = vpop.f32.mrf.mxu0
  %v1752 = vadd.f32 0.0, %v1751
  %v1753 = vpop.f32.mrf.mxu0
  %1754 = vmatprep.mubr.f32.mxu0 0.0
  %1755 = vmatmul.mubr.f32.gmra.mxu0 %v1680
  %v1756 = vpop.f32.mrf.mxu0
  %v1757 = vadd.f32 0.0, %v1756
  %v1758 = vpop.f32.mrf.mxu0
  %1759 = vmatprep.mubr.f32.mxu0 0.0
  %1760 = vmatmul.mubr.f32.gmra.mxu0 %v1683
  %v1761 = vpop.f32.mrf.mxu0
  %v1762 = vadd.f32 0.0, %v1761
  %v1763 = vpop.f32.mrf.mxu0
  %1764 = vdwg.mxu0
  %v1765 = vadd.f32 %v1578, %v1752
  %v1766 = vadd.f32 %v1579, %v1757
  %v1767 = vadd.f32 %v1580, %v1762
  %s1768 = scalar_lea.vmem %s3, 192
  %v1769 = vld [vmem:[%s1768] sm:$0xff]
  %v1770 = vld [vmem:[%s1768 + $0x8] sm:$0xff]
  %v1771 = vld [vmem:[%s1768 + $0x10] sm:$0xff]
  %v1773 = vsel %vm281, %v1769, 0
  %v1776 = vsel %vm281, %v1770, 0
  %v1779 = vsel %vm281, %v1771, 0
  %1781 = vmatprep.subr.mxu0 0.0
  %1782 = vmatpush1.msra.mxu0 0.0
  %1783 = vmatprep.subr.mxu0 0.0
  %1784 = vmatpush1.msra.mxu0 0.0
  %1785 = vmatprep.subr.mxu0 0.0
  %1786 = vmatpush1.msra.mxu0 0.0
  %1787 = vmatprep.subr.mxu0 0.0
  %1788 = vmatpush1.msra.mxu0 %v277
  %1789 = vmatprep.subr.mxu0 0.0
  %1790 = vmatpush1.msra.mxu0 %v276
  %1791 = vmatprep.subr.mxu0 0.0
  %1792 = vmatpush1.msra.mxu0 %v275
  %1793 = vmatprep.subr.mxu0 0.0
  %1794 = vmatpush1.msra.mxu0 %v274
  %1795 = vmatprep.subr.mxu0 0.0
  %1796 = vmatpush1.msra.mxu0 %v273
  %1797 = vmatprep.subr.mxu0 0.0
  %1798 = vmatpush1.msra.mxu0 %v272
  %1799 = vmatprep.subr.mxu0 0.0
  %1800 = vmatpush1.msra.mxu0 %v271
  %1801 = vmatprep.subr.mxu0 0.0
  %1802 = vmatpush1.msra.mxu0 %v270
  %1803 = vmatprep.subr.mxu0 0.0
  %1804 = vmatpush1.msra.mxu0 %v269
  %1805 = vmatprep.subr.mxu0 0.0
  %1806 = vmatpush1.msra.mxu0 %v268
  %1807 = vmatprep.subr.mxu0 0.0
  %1808 = vmatpush1.msra.mxu0 %v267
  %1809 = vmatprep.subr.mxu0 0.0
  %1810 = vmatpush1.msra.mxu0 %v266
  %1811 = vmatprep.subr.mxu0 0.0
  %1812 = vmatpush1.msra.mxu0 %v265
  %1813 = vmatprep.subr.mxu0 0.0
  %1814 = vmatpush2.msra.mxu0 0.0
  %1815 = vmatprep.subr.mxu0 0.0
  %1816 = vmatpush2.msra.mxu0 0.0
  %1817 = vmatprep.subr.mxu0 0.0
  %1818 = vmatpush2.msra.mxu0 0.0
  %1819 = vmatprep.subr.mxu0 0.0
  %1820 = vmatpush2.msra.mxu0 0.0
  %1821 = vmatprep.subr.mxu0 0.0
  %1822 = vmatpush2.msra.mxu0 0.0
  %1823 = vmatprep.subr.mxu0 0.0
  %1824 = vmatpush2.msra.mxu0 0.0
  %1825 = vmatprep.subr.mxu0 0.0
  %1826 = vmatpush2.msra.mxu0 0.0
  %1827 = vmatprep.subr.mxu0 0.0
  %1828 = vmatpush2.msra.mxu0 0.0
  %1829 = vmatprep.subr.mxu0 0.0
  %1830 = vmatpush2.msra.mxu0 0.0
  %1831 = vmatprep.subr.mxu0 0.0
  %1832 = vmatpush2.msra.mxu0 0.0
  %1833 = vmatprep.subr.mxu0 0.0
  %1834 = vmatpush2.msra.mxu0 0.0
  %1835 = vmatprep.subr.mxu0 0.0
  %1836 = vmatpush2.msra.mxu0 0.0
  %1837 = vmatprep.subr.mxu0 0.0
  %1838 = vmatpush2.msra.mxu0 0.0
  %1839 = vmatprep.subr.mxu0 0.0
  %1840 = vmatpush2.msra.mxu0 0.0
  %1841 = vmatprep.subr.mxu0 0.0
  %1842 = vmatpush2.msra.mxu0 0.0
  %1843 = vmatprep.subr.mxu0 0.0
  %1844 = vmatpush2.msra.mxu0 0.0
  %1845 = vmatprep.mubr.f32.mxu0 0.0
  %1846 = vmatmul.mubr.f32.gmra.mxu0 %v1773
  %v1847 = vpop.f32.mrf.mxu0
  %v1848 = vadd.f32 0.0, %v1847
  %v1849 = vpop.f32.mrf.mxu0
  %1850 = vmatprep.mubr.f32.mxu0 0.0
  %1851 = vmatmul.mubr.f32.gmra.mxu0 %v1776
  %v1852 = vpop.f32.mrf.mxu0
  %v1853 = vadd.f32 0.0, %v1852
  %v1854 = vpop.f32.mrf.mxu0
  %1855 = vmatprep.mubr.f32.mxu0 0.0
  %1856 = vmatmul.mubr.f32.gmra.mxu0 %v1779
  %v1857 = vpop.f32.mrf.mxu0
  %v1858 = vadd.f32 0.0, %v1857
  %v1859 = vpop.f32.mrf.mxu0
  %1860 = vdwg.mxu0
  %s1861 = scalar_lea.vmem %s4, 64
  %v1862 = vld [vmem:[%s1861] sm:$0xff]
  %v1864 = vsel %vm467, %v1848, 0
  %v1867 = vsel %vm467, %v1853, 0
  %v1870 = vsel %vm467, %v1858, 0
  %1872 = vmatprep.subr.mxu0 0.0
  %1873 = vmatpush1.msra.mxu0 0.0
  %1874 = vmatprep.subr.mxu0 0.0
  %1875 = vmatpush1.msra.mxu0 0.0
  %1876 = vmatprep.subr.mxu0 0.0
  %1877 = vmatpush1.msra.mxu0 0.0
  %1878 = vmatprep.subr.mxu0 0.0
  %1879 = vmatpush1.msra.mxu0 0.0
  %1880 = vmatprep.subr.mxu0 0.0
  %1881 = vmatpush1.msra.mxu0 0.0
  %1882 = vmatprep.subr.mxu0 0.0
  %1883 = vmatpush1.msra.mxu0 0.0
  %1884 = vmatprep.subr.mxu0 0.0
  %1885 = vmatpush1.msra.mxu0 0.0
  %1886 = vmatprep.subr.mxu0 0.0
  %1887 = vmatpush1.msra.mxu0 0.0
  %1888 = vmatprep.subr.mxu0 0.0
  %1889 = vmatpush1.msra.mxu0 0.0
  %1890 = vmatprep.subr.mxu0 0.0
  %1891 = vmatpush1.msra.mxu0 0.0
  %1892 = vmatprep.subr.mxu0 0.0
  %1893 = vmatpush1.msra.mxu0 0.0
  %1894 = vmatprep.subr.mxu0 0.0
  %1895 = vmatpush1.msra.mxu0 0.0
  %1896 = vmatprep.subr.mxu0 0.0
  %1897 = vmatpush1.msra.mxu0 0.0
  %1898 = vmatprep.subr.mxu0 0.0
  %1899 = vmatpush1.msra.mxu0 0.0
  %1900 = vmatprep.subr.mxu0 0.0
  %1901 = vmatpush1.msra.mxu0 0.0
  %1902 = vmatprep.subr.mxu0 0.0
  %1903 = vmatpush1.msra.mxu0 %v1862
  %1904 = vmatprep.subr.mxu0 0.0
  %1905 = vmatpush2.msra.mxu0 0.0
  %1906 = vmatprep.subr.mxu0 0.0
  %1907 = vmatpush2.msra.mxu0 0.0
  %1908 = vmatprep.subr.mxu0 0.0
  %1909 = vmatpush2.msra.mxu0 0.0
  %1910 = vmatprep.subr.mxu0 0.0
  %1911 = vmatpush2.msra.mxu0 0.0
  %1912 = vmatprep.subr.mxu0 0.0
  %1913 = vmatpush2.msra.mxu0 0.0
  %1914 = vmatprep.subr.mxu0 0.0
  %1915 = vmatpush2.msra.mxu0 0.0
  %1916 = vmatprep.subr.mxu0 0.0
  %1917 = vmatpush2.msra.mxu0 0.0
  %1918 = vmatprep.subr.mxu0 0.0
  %1919 = vmatpush2.msra.mxu0 0.0
  %1920 = vmatprep.subr.mxu0 0.0
  %1921 = vmatpush2.msra.mxu0 0.0
  %1922 = vmatprep.subr.mxu0 0.0
  %1923 = vmatpush2.msra.mxu0 0.0
  %1924 = vmatprep.subr.mxu0 0.0
  %1925 = vmatpush2.msra.mxu0 0.0
  %1926 = vmatprep.subr.mxu0 0.0
  %1927 = vmatpush2.msra.mxu0 0.0
  %1928 = vmatprep.subr.mxu0 0.0
  %1929 = vmatpush2.msra.mxu0 0.0
  %1930 = vmatprep.subr.mxu0 0.0
  %1931 = vmatpush2.msra.mxu0 0.0
  %1932 = vmatprep.subr.mxu0 0.0
  %1933 = vmatpush2.msra.mxu0 0.0
  %1934 = vmatprep.subr.mxu0 0.0
  %1935 = vmatpush2.msra.mxu0 0.0
  %1936 = vmatprep.mubr.f32.mxu0 0.0
  %1937 = vmatmul.mubr.f32.gmra.mxu0 %v1864
  %v1938 = vpop.f32.mrf.mxu0
  %v1939 = vadd.f32 0.0, %v1938
  %v1940 = vpop.f32.mrf.mxu0
  %1941 = vmatprep.mubr.f32.mxu0 0.0
  %1942 = vmatmul.mubr.f32.gmra.mxu0 %v1867
  %v1943 = vpop.f32.mrf.mxu0
  %v1944 = vadd.f32 0.0, %v1943
  %v1945 = vpop.f32.mrf.mxu0
  %1946 = vmatprep.mubr.f32.mxu0 0.0
  %1947 = vmatmul.mubr.f32.gmra.mxu0 %v1870
  %v1948 = vpop.f32.mrf.mxu0
  %v1949 = vadd.f32 0.0, %v1948
  %v1950 = vpop.f32.mrf.mxu0
  %1951 = vdwg.mxu0
  %v1952 = vadd.f32 %v1765, %v1939
  %v1953 = vadd.f32 %v1766, %v1944
  %v1954 = vadd.f32 %v1767, %v1949
  %v1955 = vld [vmem:[%s5] sm:$0x1]
  %v1957 = vlaneseq
  %v1958 = vshrl.u32 %v1957, 7
  %v1959 = vsub.s32 0, %v1958
  %v1960 = vrot.slane %v1955, %v1959
  %v1962 = vadd.f32 %v1952, %v1960
  %v1963 = vadd.f32 %v1953, %v1960
  %v1964 = vadd.f32 %v1954, %v1960
  %v1965 = vmax.f32 %v1962, 0.0
  %v1966 = vmax.f32 %v1963, 0.0
  %v1967 = vmax.f32 %v1964, 0.0
  %v1968 = vld [vmem:[%s6] sm:$0xff]
  %vm1969 = vcmask 195584
  %v1971 = vsel %vm1969, %v1968, 0
  %1973 = vmatprep.subr.mxu0 0.0
  %1974 = vmatpush1.msra.mxu0 0.0
  %1975 = vmatprep.subr.mxu0 0.0
  %1976 = vmatpush1.msra.mxu0 0.0
  %1977 = vmatprep.subr.mxu0 0.0
  %1978 = vmatpush1.msra.mxu0 0.0
  %1979 = vmatprep.subr.mxu0 0.0
  %1980 = vmatpush1.msra.mxu0 0.0
  %1981 = vmatprep.subr.mxu0 0.0
  %1982 = vmatpush1.msra.mxu0 0.0
  %1983 = vmatprep.subr.mxu0 0.0
  %1984 = vmatpush1.msra.mxu0 0.0
  %1985 = vmatprep.subr.mxu0 0.0
  %1986 = vmatpush1.msra.mxu0 0.0
  %1987 = vmatprep.subr.mxu0 0.0
  %1988 = vmatpush1.msra.mxu0 0.0
  %1989 = vmatprep.subr.mxu0 0.0
  %1990 = vmatpush1.msra.mxu0 0.0
  %1991 = vmatprep.subr.mxu0 0.0
  %1992 = vmatpush1.msra.mxu0 0.0
  %1993 = vmatprep.subr.mxu0 0.0
  %1994 = vmatpush1.msra.mxu0 0.0
  %1995 = vmatprep.subr.mxu0 0.0
  %1996 = vmatpush1.msra.mxu0 0.0
  %1997 = vmatprep.subr.mxu0 0.0
  %1998 = vmatpush1.msra.mxu0 0.0
  %1999 = vmatprep.subr.mxu0 0.0
  %2000 = vmatpush1.msra.mxu0 %v1967
  %2001 = vmatprep.subr.mxu0 0.0
  %2002 = vmatpush1.msra.mxu0 %v1966
  %2003 = vmatprep.subr.mxu0 0.0
  %2004 = vmatpush1.msra.mxu0 %v1965
  %2005 = vmatprep.subr.mxu0 0.0
  %2006 = vmatpush2.msra.mxu0 0.0
  %2007 = vmatprep.subr.mxu0 0.0
  %2008 = vmatpush2.msra.mxu0 0.0
  %2009 = vmatprep.subr.mxu0 0.0
  %2010 = vmatpush2.msra.mxu0 0.0
  %2011 = vmatprep.subr.mxu0 0.0
  %2012 = vmatpush2.msra.mxu0 0.0
  %2013 = vmatprep.subr.mxu0 0.0
  %2014 = vmatpush2.msra.mxu0 0.0
  %2015 = vmatprep.subr.mxu0 0.0
  %2016 = vmatpush2.msra.mxu0 0.0
  %2017 = vmatprep.subr.mxu0 0.0
  %2018 = vmatpush2.msra.mxu0 0.0
  %2019 = vmatprep.subr.mxu0 0.0
  %2020 = vmatpush2.msra.mxu0 0.0
  %2021 = vmatprep.subr.mxu0 0.0
  %2022 = vmatpush2.msra.mxu0 0.0
  %2023 = vmatprep.subr.mxu0 0.0
  %2024 = vmatpush2.msra.mxu0 0.0
  %2025 = vmatprep.subr.mxu0 0.0
  %2026 = vmatpush2.msra.mxu0 0.0
  %2027 = vmatprep.subr.mxu0 0.0
  %2028 = vmatpush2.msra.mxu0 0.0
  %2029 = vmatprep.subr.mxu0 0.0
  %2030 = vmatpush2.msra.mxu0 0.0
  %2031 = vmatprep.subr.mxu0 0.0
  %2032 = vmatpush2.msra.mxu0 0.0
  %2033 = vmatprep.subr.mxu0 0.0
  %2034 = vmatpush2.msra.mxu0 0.0
  %2035 = vmatprep.subr.mxu0 0.0
  %2036 = vmatpush2.msra.mxu0 0.0
  %2037 = vmatprep.mubr.f32.mxu0 0.0
  %2038 = vmatmul.mubr.f32.gmra.mxu0 %v1971
  %v2039 = vpop.f32.mrf.mxu0
  %v2040 = vadd.f32 0.0, %v2039
  %v2041 = vpop.f32.mrf.mxu0
  %2042 = vdwg.mxu0
  %v2043 = vld [vmem:[%s7] sm:$0xff]
  %v2044 = vld [vmem:[%s7 + $0x8] sm:$0xff]
  %s2045 = scalar_lea.vmem %s6, 8
  %v2046 = vld [vmem:[%s2045] sm:$0xff]
  %v2048 = vsel %vm1969, %v2046, 0
  %2050 = vmatprep.subr.mxu0 0.0
  %2051 = vmatpush1.msra.mxu0 0.0
  %2052 = vmatprep.subr.mxu0 0.0
  %2053 = vmatpush1.msra.mxu0 0.0
  %2054 = vmatprep.subr.mxu0 0.0
  %2055 = vmatpush1.msra.mxu0 0.0
  %2056 = vmatprep.subr.mxu0 0.0
  %2057 = vmatpush1.msra.mxu0 0.0
  %2058 = vmatprep.subr.mxu0 0.0
  %2059 = vmatpush1.msra.mxu0 0.0
  %2060 = vmatprep.subr.mxu0 0.0
  %2061 = vmatpush1.msra.mxu0 0.0
  %2062 = vmatprep.subr.mxu0 0.0
  %2063 = vmatpush1.msra.mxu0 0.0
  %2064 = vmatprep.subr.mxu0 0.0
  %2065 = vmatpush1.msra.mxu0 0.0
  %2066 = vmatprep.subr.mxu0 0.0
  %2067 = vmatpush1.msra.mxu0 0.0
  %2068 = vmatprep.subr.mxu0 0.0
  %2069 = vmatpush1.msra.mxu0 0.0
  %2070 = vmatprep.subr.mxu0 0.0
  %2071 = vmatpush1.msra.mxu0 0.0
  %2072 = vmatprep.subr.mxu0 0.0
  %2073 = vmatpush1.msra.mxu0 0.0
  %2074 = vmatprep.subr.mxu0 0.0
  %2075 = vmatpush1.msra.mxu0 0.0
  %2076 = vmatprep.subr.mxu0 0.0
  %2077 = vmatpush1.msra.mxu0 %v1967
  %2078 = vmatprep.subr.mxu0 0.0
  %2079 = vmatpush1.msra.mxu0 %v1966
  %2080 = vmatprep.subr.mxu0 0.0
  %2081 = vmatpush1.msra.mxu0 %v1965
  %2082 = vmatprep.subr.mxu0 0.0
  %2083 = vmatpush2.msra.mxu0 0.0
  %2084 = vmatprep.subr.mxu0 0.0
  %2085 = vmatpush2.msra.mxu0 0.0
  %2086 = vmatprep.subr.mxu0 0.0
  %2087 = vmatpush2.msra.mxu0 0.0
  %2088 = vmatprep.subr.mxu0 0.0
  %2089 = vmatpush2.msra.mxu0 0.0
  %2090 = vmatprep.subr.mxu0 0.0
  %2091 = vmatpush2.msra.mxu0 0.0
  %2092 = vmatprep.subr.mxu0 0.0
  %2093 = vmatpush2.msra.mxu0 0.0
  %2094 = vmatprep.subr.mxu0 0.0
  %2095 = vmatpush2.msra.mxu0 0.0
  %2096 = vmatprep.subr.mxu0 0.0
  %2097 = vmatpush2.msra.mxu0 0.0
  %2098 = vmatprep.subr.mxu0 0.0
  %2099 = vmatpush2.msra.mxu0 0.0
  %2100 = vmatprep.subr.mxu0 0.0
  %2101 = vmatpush2.msra.mxu0 0.0
  %2102 = vmatprep.subr.mxu0 0.0
  %2103 = vmatpush2.msra.mxu0 0.0
  %2104 = vmatprep.subr.mxu0 0.0
  %2105 = vmatpush2.msra.mxu0 0.0
  %2106 = vmatprep.subr.mxu0 0.0
  %2107 = vmatpush2.msra.mxu0 0.0
  %2108 = vmatprep.subr.mxu0 0.0
  %2109 = vmatpush2.msra.mxu0 0.0
  %2110 = vmatprep.subr.mxu0 0.0
  %2111 = vmatpush2.msra.mxu0 0.0
  %2112 = vmatprep.subr.mxu0 0.0
  %2113 = vmatpush2.msra.mxu0 0.0
  %2114 = vmatprep.mubr.f32.mxu0 0.0
  %2115 = vmatmul.mubr.f32.gmra.mxu0 %v2048
  %v2116 = vpop.f32.mrf.mxu0
  %v2117 = vadd.f32 0.0, %v2116
  %v2118 = vpop.f32.mrf.mxu0
  %2119 = vdwg.mxu0
  %s2120 = scalar_lea.vmem %s7, 16
  %v2121 = vld [vmem:[%s2120] sm:$0xff]
  %v2122 = vld [vmem:[%s2120 + $0x8] sm:$0xff]
  %v2124 = vsel %vm95, %v2117, 0
  %2126 = vmatprep.subr.mxu0 0.0
  %2127 = vmatpush1.msra.mxu0 0.0
  %2128 = vmatprep.subr.mxu0 0.0
  %2129 = vmatpush1.msra.mxu0 0.0
  %2130 = vmatprep.subr.mxu0 0.0
  %2131 = vmatpush1.msra.mxu0 0.0
  %2132 = vmatprep.subr.mxu0 0.0
  %2133 = vmatpush1.msra.mxu0 0.0
  %2134 = vmatprep.subr.mxu0 0.0
  %2135 = vmatpush1.msra.mxu0 0.0
  %2136 = vmatprep.subr.mxu0 0.0
  %2137 = vmatpush1.msra.mxu0 0.0
  %2138 = vmatprep.subr.mxu0 0.0
  %2139 = vmatpush1.msra.mxu0 0.0
  %2140 = vmatprep.subr.mxu0 0.0
  %2141 = vmatpush1.msra.mxu0 0.0
  %2142 = vmatprep.subr.mxu0 0.0
  %2143 = vmatpush1.msra.mxu0 0.0
  %2144 = vmatprep.subr.mxu0 0.0
  %2145 = vmatpush1.msra.mxu0 0.0
  %2146 = vmatprep.subr.mxu0 0.0
  %2147 = vmatpush1.msra.mxu0 0.0
  %2148 = vmatprep.subr.mxu0 0.0
  %2149 = vmatpush1.msra.mxu0 0.0
  %2150 = vmatprep.subr.mxu0 0.0
  %2151 = vmatpush1.msra.mxu0 0.0
  %2152 = vmatprep.subr.mxu0 0.0
  %2153 = vmatpush1.msra.mxu0 0.0
  %2154 = vmatprep.subr.mxu0 0.0
  %2155 = vmatpush1.msra.mxu0 %v2122
  %2156 = vmatprep.subr.mxu0 0.0
  %2157 = vmatpush1.msra.mxu0 %v2121
  %2158 = vmatprep.subr.mxu0 0.0
  %2159 = vmatpush2.msra.mxu0 0.0
  %2160 = vmatprep.subr.mxu0 0.0
  %2161 = vmatpush2.msra.mxu0 0.0
  %2162 = vmatprep.subr.mxu0 0.0
  %2163 = vmatpush2.msra.mxu0 0.0
  %2164 = vmatprep.subr.mxu0 0.0
  %2165 = vmatpush2.msra.mxu0 0.0
  %2166 = vmatprep.subr.mxu0 0.0
  %2167 = vmatpush2.msra.mxu0 0.0
  %2168 = vmatprep.subr.mxu0 0.0
  %2169 = vmatpush2.msra.mxu0 0.0
  %2170 = vmatprep.subr.mxu0 0.0
  %2171 = vmatpush2.msra.mxu0 0.0
  %2172 = vmatprep.subr.mxu0 0.0
  %2173 = vmatpush2.msra.mxu0 0.0
  %2174 = vmatprep.subr.mxu0 0.0
  %2175 = vmatpush2.msra.mxu0 0.0
  %2176 = vmatprep.subr.mxu0 0.0
  %2177 = vmatpush2.msra.mxu0 0.0
  %2178 = vmatprep.subr.mxu0 0.0
  %2179 = vmatpush2.msra.mxu0 0.0
  %2180 = vmatprep.subr.mxu0 0.0
  %2181 = vmatpush2.msra.mxu0 0.0
  %2182 = vmatprep.subr.mxu0 0.0
  %2183 = vmatpush2.msra.mxu0 0.0
  %2184 = vmatprep.subr.mxu0 0.0
  %2185 = vmatpush2.msra.mxu0 0.0
  %2186 = vmatprep.subr.mxu0 0.0
  %2187 = vmatpush2.msra.mxu0 0.0
  %2188 = vmatprep.subr.mxu0 0.0
  %2189 = vmatpush2.msra.mxu0 0.0
  %2190 = vmatprep.mubr.f32.mxu0 0.0
  %2191 = vmatmul.mubr.f32.gmra.mxu0 %v2124
  %v2192 = vpop.f32.mrf.mxu0
  %v2193 = vadd.f32 0.0, %v2192
  %v2194 = vpop.f32.mrf.mxu0
  %2195 = vdwg.mxu0
  %v2197 = vsel %vm95, %v2040, 0
  %2199 = vmatprep.subr.mxu0 0.0
  %2200 = vmatpush1.msra.mxu0 0.0
  %2201 = vmatprep.subr.mxu0 0.0
  %2202 = vmatpush1.msra.mxu0 0.0
  %2203 = vmatprep.subr.mxu0 0.0
  %2204 = vmatpush1.msra.mxu0 0.0
  %2205 = vmatprep.subr.mxu0 0.0
  %2206 = vmatpush1.msra.mxu0 0.0
  %2207 = vmatprep.subr.mxu0 0.0
  %2208 = vmatpush1.msra.mxu0 0.0
  %2209 = vmatprep.subr.mxu0 0.0
  %2210 = vmatpush1.msra.mxu0 0.0
  %2211 = vmatprep.subr.mxu0 0.0
  %2212 = vmatpush1.msra.mxu0 0.0
  %2213 = vmatprep.subr.mxu0 0.0
  %2214 = vmatpush1.msra.mxu0 0.0
  %2215 = vmatprep.subr.mxu0 0.0
  %2216 = vmatpush1.msra.mxu0 0.0
  %2217 = vmatprep.subr.mxu0 0.0
  %2218 = vmatpush1.msra.mxu0 0.0
  %2219 = vmatprep.subr.mxu0 0.0
  %2220 = vmatpush1.msra.mxu0 0.0
  %2221 = vmatprep.subr.mxu0 0.0
  %2222 = vmatpush1.msra.mxu0 0.0
  %2223 = vmatprep.subr.mxu0 0.0
  %2224 = vmatpush1.msra.mxu0 0.0
  %2225 = vmatprep.subr.mxu0 0.0
  %2226 = vmatpush1.msra.mxu0 0.0
  %2227 = vmatprep.subr.mxu0 0.0
  %2228 = vmatpush1.msra.mxu0 %v2044
  %2229 = vmatprep.subr.mxu0 0.0
  %2230 = vmatpush1.msra.mxu0 %v2043
  %2231 = vmatprep.subr.mxu0 0.0
  %2232 = vmatpush2.msra.mxu0 0.0
  %2233 = vmatprep.subr.mxu0 0.0
  %2234 = vmatpush2.msra.mxu0 0.0
  %2235 = vmatprep.subr.mxu0 0.0
  %2236 = vmatpush2.msra.mxu0 0.0
  %2237 = vmatprep.subr.mxu0 0.0
  %2238 = vmatpush2.msra.mxu0 0.0
  %2239 = vmatprep.subr.mxu0 0.0
  %2240 = vmatpush2.msra.mxu0 0.0
  %2241 = vmatprep.subr.mxu0 0.0
  %2242 = vmatpush2.msra.mxu0 0.0
  %2243 = vmatprep.subr.mxu0 0.0
  %2244 = vmatpush2.msra.mxu0 0.0
  %2245 = vmatprep.subr.mxu0 0.0
  %2246 = vmatpush2.msra.mxu0 0.0
  %2247 = vmatprep.subr.mxu0 0.0
  %2248 = vmatpush2.msra.mxu0 0.0
  %2249 = vmatprep.subr.mxu0 0.0
  %2250 = vmatpush2.msra.mxu0 0.0
  %2251 = vmatprep.subr.mxu0 0.0
  %2252 = vmatpush2.msra.mxu0 0.0
  %2253 = vmatprep.subr.mxu0 0.0
  %2254 = vmatpush2.msra.mxu0 0.0
  %2255 = vmatprep.subr.mxu0 0.0
  %2256 = vmatpush2.msra.mxu0 0.0
  %2257 = vmatprep.subr.mxu0 0.0
  %2258 = vmatpush2.msra.mxu0 0.0
  %2259 = vmatprep.subr.mxu0 0.0
  %2260 = vmatpush2.msra.mxu0 0.0
  %2261 = vmatprep.subr.mxu0 0.0
  %2262 = vmatpush2.msra.mxu0 0.0
  %2263 = vmatprep.mubr.f32.mxu0 0.0
  %2264 = vmatmul.mubr.f32.gmra.mxu0 %v2197
  %v2265 = vpop.f32.mrf.mxu0
  %v2266 = vadd.f32 %v2193, %v2265
  %v2267 = vpop.f32.mrf.mxu0
  %2268 = vdwg.mxu0
  %s2269 = scalar_lea.vmem %s6, 16
  %v2270 = vld [vmem:[%s2269] sm:$0xff]
  %v2272 = vsel %vm1969, %v2270, 0
  %2274 = vmatprep.subr.mxu0 0.0
  %2275 = vmatpush1.msra.mxu0 0.0
  %2276 = vmatprep.subr.mxu0 0.0
  %2277 = vmatpush1.msra.mxu0 0.0
  %2278 = vmatprep.subr.mxu0 0.0
  %2279 = vmatpush1.msra.mxu0 0.0
  %2280 = vmatprep.subr.mxu0 0.0
  %2281 = vmatpush1.msra.mxu0 0.0
  %2282 = vmatprep.subr.mxu0 0.0
  %2283 = vmatpush1.msra.mxu0 0.0
  %2284 = vmatprep.subr.mxu0 0.0
  %2285 = vmatpush1.msra.mxu0 0.0
  %2286 = vmatprep.subr.mxu0 0.0
  %2287 = vmatpush1.msra.mxu0 0.0
  %2288 = vmatprep.subr.mxu0 0.0
  %2289 = vmatpush1.msra.mxu0 0.0
  %2290 = vmatprep.subr.mxu0 0.0
  %2291 = vmatpush1.msra.mxu0 0.0
  %2292 = vmatprep.subr.mxu0 0.0
  %2293 = vmatpush1.msra.mxu0 0.0
  %2294 = vmatprep.subr.mxu0 0.0
  %2295 = vmatpush1.msra.mxu0 0.0
  %2296 = vmatprep.subr.mxu0 0.0
  %2297 = vmatpush1.msra.mxu0 0.0
  %2298 = vmatprep.subr.mxu0 0.0
  %2299 = vmatpush1.msra.mxu0 0.0
  %2300 = vmatprep.subr.mxu0 0.0
  %2301 = vmatpush1.msra.mxu0 %v1967
  %2302 = vmatprep.subr.mxu0 0.0
  %2303 = vmatpush1.msra.mxu0 %v1966
  %2304 = vmatprep.subr.mxu0 0.0
  %2305 = vmatpush1.msra.mxu0 %v1965
  %2306 = vmatprep.subr.mxu0 0.0
  %2307 = vmatpush2.msra.mxu0 0.0
  %2308 = vmatprep.subr.mxu0 0.0
  %2309 = vmatpush2.msra.mxu0 0.0
  %2310 = vmatprep.subr.mxu0 0.0
  %2311 = vmatpush2.msra.mxu0 0.0
  %2312 = vmatprep.subr.mxu0 0.0
  %2313 = vmatpush2.msra.mxu0 0.0
  %2314 = vmatprep.subr.mxu0 0.0
  %2315 = vmatpush2.msra.mxu0 0.0
  %2316 = vmatprep.subr.mxu0 0.0
  %2317 = vmatpush2.msra.mxu0 0.0
  %2318 = vmatprep.subr.mxu0 0.0
  %2319 = vmatpush2.msra.mxu0 0.0
  %2320 = vmatprep.subr.mxu0 0.0
  %2321 = vmatpush2.msra.mxu0 0.0
  %2322 = vmatprep.subr.mxu0 0.0
  %2323 = vmatpush2.msra.mxu0 0.0
  %2324 = vmatprep.subr.mxu0 0.0
  %2325 = vmatpush2.msra.mxu0 0.0
  %2326 = vmatprep.subr.mxu0 0.0
  %2327 = vmatpush2.msra.mxu0 0.0
  %2328 = vmatprep.subr.mxu0 0.0
  %2329 = vmatpush2.msra.mxu0 0.0
  %2330 = vmatprep.subr.mxu0 0.0
  %2331 = vmatpush2.msra.mxu0 0.0
  %2332 = vmatprep.subr.mxu0 0.0
  %2333 = vmatpush2.msra.mxu0 0.0
  %2334 = vmatprep.subr.mxu0 0.0
  %2335 = vmatpush2.msra.mxu0 0.0
  %2336 = vmatprep.subr.mxu0 0.0
  %2337 = vmatpush2.msra.mxu0 0.0
  %2338 = vmatprep.mubr.f32.mxu0 0.0
  %2339 = vmatmul.mubr.f32.gmra.mxu0 %v2272
  %v2340 = vpop.f32.mrf.mxu0
  %v2341 = vadd.f32 0.0, %v2340
  %v2342 = vpop.f32.mrf.mxu0
  %2343 = vdwg.mxu0
  %s2344 = scalar_lea.vmem %s7, 32
  %v2345 = vld [vmem:[%s2344] sm:$0xff]
  %v2346 = vld [vmem:[%s2344 + $0x8] sm:$0xff]
  %v2348 = vsel %vm95, %v2341, 0
  %2350 = vmatprep.subr.mxu0 0.0
  %2351 = vmatpush1.msra.mxu0 0.0
  %2352 = vmatprep.subr.mxu0 0.0
  %2353 = vmatpush1.msra.mxu0 0.0
  %2354 = vmatprep.subr.mxu0 0.0
  %2355 = vmatpush1.msra.mxu0 0.0
  %2356 = vmatprep.subr.mxu0 0.0
  %2357 = vmatpush1.msra.mxu0 0.0
  %2358 = vmatprep.subr.mxu0 0.0
  %2359 = vmatpush1.msra.mxu0 0.0
  %2360 = vmatprep.subr.mxu0 0.0
  %2361 = vmatpush1.msra.mxu0 0.0
  %2362 = vmatprep.subr.mxu0 0.0
  %2363 = vmatpush1.msra.mxu0 0.0
  %2364 = vmatprep.subr.mxu0 0.0
  %2365 = vmatpush1.msra.mxu0 0.0
  %2366 = vmatprep.subr.mxu0 0.0
  %2367 = vmatpush1.msra.mxu0 0.0
  %2368 = vmatprep.subr.mxu0 0.0
  %2369 = vmatpush1.msra.mxu0 0.0
  %2370 = vmatprep.subr.mxu0 0.0
  %2371 = vmatpush1.msra.mxu0 0.0
  %2372 = vmatprep.subr.mxu0 0.0
  %2373 = vmatpush1.msra.mxu0 0.0
  %2374 = vmatprep.subr.mxu0 0.0
  %2375 = vmatpush1.msra.mxu0 0.0
  %2376 = vmatprep.subr.mxu0 0.0
  %2377 = vmatpush1.msra.mxu0 0.0
  %2378 = vmatprep.subr.mxu0 0.0
  %2379 = vmatpush1.msra.mxu0 %v2346
  %2380 = vmatprep.subr.mxu0 0.0
  %2381 = vmatpush1.msra.mxu0 %v2345
  %2382 = vmatprep.subr.mxu0 0.0
  %2383 = vmatpush2.msra.mxu0 0.0
  %2384 = vmatprep.subr.mxu0 0.0
  %2385 = vmatpush2.msra.mxu0 0.0
  %2386 = vmatprep.subr.mxu0 0.0
  %2387 = vmatpush2.msra.mxu0 0.0
  %2388 = vmatprep.subr.mxu0 0.0
  %2389 = vmatpush2.msra.mxu0 0.0
  %2390 = vmatprep.subr.mxu0 0.0
  %2391 = vmatpush2.msra.mxu0 0.0
  %2392 = vmatprep.subr.mxu0 0.0
  %2393 = vmatpush2.msra.mxu0 0.0
  %2394 = vmatprep.subr.mxu0 0.0
  %2395 = vmatpush2.msra.mxu0 0.0
  %2396 = vmatprep.subr.mxu0 0.0
  %2397 = vmatpush2.msra.mxu0 0.0
  %2398 = vmatprep.subr.mxu0 0.0
  %2399 = vmatpush2.msra.mxu0 0.0
  %2400 = vmatprep.subr.mxu0 0.0
  %2401 = vmatpush2.msra.mxu0 0.0
  %2402 = vmatprep.subr.mxu0 0.0
  %2403 = vmatpush2.msra.mxu0 0.0
  %2404 = vmatprep.subr.mxu0 0.0
  %2405 = vmatpush2.msra.mxu0 0.0
  %2406 = vmatprep.subr.mxu0 0.0
  %2407 = vmatpush2.msra.mxu0 0.0
  %2408 = vmatprep.subr.mxu0 0.0
  %2409 = vmatpush2.msra.mxu0 0.0
  %2410 = vmatprep.subr.mxu0 0.0
  %2411 = vmatpush2.msra.mxu0 0.0
  %2412 = vmatprep.subr.mxu0 0.0
  %2413 = vmatpush2.msra.mxu0 0.0
  %2414 = vmatprep.mubr.f32.mxu0 0.0
  %2415 = vmatmul.mubr.f32.gmra.mxu0 %v2348
  %v2416 = vpop.f32.mrf.mxu0
  %v2417 = vadd.f32 0.0, %v2416
  %v2418 = vpop.f32.mrf.mxu0
  %2419 = vdwg.mxu0
  %v2420 = vadd.f32 %v2266, %v2417
  %s2421 = scalar_lea.vmem %s6, 24
  %v2422 = vld [vmem:[%s2421] sm:$0xff]
  %v2424 = vsel %vm1969, %v2422, 0
  %2426 = vmatprep.subr.mxu0 0.0
  %2427 = vmatpush1.msra.mxu0 0.0
  %2428 = vmatprep.subr.mxu0 0.0
  %2429 = vmatpush1.msra.mxu0 0.0
  %2430 = vmatprep.subr.mxu0 0.0
  %2431 = vmatpush1.msra.mxu0 0.0
  %2432 = vmatprep.subr.mxu0 0.0
  %2433 = vmatpush1.msra.mxu0 0.0
  %2434 = vmatprep.subr.mxu0 0.0
  %2435 = vmatpush1.msra.mxu0 0.0
  %2436 = vmatprep.subr.mxu0 0.0
  %2437 = vmatpush1.msra.mxu0 0.0
  %2438 = vmatprep.subr.mxu0 0.0
  %2439 = vmatpush1.msra.mxu0 0.0
  %2440 = vmatprep.subr.mxu0 0.0
  %2441 = vmatpush1.msra.mxu0 0.0
  %2442 = vmatprep.subr.mxu0 0.0
  %2443 = vmatpush1.msra.mxu0 0.0
  %2444 = vmatprep.subr.mxu0 0.0
  %2445 = vmatpush1.msra.mxu0 0.0
  %2446 = vmatprep.subr.mxu0 0.0
  %2447 = vmatpush1.msra.mxu0 0.0
  %2448 = vmatprep.subr.mxu0 0.0
  %2449 = vmatpush1.msra.mxu0 0.0
  %2450 = vmatprep.subr.mxu0 0.0
  %2451 = vmatpush1.msra.mxu0 0.0
  %2452 = vmatprep.subr.mxu0 0.0
  %2453 = vmatpush1.msra.mxu0 %v1967
  %2454 = vmatprep.subr.mxu0 0.0
  %2455 = vmatpush1.msra.mxu0 %v1966
  %2456 = vmatprep.subr.mxu0 0.0
  %2457 = vmatpush1.msra.mxu0 %v1965
  %2458 = vmatprep.subr.mxu0 0.0
  %2459 = vmatpush2.msra.mxu0 0.0
  %2460 = vmatprep.subr.mxu0 0.0
  %2461 = vmatpush2.msra.mxu0 0.0
  %2462 = vmatprep.subr.mxu0 0.0
  %2463 = vmatpush2.msra.mxu0 0.0
  %2464 = vmatprep.subr.mxu0 0.0
  %2465 = vmatpush2.msra.mxu0 0.0
  %2466 = vmatprep.subr.mxu0 0.0
  %2467 = vmatpush2.msra.mxu0 0.0
  %2468 = vmatprep.subr.mxu0 0.0
  %2469 = vmatpush2.msra.mxu0 0.0
  %2470 = vmatprep.subr.mxu0 0.0
  %2471 = vmatpush2.msra.mxu0 0.0
  %2472 = vmatprep.subr.mxu0 0.0
  %2473 = vmatpush2.msra.mxu0 0.0
  %2474 = vmatprep.subr.mxu0 0.0
  %2475 = vmatpush2.msra.mxu0 0.0
  %2476 = vmatprep.subr.mxu0 0.0
  %2477 = vmatpush2.msra.mxu0 0.0
  %2478 = vmatprep.subr.mxu0 0.0
  %2479 = vmatpush2.msra.mxu0 0.0
  %2480 = vmatprep.subr.mxu0 0.0
  %2481 = vmatpush2.msra.mxu0 0.0
  %2482 = vmatprep.subr.mxu0 0.0
  %2483 = vmatpush2.msra.mxu0 0.0
  %2484 = vmatprep.subr.mxu0 0.0
  %2485 = vmatpush2.msra.mxu0 0.0
  %2486 = vmatprep.subr.mxu0 0.0
  %2487 = vmatpush2.msra.mxu0 0.0
  %2488 = vmatprep.subr.mxu0 0.0
  %2489 = vmatpush2.msra.mxu0 0.0
  %2490 = vmatprep.mubr.f32.mxu0 0.0
  %2491 = vmatmul.mubr.f32.gmra.mxu0 %v2424
  %v2492 = vpop.f32.mrf.mxu0
  %v2493 = vadd.f32 0.0, %v2492
  %v2494 = vpop.f32.mrf.mxu0
  %2495 = vdwg.mxu0
  %s2496 = scalar_lea.vmem %s7, 48
  %v2497 = vld [vmem:[%s2496] sm:$0xff]
  %v2498 = vld [vmem:[%s2496 + $0x8] sm:$0xff]
  %v2500 = vsel %vm95, %v2493, 0
  %2502 = vmatprep.subr.mxu0 0.0
  %2503 = vmatpush1.msra.mxu0 0.0
  %2504 = vmatprep.subr.mxu0 0.0
  %2505 = vmatpush1.msra.mxu0 0.0
  %2506 = vmatprep.subr.mxu0 0.0
  %2507 = vmatpush1.msra.mxu0 0.0
  %2508 = vmatprep.subr.mxu0 0.0
  %2509 = vmatpush1.msra.mxu0 0.0
  %2510 = vmatprep.subr.mxu0 0.0
  %2511 = vmatpush1.msra.mxu0 0.0
  %2512 = vmatprep.subr.mxu0 0.0
  %2513 = vmatpush1.msra.mxu0 0.0
  %2514 = vmatprep.subr.mxu0 0.0
  %2515 = vmatpush1.msra.mxu0 0.0
  %2516 = vmatprep.subr.mxu0 0.0
  %2517 = vmatpush1.msra.mxu0 0.0
  %2518 = vmatprep.subr.mxu0 0.0
  %2519 = vmatpush1.msra.mxu0 0.0
  %2520 = vmatprep.subr.mxu0 0.0
  %2521 = vmatpush1.msra.mxu0 0.0
  %2522 = vmatprep.subr.mxu0 0.0
  %2523 = vmatpush1.msra.mxu0 0.0
  %2524 = vmatprep.subr.mxu0 0.0
  %2525 = vmatpush1.msra.mxu0 0.0
  %2526 = vmatprep.subr.mxu0 0.0
  %2527 = vmatpush1.msra.mxu0 0.0
  %2528 = vmatprep.subr.mxu0 0.0
  %2529 = vmatpush1.msra.mxu0 0.0
  %2530 = vmatprep.subr.mxu0 0.0
  %2531 = vmatpush1.msra.mxu0 %v2498
  %2532 = vmatprep.subr.mxu0 0.0
  %2533 = vmatpush1.msra.mxu0 %v2497
  %2534 = vmatprep.subr.mxu0 0.0
  %2535 = vmatpush2.msra.mxu0 0.0
  %2536 = vmatprep.subr.mxu0 0.0
  %2537 = vmatpush2.msra.mxu0 0.0
  %2538 = vmatprep.subr.mxu0 0.0
  %2539 = vmatpush2.msra.mxu0 0.0
  %2540 = vmatprep.subr.mxu0 0.0
  %2541 = vmatpush2.msra.mxu0 0.0
  %2542 = vmatprep.subr.mxu0 0.0
  %2543 = vmatpush2.msra.mxu0 0.0
  %2544 = vmatprep.subr.mxu0 0.0
  %2545 = vmatpush2.msra.mxu0 0.0
  %2546 = vmatprep.subr.mxu0 0.0
  %2547 = vmatpush2.msra.mxu0 0.0
  %2548 = vmatprep.subr.mxu0 0.0
  %2549 = vmatpush2.msra.mxu0 0.0
  %2550 = vmatprep.subr.mxu0 0.0
  %2551 = vmatpush2.msra.mxu0 0.0
  %2552 = vmatprep.subr.mxu0 0.0
  %2553 = vmatpush2.msra.mxu0 0.0
  %2554 = vmatprep.subr.mxu0 0.0
  %2555 = vmatpush2.msra.mxu0 0.0
  %2556 = vmatprep.subr.mxu0 0.0
  %2557 = vmatpush2.msra.mxu0 0.0
  %2558 = vmatprep.subr.mxu0 0.0
  %2559 = vmatpush2.msra.mxu0 0.0
  %2560 = vmatprep.subr.mxu0 0.0
  %2561 = vmatpush2.msra.mxu0 0.0
  %2562 = vmatprep.subr.mxu0 0.0
  %2563 = vmatpush2.msra.mxu0 0.0
  %2564 = vmatprep.subr.mxu0 0.0
  %2565 = vmatpush2.msra.mxu0 0.0
  %2566 = vmatprep.mubr.f32.mxu0 0.0
  %2567 = vmatmul.mubr.f32.gmra.mxu0 %v2500
  %v2568 = vpop.f32.mrf.mxu0
  %v2569 = vadd.f32 0.0, %v2568
  %v2570 = vpop.f32.mrf.mxu0
  %2571 = vdwg.mxu0
  %v2572 = vadd.f32 %v2420, %v2569
  %s2573 = scalar_lea.vmem %s6, 32
  %v2574 = vld [vmem:[%s2573] sm:$0xff]
  %v2576 = vsel %vm1969, %v2574, 0
  %2578 = vmatprep.subr.mxu0 0.0
  %2579 = vmatpush1.msra.mxu0 0.0
  %2580 = vmatprep.subr.mxu0 0.0
  %2581 = vmatpush1.msra.mxu0 0.0
  %2582 = vmatprep.subr.mxu0 0.0
  %2583 = vmatpush1.msra.mxu0 0.0
  %2584 = vmatprep.subr.mxu0 0.0
  %2585 = vmatpush1.msra.mxu0 0.0
  %2586 = vmatprep.subr.mxu0 0.0
  %2587 = vmatpush1.msra.mxu0 0.0
  %2588 = vmatprep.subr.mxu0 0.0
  %2589 = vmatpush1.msra.mxu0 0.0
  %2590 = vmatprep.subr.mxu0 0.0
  %2591 = vmatpush1.msra.mxu0 0.0
  %2592 = vmatprep.subr.mxu0 0.0
  %2593 = vmatpush1.msra.mxu0 0.0
  %2594 = vmatprep.subr.mxu0 0.0
  %2595 = vmatpush1.msra.mxu0 0.0
  %2596 = vmatprep.subr.mxu0 0.0
  %2597 = vmatpush1.msra.mxu0 0.0
  %2598 = vmatprep.subr.mxu0 0.0
  %2599 = vmatpush1.msra.mxu0 0.0
  %2600 = vmatprep.subr.mxu0 0.0
  %2601 = vmatpush1.msra.mxu0 0.0
  %2602 = vmatprep.subr.mxu0 0.0
  %2603 = vmatpush1.msra.mxu0 0.0
  %2604 = vmatprep.subr.mxu0 0.0
  %2605 = vmatpush1.msra.mxu0 %v1967
  %2606 = vmatprep.subr.mxu0 0.0
  %2607 = vmatpush1.msra.mxu0 %v1966
  %2608 = vmatprep.subr.mxu0 0.0
  %2609 = vmatpush1.msra.mxu0 %v1965
  %2610 = vmatprep.subr.mxu0 0.0
  %2611 = vmatpush2.msra.mxu0 0.0
  %2612 = vmatprep.subr.mxu0 0.0
  %2613 = vmatpush2.msra.mxu0 0.0
  %2614 = vmatprep.subr.mxu0 0.0
  %2615 = vmatpush2.msra.mxu0 0.0
  %2616 = vmatprep.subr.mxu0 0.0
  %2617 = vmatpush2.msra.mxu0 0.0
  %2618 = vmatprep.subr.mxu0 0.0
  %2619 = vmatpush2.msra.mxu0 0.0
  %2620 = vmatprep.subr.mxu0 0.0
  %2621 = vmatpush2.msra.mxu0 0.0
  %2622 = vmatprep.subr.mxu0 0.0
  %2623 = vmatpush2.msra.mxu0 0.0
  %2624 = vmatprep.subr.mxu0 0.0
  %2625 = vmatpush2.msra.mxu0 0.0
  %2626 = vmatprep.subr.mxu0 0.0
  %2627 = vmatpush2.msra.mxu0 0.0
  %2628 = vmatprep.subr.mxu0 0.0
  %2629 = vmatpush2.msra.mxu0 0.0
  %2630 = vmatprep.subr.mxu0 0.0
  %2631 = vmatpush2.msra.mxu0 0.0
  %2632 = vmatprep.subr.mxu0 0.0
  %2633 = vmatpush2.msra.mxu0 0.0
  %2634 = vmatprep.subr.mxu0 0.0
  %2635 = vmatpush2.msra.mxu0 0.0
  %2636 = vmatprep.subr.mxu0 0.0
  %2637 = vmatpush2.msra.mxu0 0.0
  %2638 = vmatprep.subr.mxu0 0.0
  %2639 = vmatpush2.msra.mxu0 0.0
  %2640 = vmatprep.subr.mxu0 0.0
  %2641 = vmatpush2.msra.mxu0 0.0
  %2642 = vmatprep.mubr.f32.mxu0 0.0
  %2643 = vmatmul.mubr.f32.gmra.mxu0 %v2576
  %v2644 = vpop.f32.mrf.mxu0
  %v2645 = vadd.f32 0.0, %v2644
  %v2646 = vpop.f32.mrf.mxu0
  %2647 = vdwg.mxu0
  %s2648 = scalar_lea.vmem %s7, 64
  %v2649 = vld [vmem:[%s2648] sm:$0xff]
  %v2650 = vld [vmem:[%s2648 + $0x8] sm:$0xff]
  %v2652 = vsel %vm95, %v2645, 0
  %2654 = vmatprep.subr.mxu0 0.0
  %2655 = vmatpush1.msra.mxu0 0.0
  %2656 = vmatprep.subr.mxu0 0.0
  %2657 = vmatpush1.msra.mxu0 0.0
  %2658 = vmatprep.subr.mxu0 0.0
  %2659 = vmatpush1.msra.mxu0 0.0
  %2660 = vmatprep.subr.mxu0 0.0
  %2661 = vmatpush1.msra.mxu0 0.0
  %2662 = vmatprep.subr.mxu0 0.0
  %2663 = vmatpush1.msra.mxu0 0.0
  %2664 = vmatprep.subr.mxu0 0.0
  %2665 = vmatpush1.msra.mxu0 0.0
  %2666 = vmatprep.subr.mxu0 0.0
  %2667 = vmatpush1.msra.mxu0 0.0
  %2668 = vmatprep.subr.mxu0 0.0
  %2669 = vmatpush1.msra.mxu0 0.0
  %2670 = vmatprep.subr.mxu0 0.0
  %2671 = vmatpush1.msra.mxu0 0.0
  %2672 = vmatprep.subr.mxu0 0.0
  %2673 = vmatpush1.msra.mxu0 0.0
  %2674 = vmatprep.subr.mxu0 0.0
  %2675 = vmatpush1.msra.mxu0 0.0
  %2676 = vmatprep.subr.mxu0 0.0
  %2677 = vmatpush1.msra.mxu0 0.0
  %2678 = vmatprep.subr.mxu0 0.0
  %2679 = vmatpush1.msra.mxu0 0.0
  %2680 = vmatprep.subr.mxu0 0.0
  %2681 = vmatpush1.msra.mxu0 0.0
  %2682 = vmatprep.subr.mxu0 0.0
  %2683 = vmatpush1.msra.mxu0 %v2650
  %2684 = vmatprep.subr.mxu0 0.0
  %2685 = vmatpush1.msra.mxu0 %v2649
  %2686 = vmatprep.subr.mxu0 0.0
  %2687 = vmatpush2.msra.mxu0 0.0
  %2688 = vmatprep.subr.mxu0 0.0
  %2689 = vmatpush2.msra.mxu0 0.0
  %2690 = vmatprep.subr.mxu0 0.0
  %2691 = vmatpush2.msra.mxu0 0.0
  %2692 = vmatprep.subr.mxu0 0.0
  %2693 = vmatpush2.msra.mxu0 0.0
  %2694 = vmatprep.subr.mxu0 0.0
  %2695 = vmatpush2.msra.mxu0 0.0
  %2696 = vmatprep.subr.mxu0 0.0
  %2697 = vmatpush2.msra.mxu0 0.0
  %2698 = vmatprep.subr.mxu0 0.0
  %2699 = vmatpush2.msra.mxu0 0.0
  %2700 = vmatprep.subr.mxu0 0.0
  %2701 = vmatpush2.msra.mxu0 0.0
  %2702 = vmatprep.subr.mxu0 0.0
  %2703 = vmatpush2.msra.mxu0 0.0
  %2704 = vmatprep.subr.mxu0 0.0
  %2705 = vmatpush2.msra.mxu0 0.0
  %2706 = vmatprep.subr.mxu0 0.0
  %2707 = vmatpush2.msra.mxu0 0.0
  %2708 = vmatprep.subr.mxu0 0.0
  %2709 = vmatpush2.msra.mxu0 0.0
  %2710 = vmatprep.subr.mxu0 0.0
  %2711 = vmatpush2.msra.mxu0 0.0
  %2712 = vmatprep.subr.mxu0 0.0
  %2713 = vmatpush2.msra.mxu0 0.0
  %2714 = vmatprep.subr.mxu0 0.0
  %2715 = vmatpush2.msra.mxu0 0.0
  %2716 = vmatprep.subr.mxu0 0.0
  %2717 = vmatpush2.msra.mxu0 0.0
  %2718 = vmatprep.mubr.f32.mxu0 0.0
  %2719 = vmatmul.mubr.f32.gmra.mxu0 %v2652
  %v2720 = vpop.f32.mrf.mxu0
  %v2721 = vadd.f32 0.0, %v2720
  %v2722 = vpop.f32.mrf.mxu0
  %2723 = vdwg.mxu0
  %v2724 = vadd.f32 %v2572, %v2721
  %s2725 = scalar_lea.vmem %s6, 40
  %v2726 = vld [vmem:[%s2725] sm:$0xff]
  %v2728 = vsel %vm1969, %v2726, 0
  %2730 = vmatprep.subr.mxu0 0.0
  %2731 = vmatpush1.msra.mxu0 0.0
  %2732 = vmatprep.subr.mxu0 0.0
  %2733 = vmatpush1.msra.mxu0 0.0
  %2734 = vmatprep.subr.mxu0 0.0
  %2735 = vmatpush1.msra.mxu0 0.0
  %2736 = vmatprep.subr.mxu0 0.0
  %2737 = vmatpush1.msra.mxu0 0.0
  %2738 = vmatprep.subr.mxu0 0.0
  %2739 = vmatpush1.msra.mxu0 0.0
  %2740 = vmatprep.subr.mxu0 0.0
  %2741 = vmatpush1.msra.mxu0 0.0
  %2742 = vmatprep.subr.mxu0 0.0
  %2743 = vmatpush1.msra.mxu0 0.0
  %2744 = vmatprep.subr.mxu0 0.0
  %2745 = vmatpush1.msra.mxu0 0.0
  %2746 = vmatprep.subr.mxu0 0.0
  %2747 = vmatpush1.msra.mxu0 0.0
  %2748 = vmatprep.subr.mxu0 0.0
  %2749 = vmatpush1.msra.mxu0 0.0
  %2750 = vmatprep.subr.mxu0 0.0
  %2751 = vmatpush1.msra.mxu0 0.0
  %2752 = vmatprep.subr.mxu0 0.0
  %2753 = vmatpush1.msra.mxu0 0.0
  %2754 = vmatprep.subr.mxu0 0.0
  %2755 = vmatpush1.msra.mxu0 0.0
  %2756 = vmatprep.subr.mxu0 0.0
  %2757 = vmatpush1.msra.mxu0 %v1967
  %2758 = vmatprep.subr.mxu0 0.0
  %2759 = vmatpush1.msra.mxu0 %v1966
  %2760 = vmatprep.subr.mxu0 0.0
  %2761 = vmatpush1.msra.mxu0 %v1965
  %2762 = vmatprep.subr.mxu0 0.0
  %2763 = vmatpush2.msra.mxu0 0.0
  %2764 = vmatprep.subr.mxu0 0.0
  %2765 = vmatpush2.msra.mxu0 0.0
  %2766 = vmatprep.subr.mxu0 0.0
  %2767 = vmatpush2.msra.mxu0 0.0
  %2768 = vmatprep.subr.mxu0 0.0
  %2769 = vmatpush2.msra.mxu0 0.0
  %2770 = vmatprep.subr.mxu0 0.0
  %2771 = vmatpush2.msra.mxu0 0.0
  %2772 = vmatprep.subr.mxu0 0.0
  %2773 = vmatpush2.msra.mxu0 0.0
  %2774 = vmatprep.subr.mxu0 0.0
  %2775 = vmatpush2.msra.mxu0 0.0
  %2776 = vmatprep.subr.mxu0 0.0
  %2777 = vmatpush2.msra.mxu0 0.0
  %2778 = vmatprep.subr.mxu0 0.0
  %2779 = vmatpush2.msra.mxu0 0.0
  %2780 = vmatprep.subr.mxu0 0.0
  %2781 = vmatpush2.msra.mxu0 0.0
  %2782 = vmatprep.subr.mxu0 0.0
  %2783 = vmatpush2.msra.mxu0 0.0
  %2784 = vmatprep.subr.mxu0 0.0
  %2785 = vmatpush2.msra.mxu0 0.0
  %2786 = vmatprep.subr.mxu0 0.0
  %2787 = vmatpush2.msra.mxu0 0.0
  %2788 = vmatprep.subr.mxu0 0.0
  %2789 = vmatpush2.msra.mxu0 0.0
  %2790 = vmatprep.subr.mxu0 0.0
  %2791 = vmatpush2.msra.mxu0 0.0
  %2792 = vmatprep.subr.mxu0 0.0
  %2793 = vmatpush2.msra.mxu0 0.0
  %2794 = vmatprep.mubr.f32.mxu0 0.0
  %2795 = vmatmul.mubr.f32.gmra.mxu0 %v2728
  %v2796 = vpop.f32.mrf.mxu0
  %v2797 = vadd.f32 0.0, %v2796
  %v2798 = vpop.f32.mrf.mxu0
  %2799 = vdwg.mxu0
  %s2800 = scalar_lea.vmem %s7, 80
  %v2801 = vld [vmem:[%s2800] sm:$0xff]
  %v2802 = vld [vmem:[%s2800 + $0x8] sm:$0xff]
  %v2804 = vsel %vm95, %v2797, 0
  %2806 = vmatprep.subr.mxu0 0.0
  %2807 = vmatpush1.msra.mxu0 0.0
  %2808 = vmatprep.subr.mxu0 0.0
  %2809 = vmatpush1.msra.mxu0 0.0
  %2810 = vmatprep.subr.mxu0 0.0
  %2811 = vmatpush1.msra.mxu0 0.0
  %2812 = vmatprep.subr.mxu0 0.0
  %2813 = vmatpush1.msra.mxu0 0.0
  %2814 = vmatprep.subr.mxu0 0.0
  %2815 = vmatpush1.msra.mxu0 0.0
  %2816 = vmatprep.subr.mxu0 0.0
  %2817 = vmatpush1.msra.mxu0 0.0
  %2818 = vmatprep.subr.mxu0 0.0
  %2819 = vmatpush1.msra.mxu0 0.0
  %2820 = vmatprep.subr.mxu0 0.0
  %2821 = vmatpush1.msra.mxu0 0.0
  %2822 = vmatprep.subr.mxu0 0.0
  %2823 = vmatpush1.msra.mxu0 0.0
  %2824 = vmatprep.subr.mxu0 0.0
  %2825 = vmatpush1.msra.mxu0 0.0
  %2826 = vmatprep.subr.mxu0 0.0
  %2827 = vmatpush1.msra.mxu0 0.0
  %2828 = vmatprep.subr.mxu0 0.0
  %2829 = vmatpush1.msra.mxu0 0.0
  %2830 = vmatprep.subr.mxu0 0.0
  %2831 = vmatpush1.msra.mxu0 0.0
  %2832 = vmatprep.subr.mxu0 0.0
  %2833 = vmatpush1.msra.mxu0 0.0
  %2834 = vmatprep.subr.mxu0 0.0
  %2835 = vmatpush1.msra.mxu0 %v2802
  %2836 = vmatprep.subr.mxu0 0.0
  %2837 = vmatpush1.msra.mxu0 %v2801
  %2838 = vmatprep.subr.mxu0 0.0
  %2839 = vmatpush2.msra.mxu0 0.0
  %2840 = vmatprep.subr.mxu0 0.0
  %2841 = vmatpush2.msra.mxu0 0.0
  %2842 = vmatprep.subr.mxu0 0.0
  %2843 = vmatpush2.msra.mxu0 0.0
  %2844 = vmatprep.subr.mxu0 0.0
  %2845 = vmatpush2.msra.mxu0 0.0
  %2846 = vmatprep.subr.mxu0 0.0
  %2847 = vmatpush2.msra.mxu0 0.0
  %2848 = vmatprep.subr.mxu0 0.0
  %2849 = vmatpush2.msra.mxu0 0.0
  %2850 = vmatprep.subr.mxu0 0.0
  %2851 = vmatpush2.msra.mxu0 0.0
  %2852 = vmatprep.subr.mxu0 0.0
  %2853 = vmatpush2.msra.mxu0 0.0
  %2854 = vmatprep.subr.mxu0 0.0
  %2855 = vmatpush2.msra.mxu0 0.0
  %2856 = vmatprep.subr.mxu0 0.0
  %2857 = vmatpush2.msra.mxu0 0.0
  %2858 = vmatprep.subr.mxu0 0.0
  %2859 = vmatpush2.msra.mxu0 0.0
  %2860 = vmatprep.subr.mxu0 0.0
  %2861 = vmatpush2.msra.mxu0 0.0
  %2862 = vmatprep.subr.mxu0 0.0
  %2863 = vmatpush2.msra.mxu0 0.0
  %2864 = vmatprep.subr.mxu0 0.0
  %2865 = vmatpush2.msra.mxu0 0.0
  %2866 = vmatprep.subr.mxu0 0.0
  %2867 = vmatpush2.msra.mxu0 0.0
  %2868 = vmatprep.subr.mxu0 0.0
  %2869 = vmatpush2.msra.mxu0 0.0
  %2870 = vmatprep.mubr.f32.mxu0 0.0
  %2871 = vmatmul.mubr.f32.gmra.mxu0 %v2804
  %v2872 = vpop.f32.mrf.mxu0
  %v2873 = vadd.f32 0.0, %v2872
  %v2874 = vpop.f32.mrf.mxu0
  %2875 = vdwg.mxu0
  %v2876 = vadd.f32 %v2724, %v2873
  %s2877 = scalar_lea.vmem %s6, 48
  %v2878 = vld [vmem:[%s2877] sm:$0xff]
  %v2880 = vsel %vm1969, %v2878, 0
  %2882 = vmatprep.subr.mxu0 0.0
  %2883 = vmatpush1.msra.mxu0 0.0
  %2884 = vmatprep.subr.mxu0 0.0
  %2885 = vmatpush1.msra.mxu0 0.0
  %2886 = vmatprep.subr.mxu0 0.0
  %2887 = vmatpush1.msra.mxu0 0.0
  %2888 = vmatprep.subr.mxu0 0.0
  %2889 = vmatpush1.msra.mxu0 0.0
  %2890 = vmatprep.subr.mxu0 0.0
  %2891 = vmatpush1.msra.mxu0 0.0
  %2892 = vmatprep.subr.mxu0 0.0
  %2893 = vmatpush1.msra.mxu0 0.0
  %2894 = vmatprep.subr.mxu0 0.0
  %2895 = vmatpush1.msra.mxu0 0.0
  %2896 = vmatprep.subr.mxu0 0.0
  %2897 = vmatpush1.msra.mxu0 0.0
  %2898 = vmatprep.subr.mxu0 0.0
  %2899 = vmatpush1.msra.mxu0 0.0
  %2900 = vmatprep.subr.mxu0 0.0
  %2901 = vmatpush1.msra.mxu0 0.0
  %2902 = vmatprep.subr.mxu0 0.0
  %2903 = vmatpush1.msra.mxu0 0.0
  %2904 = vmatprep.subr.mxu0 0.0
  %2905 = vmatpush1.msra.mxu0 0.0
  %2906 = vmatprep.subr.mxu0 0.0
  %2907 = vmatpush1.msra.mxu0 0.0
  %2908 = vmatprep.subr.mxu0 0.0
  %2909 = vmatpush1.msra.mxu0 %v1967
  %2910 = vmatprep.subr.mxu0 0.0
  %2911 = vmatpush1.msra.mxu0 %v1966
  %2912 = vmatprep.subr.mxu0 0.0
  %2913 = vmatpush1.msra.mxu0 %v1965
  %2914 = vmatprep.subr.mxu0 0.0
  %2915 = vmatpush2.msra.mxu0 0.0
  %2916 = vmatprep.subr.mxu0 0.0
  %2917 = vmatpush2.msra.mxu0 0.0
  %2918 = vmatprep.subr.mxu0 0.0
  %2919 = vmatpush2.msra.mxu0 0.0
  %2920 = vmatprep.subr.mxu0 0.0
  %2921 = vmatpush2.msra.mxu0 0.0
  %2922 = vmatprep.subr.mxu0 0.0
  %2923 = vmatpush2.msra.mxu0 0.0
  %2924 = vmatprep.subr.mxu0 0.0
  %2925 = vmatpush2.msra.mxu0 0.0
  %2926 = vmatprep.subr.mxu0 0.0
  %2927 = vmatpush2.msra.mxu0 0.0
  %2928 = vmatprep.subr.mxu0 0.0
  %2929 = vmatpush2.msra.mxu0 0.0
  %2930 = vmatprep.subr.mxu0 0.0
  %2931 = vmatpush2.msra.mxu0 0.0
  %2932 = vmatprep.subr.mxu0 0.0
  %2933 = vmatpush2.msra.mxu0 0.0
  %2934 = vmatprep.subr.mxu0 0.0
  %2935 = vmatpush2.msra.mxu0 0.0
  %2936 = vmatprep.subr.mxu0 0.0
  %2937 = vmatpush2.msra.mxu0 0.0
  %2938 = vmatprep.subr.mxu0 0.0
  %2939 = vmatpush2.msra.mxu0 0.0
  %2940 = vmatprep.subr.mxu0 0.0
  %2941 = vmatpush2.msra.mxu0 0.0
  %2942 = vmatprep.subr.mxu0 0.0
  %2943 = vmatpush2.msra.mxu0 0.0
  %2944 = vmatprep.subr.mxu0 0.0
  %2945 = vmatpush2.msra.mxu0 0.0
  %2946 = vmatprep.mubr.f32.mxu0 0.0
  %2947 = vmatmul.mubr.f32.gmra.mxu0 %v2880
  %v2948 = vpop.f32.mrf.mxu0
  %v2949 = vadd.f32 0.0, %v2948
  %v2950 = vpop.f32.mrf.mxu0
  %2951 = vdwg.mxu0
  %s2952 = scalar_lea.vmem %s7, 96
  %v2953 = vld [vmem:[%s2952] sm:$0xff]
  %v2954 = vld [vmem:[%s2952 + $0x8] sm:$0xff]
  %v2956 = vsel %vm95, %v2949, 0
  %2958 = vmatprep.subr.mxu0 0.0
  %2959 = vmatpush1.msra.mxu0 0.0
  %2960 = vmatprep.subr.mxu0 0.0
  %2961 = vmatpush1.msra.mxu0 0.0
  %2962 = vmatprep.subr.mxu0 0.0
  %2963 = vmatpush1.msra.mxu0 0.0
  %2964 = vmatprep.subr.mxu0 0.0
  %2965 = vmatpush1.msra.mxu0 0.0
  %2966 = vmatprep.subr.mxu0 0.0
  %2967 = vmatpush1.msra.mxu0 0.0
  %2968 = vmatprep.subr.mxu0 0.0
  %2969 = vmatpush1.msra.mxu0 0.0
  %2970 = vmatprep.subr.mxu0 0.0
  %2971 = vmatpush1.msra.mxu0 0.0
  %2972 = vmatprep.subr.mxu0 0.0
  %2973 = vmatpush1.msra.mxu0 0.0
  %2974 = vmatprep.subr.mxu0 0.0
  %2975 = vmatpush1.msra.mxu0 0.0
  %2976 = vmatprep.subr.mxu0 0.0
  %2977 = vmatpush1.msra.mxu0 0.0
  %2978 = vmatprep.subr.mxu0 0.0
  %2979 = vmatpush1.msra.mxu0 0.0
  %2980 = vmatprep.subr.mxu0 0.0
  %2981 = vmatpush1.msra.mxu0 0.0
  %2982 = vmatprep.subr.mxu0 0.0
  %2983 = vmatpush1.msra.mxu0 0.0
  %2984 = vmatprep.subr.mxu0 0.0
  %2985 = vmatpush1.msra.mxu0 0.0
  %2986 = vmatprep.subr.mxu0 0.0
  %2987 = vmatpush1.msra.mxu0 %v2954
  %2988 = vmatprep.subr.mxu0 0.0
  %2989 = vmatpush1.msra.mxu0 %v2953
  %2990 = vmatprep.subr.mxu0 0.0
  %2991 = vmatpush2.msra.mxu0 0.0
  %2992 = vmatprep.subr.mxu0 0.0
  %2993 = vmatpush2.msra.mxu0 0.0
  %2994 = vmatprep.subr.mxu0 0.0
  %2995 = vmatpush2.msra.mxu0 0.0
  %2996 = vmatprep.subr.mxu0 0.0
  %2997 = vmatpush2.msra.mxu0 0.0
  %2998 = vmatprep.subr.mxu0 0.0
  %2999 = vmatpush2.msra.mxu0 0.0
  %3000 = vmatprep.subr.mxu0 0.0
  %3001 = vmatpush2.msra.mxu0 0.0
  %3002 = vmatprep.subr.mxu0 0.0
  %3003 = vmatpush2.msra.mxu0 0.0
  %3004 = vmatprep.subr.mxu0 0.0
  %3005 = vmatpush2.msra.mxu0 0.0
  %3006 = vmatprep.subr.mxu0 0.0
  %3007 = vmatpush2.msra.mxu0 0.0
  %3008 = vmatprep.subr.mxu0 0.0
  %3009 = vmatpush2.msra.mxu0 0.0
  %3010 = vmatprep.subr.mxu0 0.0
  %3011 = vmatpush2.msra.mxu0 0.0
  %3012 = vmatprep.subr.mxu0 0.0
  %3013 = vmatpush2.msra.mxu0 0.0
  %3014 = vmatprep.subr.mxu0 0.0
  %3015 = vmatpush2.msra.mxu0 0.0
  %3016 = vmatprep.subr.mxu0 0.0
  %3017 = vmatpush2.msra.mxu0 0.0
  %3018 = vmatprep.subr.mxu0 0.0
  %3019 = vmatpush2.msra.mxu0 0.0
  %3020 = vmatprep.subr.mxu0 0.0
  %3021 = vmatpush2.msra.mxu0 0.0
  %3022 = vmatprep.mubr.f32.mxu0 0.0
  %3023 = vmatmul.mubr.f32.gmra.mxu0 %v2956
  %v3024 = vpop.f32.mrf.mxu0
  %v3025 = vadd.f32 0.0, %v3024
  %v3026 = vpop.f32.mrf.mxu0
  %3027 = vdwg.mxu0
  %v3028 = vadd.f32 %v2876, %v3025
  %s3029 = scalar_lea.vmem %s6, 56
  %v3030 = vld [vmem:[%s3029] sm:$0xff]
  %v3032 = vsel %vm1969, %v3030, 0
  %3034 = vmatprep.subr.mxu0 0.0
  %3035 = vmatpush1.msra.mxu0 0.0
  %3036 = vmatprep.subr.mxu0 0.0
  %3037 = vmatpush1.msra.mxu0 0.0
  %3038 = vmatprep.subr.mxu0 0.0
  %3039 = vmatpush1.msra.mxu0 0.0
  %3040 = vmatprep.subr.mxu0 0.0
  %3041 = vmatpush1.msra.mxu0 0.0
  %3042 = vmatprep.subr.mxu0 0.0
  %3043 = vmatpush1.msra.mxu0 0.0
  %3044 = vmatprep.subr.mxu0 0.0
  %3045 = vmatpush1.msra.mxu0 0.0
  %3046 = vmatprep.subr.mxu0 0.0
  %3047 = vmatpush1.msra.mxu0 0.0
  %3048 = vmatprep.subr.mxu0 0.0
  %3049 = vmatpush1.msra.mxu0 0.0
  %3050 = vmatprep.subr.mxu0 0.0
  %3051 = vmatpush1.msra.mxu0 0.0
  %3052 = vmatprep.subr.mxu0 0.0
  %3053 = vmatpush1.msra.mxu0 0.0
  %3054 = vmatprep.subr.mxu0 0.0
  %3055 = vmatpush1.msra.mxu0 0.0
  %3056 = vmatprep.subr.mxu0 0.0
  %3057 = vmatpush1.msra.mxu0 0.0
  %3058 = vmatprep.subr.mxu0 0.0
  %3059 = vmatpush1.msra.mxu0 0.0
  %3060 = vmatprep.subr.mxu0 0.0
  %3061 = vmatpush1.msra.mxu0 %v1967
  %3062 = vmatprep.subr.mxu0 0.0
  %3063 = vmatpush1.msra.mxu0 %v1966
  %3064 = vmatprep.subr.mxu0 0.0
  %3065 = vmatpush1.msra.mxu0 %v1965
  %3066 = vmatprep.subr.mxu0 0.0
  %3067 = vmatpush2.msra.mxu0 0.0
  %3068 = vmatprep.subr.mxu0 0.0
  %3069 = vmatpush2.msra.mxu0 0.0
  %3070 = vmatprep.subr.mxu0 0.0
  %3071 = vmatpush2.msra.mxu0 0.0
  %3072 = vmatprep.subr.mxu0 0.0
  %3073 = vmatpush2.msra.mxu0 0.0
  %3074 = vmatprep.subr.mxu0 0.0
  %3075 = vmatpush2.msra.mxu0 0.0
  %3076 = vmatprep.subr.mxu0 0.0
  %3077 = vmatpush2.msra.mxu0 0.0
  %3078 = vmatprep.subr.mxu0 0.0
  %3079 = vmatpush2.msra.mxu0 0.0
  %3080 = vmatprep.subr.mxu0 0.0
  %3081 = vmatpush2.msra.mxu0 0.0
  %3082 = vmatprep.subr.mxu0 0.0
  %3083 = vmatpush2.msra.mxu0 0.0
  %3084 = vmatprep.subr.mxu0 0.0
  %3085 = vmatpush2.msra.mxu0 0.0
  %3086 = vmatprep.subr.mxu0 0.0
  %3087 = vmatpush2.msra.mxu0 0.0
  %3088 = vmatprep.subr.mxu0 0.0
  %3089 = vmatpush2.msra.mxu0 0.0
  %3090 = vmatprep.subr.mxu0 0.0
  %3091 = vmatpush2.msra.mxu0 0.0
  %3092 = vmatprep.subr.mxu0 0.0
  %3093 = vmatpush2.msra.mxu0 0.0
  %3094 = vmatprep.subr.mxu0 0.0
  %3095 = vmatpush2.msra.mxu0 0.0
  %3096 = vmatprep.subr.mxu0 0.0
  %3097 = vmatpush2.msra.mxu0 0.0
  %3098 = vmatprep.mubr.f32.mxu0 0.0
  %3099 = vmatmul.mubr.f32.gmra.mxu0 %v3032
  %v3100 = vpop.f32.mrf.mxu0
  %v3101 = vadd.f32 0.0, %v3100
  %v3102 = vpop.f32.mrf.mxu0
  %3103 = vdwg.mxu0
  %s3104 = scalar_lea.vmem %s7, 112
  %v3105 = vld [vmem:[%s3104] sm:$0xff]
  %v3106 = vld [vmem:[%s3104 + $0x8] sm:$0xff]
  %v3108 = vsel %vm95, %v3101, 0
  %3110 = vmatprep.subr.mxu0 0.0
  %3111 = vmatpush1.msra.mxu0 0.0
  %3112 = vmatprep.subr.mxu0 0.0
  %3113 = vmatpush1.msra.mxu0 0.0
  %3114 = vmatprep.subr.mxu0 0.0
  %3115 = vmatpush1.msra.mxu0 0.0
  %3116 = vmatprep.subr.mxu0 0.0
  %3117 = vmatpush1.msra.mxu0 0.0
  %3118 = vmatprep.subr.mxu0 0.0
  %3119 = vmatpush1.msra.mxu0 0.0
  %3120 = vmatprep.subr.mxu0 0.0
  %3121 = vmatpush1.msra.mxu0 0.0
  %3122 = vmatprep.subr.mxu0 0.0
  %3123 = vmatpush1.msra.mxu0 0.0
  %3124 = vmatprep.subr.mxu0 0.0
  %3125 = vmatpush1.msra.mxu0 0.0
  %3126 = vmatprep.subr.mxu0 0.0
  %3127 = vmatpush1.msra.mxu0 0.0
  %3128 = vmatprep.subr.mxu0 0.0
  %3129 = vmatpush1.msra.mxu0 0.0
  %3130 = vmatprep.subr.mxu0 0.0
  %3131 = vmatpush1.msra.mxu0 0.0
  %3132 = vmatprep.subr.mxu0 0.0
  %3133 = vmatpush1.msra.mxu0 0.0
  %3134 = vmatprep.subr.mxu0 0.0
  %3135 = vmatpush1.msra.mxu0 0.0
  %3136 = vmatprep.subr.mxu0 0.0
  %3137 = vmatpush1.msra.mxu0 0.0
  %3138 = vmatprep.subr.mxu0 0.0
  %3139 = vmatpush1.msra.mxu0 %v3106
  %3140 = vmatprep.subr.mxu0 0.0
  %3141 = vmatpush1.msra.mxu0 %v3105
  %3142 = vmatprep.subr.mxu0 0.0
  %3143 = vmatpush2.msra.mxu0 0.0
  %3144 = vmatprep.subr.mxu0 0.0
  %3145 = vmatpush2.msra.mxu0 0.0
  %3146 = vmatprep.subr.mxu0 0.0
  %3147 = vmatpush2.msra.mxu0 0.0
  %3148 = vmatprep.subr.mxu0 0.0
  %3149 = vmatpush2.msra.mxu0 0.0
  %3150 = vmatprep.subr.mxu0 0.0
  %3151 = vmatpush2.msra.mxu0 0.0
  %3152 = vmatprep.subr.mxu0 0.0
  %3153 = vmatpush2.msra.mxu0 0.0
  %3154 = vmatprep.subr.mxu0 0.0
  %3155 = vmatpush2.msra.mxu0 0.0
  %3156 = vmatprep.subr.mxu0 0.0
  %3157 = vmatpush2.msra.mxu0 0.0
  %3158 = vmatprep.subr.mxu0 0.0
  %3159 = vmatpush2.msra.mxu0 0.0
  %3160 = vmatprep.subr.mxu0 0.0
  %3161 = vmatpush2.msra.mxu0 0.0
  %3162 = vmatprep.subr.mxu0 0.0
  %3163 = vmatpush2.msra.mxu0 0.0
  %3164 = vmatprep.subr.mxu0 0.0
  %3165 = vmatpush2.msra.mxu0 0.0
  %3166 = vmatprep.subr.mxu0 0.0
  %3167 = vmatpush2.msra.mxu0 0.0
  %3168 = vmatprep.subr.mxu0 0.0
  %3169 = vmatpush2.msra.mxu0 0.0
  %3170 = vmatprep.subr.mxu0 0.0
  %3171 = vmatpush2.msra.mxu0 0.0
  %3172 = vmatprep.subr.mxu0 0.0
  %3173 = vmatpush2.msra.mxu0 0.0
  %3174 = vmatprep.mubr.f32.mxu0 0.0
  %3175 = vmatmul.mubr.f32.gmra.mxu0 %v3108
  %v3176 = vpop.f32.mrf.mxu0
  %v3177 = vadd.f32 0.0, %v3176
  %v3178 = vpop.f32.mrf.mxu0
  %3179 = vdwg.mxu0
  %v3180 = vadd.f32 %v3028, %v3177
  %s3181 = scalar_lea.vmem %s6, 64
  %v3182 = vld [vmem:[%s3181] sm:$0xff]
  %v3184 = vsel %vm1969, %v3182, 0
  %3186 = vmatprep.subr.mxu0 0.0
  %3187 = vmatpush1.msra.mxu0 0.0
  %3188 = vmatprep.subr.mxu0 0.0
  %3189 = vmatpush1.msra.mxu0 0.0
  %3190 = vmatprep.subr.mxu0 0.0
  %3191 = vmatpush1.msra.mxu0 0.0
  %3192 = vmatprep.subr.mxu0 0.0
  %3193 = vmatpush1.msra.mxu0 0.0
  %3194 = vmatprep.subr.mxu0 0.0
  %3195 = vmatpush1.msra.mxu0 0.0
  %3196 = vmatprep.subr.mxu0 0.0
  %3197 = vmatpush1.msra.mxu0 0.0
  %3198 = vmatprep.subr.mxu0 0.0
  %3199 = vmatpush1.msra.mxu0 0.0
  %3200 = vmatprep.subr.mxu0 0.0
  %3201 = vmatpush1.msra.mxu0 0.0
  %3202 = vmatprep.subr.mxu0 0.0
  %3203 = vmatpush1.msra.mxu0 0.0
  %3204 = vmatprep.subr.mxu0 0.0
  %3205 = vmatpush1.msra.mxu0 0.0
  %3206 = vmatprep.subr.mxu0 0.0
  %3207 = vmatpush1.msra.mxu0 0.0
  %3208 = vmatprep.subr.mxu0 0.0
  %3209 = vmatpush1.msra.mxu0 0.0
  %3210 = vmatprep.subr.mxu0 0.0
  %3211 = vmatpush1.msra.mxu0 0.0
  %3212 = vmatprep.subr.mxu0 0.0
  %3213 = vmatpush1.msra.mxu0 %v1967
  %3214 = vmatprep.subr.mxu0 0.0
  %3215 = vmatpush1.msra.mxu0 %v1966
  %3216 = vmatprep.subr.mxu0 0.0
  %3217 = vmatpush1.msra.mxu0 %v1965
  %3218 = vmatprep.subr.mxu0 0.0
  %3219 = vmatpush2.msra.mxu0 0.0
  %3220 = vmatprep.subr.mxu0 0.0
  %3221 = vmatpush2.msra.mxu0 0.0
  %3222 = vmatprep.subr.mxu0 0.0
  %3223 = vmatpush2.msra.mxu0 0.0
  %3224 = vmatprep.subr.mxu0 0.0
  %3225 = vmatpush2.msra.mxu0 0.0
  %3226 = vmatprep.subr.mxu0 0.0
  %3227 = vmatpush2.msra.mxu0 0.0
  %3228 = vmatprep.subr.mxu0 0.0
  %3229 = vmatpush2.msra.mxu0 0.0
  %3230 = vmatprep.subr.mxu0 0.0
  %3231 = vmatpush2.msra.mxu0 0.0
  %3232 = vmatprep.subr.mxu0 0.0
  %3233 = vmatpush2.msra.mxu0 0.0
  %3234 = vmatprep.subr.mxu0 0.0
  %3235 = vmatpush2.msra.mxu0 0.0
  %3236 = vmatprep.subr.mxu0 0.0
  %3237 = vmatpush2.msra.mxu0 0.0
  %3238 = vmatprep.subr.mxu0 0.0
  %3239 = vmatpush2.msra.mxu0 0.0
  %3240 = vmatprep.subr.mxu0 0.0
  %3241 = vmatpush2.msra.mxu0 0.0
  %3242 = vmatprep.subr.mxu0 0.0
  %3243 = vmatpush2.msra.mxu0 0.0
  %3244 = vmatprep.subr.mxu0 0.0
  %3245 = vmatpush2.msra.mxu0 0.0
  %3246 = vmatprep.subr.mxu0 0.0
  %3247 = vmatpush2.msra.mxu0 0.0
  %3248 = vmatprep.subr.mxu0 0.0
  %3249 = vmatpush2.msra.mxu0 0.0
  %3250 = vmatprep.mubr.f32.mxu0 0.0
  %3251 = vmatmul.mubr.f32.gmra.mxu0 %v3184
  %v3252 = vpop.f32.mrf.mxu0
  %v3253 = vadd.f32 0.0, %v3252
  %v3254 = vpop.f32.mrf.mxu0
  %3255 = vdwg.mxu0
  %s3256 = scalar_lea.vmem %s7, 128
  %v3257 = vld [vmem:[%s3256] sm:$0xff]
  %v3258 = vld [vmem:[%s3256 + $0x8] sm:$0xff]
  %v3260 = vsel %vm95, %v3253, 0
  %3262 = vmatprep.subr.mxu0 0.0
  %3263 = vmatpush1.msra.mxu0 0.0
  %3264 = vmatprep.subr.mxu0 0.0
  %3265 = vmatpush1.msra.mxu0 0.0
  %3266 = vmatprep.subr.mxu0 0.0
  %3267 = vmatpush1.msra.mxu0 0.0
  %3268 = vmatprep.subr.mxu0 0.0
  %3269 = vmatpush1.msra.mxu0 0.0
  %3270 = vmatprep.subr.mxu0 0.0
  %3271 = vmatpush1.msra.mxu0 0.0
  %3272 = vmatprep.subr.mxu0 0.0
  %3273 = vmatpush1.msra.mxu0 0.0
  %3274 = vmatprep.subr.mxu0 0.0
  %3275 = vmatpush1.msra.mxu0 0.0
  %3276 = vmatprep.subr.mxu0 0.0
  %3277 = vmatpush1.msra.mxu0 0.0
  %3278 = vmatprep.subr.mxu0 0.0
  %3279 = vmatpush1.msra.mxu0 0.0
  %3280 = vmatprep.subr.mxu0 0.0
  %3281 = vmatpush1.msra.mxu0 0.0
  %3282 = vmatprep.subr.mxu0 0.0
  %3283 = vmatpush1.msra.mxu0 0.0
  %3284 = vmatprep.subr.mxu0 0.0
  %3285 = vmatpush1.msra.mxu0 0.0
  %3286 = vmatprep.subr.mxu0 0.0
  %3287 = vmatpush1.msra.mxu0 0.0
  %3288 = vmatprep.subr.mxu0 0.0
  %3289 = vmatpush1.msra.mxu0 0.0
  %3290 = vmatprep.subr.mxu0 0.0
  %3291 = vmatpush1.msra.mxu0 %v3258
  %3292 = vmatprep.subr.mxu0 0.0
  %3293 = vmatpush1.msra.mxu0 %v3257
  %3294 = vmatprep.subr.mxu0 0.0
  %3295 = vmatpush2.msra.mxu0 0.0
  %3296 = vmatprep.subr.mxu0 0.0
  %3297 = vmatpush2.msra.mxu0 0.0
  %3298 = vmatprep.subr.mxu0 0.0
  %3299 = vmatpush2.msra.mxu0 0.0
  %3300 = vmatprep.subr.mxu0 0.0
  %3301 = vmatpush2.msra.mxu0 0.0
  %3302 = vmatprep.subr.mxu0 0.0
  %3303 = vmatpush2.msra.mxu0 0.0
  %3304 = vmatprep.subr.mxu0 0.0
  %3305 = vmatpush2.msra.mxu0 0.0
  %3306 = vmatprep.subr.mxu0 0.0
  %3307 = vmatpush2.msra.mxu0 0.0
  %3308 = vmatprep.subr.mxu0 0.0
  %3309 = vmatpush2.msra.mxu0 0.0
  %3310 = vmatprep.subr.mxu0 0.0
  %3311 = vmatpush2.msra.mxu0 0.0
  %3312 = vmatprep.subr.mxu0 0.0
  %3313 = vmatpush2.msra.mxu0 0.0
  %3314 = vmatprep.subr.mxu0 0.0
  %3315 = vmatpush2.msra.mxu0 0.0
  %3316 = vmatprep.subr.mxu0 0.0
  %3317 = vmatpush2.msra.mxu0 0.0
  %3318 = vmatprep.subr.mxu0 0.0
  %3319 = vmatpush2.msra.mxu0 0.0
  %3320 = vmatprep.subr.mxu0 0.0
  %3321 = vmatpush2.msra.mxu0 0.0
  %3322 = vmatprep.subr.mxu0 0.0
  %3323 = vmatpush2.msra.mxu0 0.0
  %3324 = vmatprep.subr.mxu0 0.0
  %3325 = vmatpush2.msra.mxu0 0.0
  %3326 = vmatprep.mubr.f32.mxu0 0.0
  %3327 = vmatmul.mubr.f32.gmra.mxu0 %v3260
  %v3328 = vpop.f32.mrf.mxu0
  %v3329 = vadd.f32 0.0, %v3328
  %v3330 = vpop.f32.mrf.mxu0
  %3331 = vdwg.mxu0
  %v3332 = vadd.f32 %v3180, %v3329
  %v3333 = vld [vmem:[%s8] sm:$0x1]
  %v3335 = vlaneseq
  %v3336 = vshrl.u32 %v3335, 7
  %v3337 = vsub.s32 0, %v3336
  %v3338 = vrot.slane %v3333, %v3337
  %v3340 = vadd.f32 %v3332, %v3338
  %v3341 = vmax.f32 %v3340, 0.0
  %v3342 = vld [vmem:[%s9] sm:$0xff]
  %v3343 = vld [vmem:[%s9 + $0x8] sm:$0xff]
  %v3344 = vld [vmem:[%s9 + $0x10] sm:$0xff]
  %v3345 = vld [vmem:[%s9 + $0x18] sm:$0xff]
  %v3346 = vld [vmem:[%s10] sm:$0x1]
  %v3348 = vlaneseq
  %v3349 = vshrl.u32 %v3348, 7
  %v3350 = vsub.s32 0, %v3349
  %v3351 = vrot.slane %v3346, %v3350
  %vm3353 = vcmask 261120
  %v3355 = vsel %vm3353, %v3341, 0
  %3357 = vmatprep.subr.mxu0 0.0
  %3358 = vmatpush1.msra.mxu0 0.0
  %3359 = vmatprep.subr.mxu0 0.0
  %3360 = vmatpush1.msra.mxu0 0.0
  %3361 = vmatprep.subr.mxu0 0.0
  %3362 = vmatpush1.msra.mxu0 0.0
  %3363 = vmatprep.subr.mxu0 0.0
  %3364 = vmatpush1.msra.mxu0 0.0
  %3365 = vmatprep.subr.mxu0 0.0
  %3366 = vmatpush1.msra.mxu0 0.0
  %3367 = vmatprep.subr.mxu0 0.0
  %3368 = vmatpush1.msra.mxu0 0.0
  %3369 = vmatprep.subr.mxu0 0.0
  %3370 = vmatpush1.msra.mxu0 0.0
  %3371 = vmatprep.subr.mxu0 0.0
  %3372 = vmatpush1.msra.mxu0 0.0
  %3373 = vmatprep.subr.mxu0 0.0
  %3374 = vmatpush1.msra.mxu0 0.0
  %3375 = vmatprep.subr.mxu0 0.0
  %3376 = vmatpush1.msra.mxu0 0.0
  %3377 = vmatprep.subr.mxu0 0.0
  %3378 = vmatpush1.msra.mxu0 0.0
  %3379 = vmatprep.subr.mxu0 0.0
  %3380 = vmatpush1.msra.mxu0 0.0
  %3381 = vmatprep.subr.mxu0 0.0
  %3382 = vmatpush1.msra.mxu0 %v3345
  %3383 = vmatprep.subr.mxu0 0.0
  %3384 = vmatpush1.msra.mxu0 %v3344
  %3385 = vmatprep.subr.mxu0 0.0
  %3386 = vmatpush1.msra.mxu0 %v3343
  %3387 = vmatprep.subr.mxu0 0.0
  %3388 = vmatpush1.msra.mxu0 %v3342
  %3389 = vmatprep.subr.mxu0 0.0
  %3390 = vmatpush2.msra.mxu0 0.0
  %3391 = vmatprep.subr.mxu0 0.0
  %3392 = vmatpush2.msra.mxu0 0.0
  %3393 = vmatprep.subr.mxu0 0.0
  %3394 = vmatpush2.msra.mxu0 0.0
  %3395 = vmatprep.subr.mxu0 0.0
  %3396 = vmatpush2.msra.mxu0 0.0
  %3397 = vmatprep.subr.mxu0 0.0
  %3398 = vmatpush2.msra.mxu0 0.0
  %3399 = vmatprep.subr.mxu0 0.0
  %3400 = vmatpush2.msra.mxu0 0.0
  %3401 = vmatprep.subr.mxu0 0.0
  %3402 = vmatpush2.msra.mxu0 0.0
  %3403 = vmatprep.subr.mxu0 0.0
  %3404 = vmatpush2.msra.mxu0 0.0
  %3405 = vmatprep.subr.mxu0 0.0
  %3406 = vmatpush2.msra.mxu0 0.0
  %3407 = vmatprep.subr.mxu0 0.0
  %3408 = vmatpush2.msra.mxu0 0.0
  %3409 = vmatprep.subr.mxu0 0.0
  %3410 = vmatpush2.msra.mxu0 0.0
  %3411 = vmatprep.subr.mxu0 0.0
  %3412 = vmatpush2.msra.mxu0 0.0
  %3413 = vmatprep.subr.mxu0 0.0
  %3414 = vmatpush2.msra.mxu0 0.0
  %3415 = vmatprep.subr.mxu0 0.0
  %3416 = vmatpush2.msra.mxu0 0.0
  %3417 = vmatprep.subr.mxu0 0.0
  %3418 = vmatpush2.msra.mxu0 0.0
  %3419 = vmatprep.subr.mxu0 0.0
  %3420 = vmatpush2.msra.mxu0 0.0
  %3421 = vmatprep.mubr.f32.mxu0 0.0
  %3422 = vmatmul.mubr.f32.gmra.mxu0 %v3355
  %v3423 = vpop.f32.mrf.mxu0
  %v3424 = vadd.f32 %v3351, %v3423
  %v3425 = vpop.f32.mrf.mxu0
  %3426 = vdwg.mxu0
  %v3427 = vmax.f32 %v3424, 0.0
  %v3428 = vld [vmem:[%s11] sm:$0xff]
  %v3429 = vld [vmem:[%s11 + $0x8] sm:$0xff]
  %v3430 = vld [vmem:[%s12] sm:$0x1]
  %v3432 = vlaneseq
  %v3433 = vshrl.u32 %v3432, 7
  %v3434 = vsub.s32 0, %v3433
  %v3435 = vrot.slane %v3430, %v3434
  %v3438 = vsel %vm95, %v3427, 0
  %3440 = vmatprep.subr.mxu0 0.0
  %3441 = vmatpush1.msra.mxu0 0.0
  %3442 = vmatprep.subr.mxu0 0.0
  %3443 = vmatpush1.msra.mxu0 0.0
  %3444 = vmatprep.subr.mxu0 0.0
  %3445 = vmatpush1.msra.mxu0 0.0
  %3446 = vmatprep.subr.mxu0 0.0
  %3447 = vmatpush1.msra.mxu0 0.0
  %3448 = vmatprep.subr.mxu0 0.0
  %3449 = vmatpush1.msra.mxu0 0.0
  %3450 = vmatprep.subr.mxu0 0.0
  %3451 = vmatpush1.msra.mxu0 0.0
  %3452 = vmatprep.subr.mxu0 0.0
  %3453 = vmatpush1.msra.mxu0 0.0
  %3454 = vmatprep.subr.mxu0 0.0
  %3455 = vmatpush1.msra.mxu0 0.0
  %3456 = vmatprep.subr.mxu0 0.0
  %3457 = vmatpush1.msra.mxu0 0.0
  %3458 = vmatprep.subr.mxu0 0.0
  %3459 = vmatpush1.msra.mxu0 0.0
  %3460 = vmatprep.subr.mxu0 0.0
  %3461 = vmatpush1.msra.mxu0 0.0
  %3462 = vmatprep.subr.mxu0 0.0
  %3463 = vmatpush1.msra.mxu0 0.0
  %3464 = vmatprep.subr.mxu0 0.0
  %3465 = vmatpush1.msra.mxu0 0.0
  %3466 = vmatprep.subr.mxu0 0.0
  %3467 = vmatpush1.msra.mxu0 0.0
  %3468 = vmatprep.subr.mxu0 0.0
  %3469 = vmatpush1.msra.mxu0 %v3429
  %3470 = vmatprep.subr.mxu0 0.0
  %3471 = vmatpush1.msra.mxu0 %v3428
  %3472 = vmatprep.subr.mxu0 0.0
  %3473 = vmatpush2.msra.mxu0 0.0
  %3474 = vmatprep.subr.mxu0 0.0
  %3475 = vmatpush2.msra.mxu0 0.0
  %3476 = vmatprep.subr.mxu0 0.0
  %3477 = vmatpush2.msra.mxu0 0.0
  %3478 = vmatprep.subr.mxu0 0.0
  %3479 = vmatpush2.msra.mxu0 0.0
  %3480 = vmatprep.subr.mxu0 0.0
  %3481 = vmatpush2.msra.mxu0 0.0
  %3482 = vmatprep.subr.mxu0 0.0
  %3483 = vmatpush2.msra.mxu0 0.0
  %3484 = vmatprep.subr.mxu0 0.0
  %3485 = vmatpush2.msra.mxu0 0.0
  %3486 = vmatprep.subr.mxu0 0.0
  %3487 = vmatpush2.msra.mxu0 0.0
  %3488 = vmatprep.subr.mxu0 0.0
  %3489 = vmatpush2.msra.mxu0 0.0
  %3490 = vmatprep.subr.mxu0 0.0
  %3491 = vmatpush2.msra.mxu0 0.0
  %3492 = vmatprep.subr.mxu0 0.0
  %3493 = vmatpush2.msra.mxu0 0.0
  %3494 = vmatprep.subr.mxu0 0.0
  %3495 = vmatpush2.msra.mxu0 0.0
  %3496 = vmatprep.subr.mxu0 0.0
  %3497 = vmatpush2.msra.mxu0 0.0
  %3498 = vmatprep.subr.mxu0 0.0
  %3499 = vmatpush2.msra.mxu0 0.0
  %3500 = vmatprep.subr.mxu0 0.0
  %3501 = vmatpush2.msra.mxu0 0.0
  %3502 = vmatprep.subr.mxu0 0.0
  %3503 = vmatpush2.msra.mxu0 0.0
  %3504 = vmatprep.mubr.f32.mxu0 0.0
  %3505 = vmatmul.mubr.f32.gmra.mxu0 %v3438
  %v3506 = vpop.f32.mrf.mxu0
  %v3507 = vadd.f32 %v3435, %v3506
  %v3508 = vpop.f32.mrf.mxu0
  %3509 = vdwg.mxu0
  %3510 = vst [vmem:[%s13] sm:$0xff] %v3507
  // Predicated region
  $region54: #{actor_critic_forward.1} parent=0 // pred_check
    _
  $region55: #{actor_critic_forward.1} parent=0 // pred_check_branch
    %3512 = sbr.rel (0) target = $region57
  $region56: #{actor_critic_forward.1} parent=0 // pred_region
    _
  $region57: #{actor_critic_forward.1} parent=0 // pred_fallthru
    _
  // Predicated region
  $region58: #{actor_critic_forward.1} parent=0 // pred_check
    _
  $region59: #{actor_critic_forward.1} parent=0 // pred_check_branch
    %3514 = sbr.rel (0) target = $region61
  $region60: #{actor_critic_forward.1} parent=0 // pred_region
    _
  $region61: #{actor_critic_forward.1} parent=0 // pred_fallthru
    _

</llo_original>
